<compile_context>
chip_gen: v6e
topology: v6e:2x2x1
jax: 0.10.0
libtpu: 0.0.40
codegen_flags: <defaults>
</compile_context>

<pallas_src>
import math

import jax
import jax.numpy as jnp
from jax.experimental import pallas as pl
from jax.experimental.pallas import tpu as pltpu

_LANES = 128


def _round_up(x, mult):
    return ((x + mult - 1) // mult) * mult


def _store_groups(lp1, n1, n2):
    """Group consecutive l blocks so each output store chunk is (ideally) a
    multiple of 128 lanes wide (unmasked vst)."""
    w = n1 * n2
    groups = []
    cur, cur_w, col = [], 0, 0
    for l in range(lp1):
        cur.append(l)
        cur_w += w
        if cur_w % _LANES == 0:
            groups.append((tuple(cur), col, cur_w))
            col += cur_w
            cur, cur_w = [], 0
    if cur:  # trailing (possibly non-128-aligned) group
        groups.append((tuple(cur), col, cur_w))
    return groups


def _make_power_spectrum_kernel(lp1, n1, n2, shared_input):
    """Kernel specialized for (l_max+1, N1, N2).

    The l / i / m loops are statically unrolled:
      * only valid m components exist in the packed layout (no masking),
      * 1/sqrt(2l+1) is a compile-time constant,
      * the per-(l,i) accumulator is a small (N2, TS) row block.
    """
    groups = _store_groups(lp1, n1, n2)

    def body(c1_ref, c2_ref, out_ref):
        # c1_ref : ((L+1)^2, N1, TS)   packed (l, m) rows, samples on lanes
        # c2_ref : ((L+1)^2, N2, TS)
        # out_ref: (TS, P_pad)         final (samples, properties) layout
        for ls, col, width in groups:
            rows = []
            for l in ls:
                base = l * l  # packed row offset of (l, m=0): sum_{l'<l}(2l'+1)
                factor = 1.0 / math.sqrt(2.0 * l + 1.0)
                for i in range(n1):
                    acc = None
                    for m in range(2 * l + 1):
                        a1 = c1_ref[base + m, i:i + 1, :]      # (1, TS)  sublane-broadcast row
                        a2 = c2_ref[base + m, :, :]            # (N2, TS) natural layout, no bcast
                        prod = (a1 * a2).astype(jnp.float32)   # lane-parallel VPU MAC (f32 acc)
                        acc = prod if acc is None else acc + prod
                    rows.append(factor * acc)                  # (N2, TS)
            block = jnp.concatenate(rows, axis=0)              # (width, TS)
            # Per-group transpose: XLU work overlaps the next group's VALU MACs,
            # and 128-wide column slices keep the store lane-dense.
            out_ref[:, col:col + width] = block.T.astype(out_ref.dtype)

    if shared_input:
        def kernel(c_ref, out_ref):
            body(c_ref, c_ref, out_ref)
    else:
        def kernel(c1_ref, c2_ref, out_ref):
            body(c1_ref, c2_ref, out_ref)
    return kernel


def _default_sample_tile(s_pad):
    """Largest lane-aligned tile (<= 2048) dividing s_pad while keeping >= 2
    grid steps (so v7x's two TensorCores both get work)."""
    candidates = [t for t in (2048, 1024, 512, 384, 256, 128) if s_pad % t == 0]
    for t in candidates:
        if s_pad // t >= 2:
            return t
    return candidates[0] if candidates else s_pad


def pack_spherical_expansion(c_padded):
    """(L+1, M_PAD, N, S) padded coefficients -> ((L+1)^2, N, S) packed rows.

    Row order is l-major, m in [0, 2l].  Padded m rows are dropped, so they
    never reach HBM->VMEM DMA inside the kernel.
    """
    # TODO(synk): the upstream spherical-expansion calculator should emit this
    # packed layout directly so the repack is not an extra HBM pass.
    lp1 = c_padded.shape[0]
    idx_l, idx_m = [], []
    for l in range(lp1):
        for m in range(2 * l + 1):
            idx_l.append(l)
            idx_m.append(m)
    return c_padded[jnp.array(idx_l), jnp.array(idx_m)]


def power_spectrum(c1, c2=None, *, sample_tile=None, input_buffer_count=None):
    """Compute the power spectrum invariants.

    c1: ((l_max+1)^2, N1, S) packed spherical-expansion coefficients
    c2: same layout with N2 radial channels, or None / the same array to reuse
        c1 (single-calculator case: halves input HBM traffic)
    returns: (S, (l_max+1)*N1*N2) float32, properties ordered as (l, n1, n2).
    """
    shared = (c2 is None) or (c2 is c1)
    lm1, n1, s = c1.shape
    if shared:
        n2 = n1
    else:
        lm2, n2, s2 = c2.shape
        if lm1 != lm2 or s != s2:
            raise ValueError("calculator coefficient shapes are incompatible")
    lp1 = math.isqrt(lm1)
    if lp1 * lp1 != lm1:
        raise ValueError("leading axis must have (l_max+1)^2 packed (l, m) rows")

    p = lp1 * n1 * n2
    p_pad = _round_up(p, _LANES)        # lane-dense output writeback

    if sample_tile is None:
        s_pad = _round_up(s, _LANES)
        sample_tile = _default_sample_tile(s_pad)
    else:
        if sample_tile % _LANES != 0:
            raise ValueError("sample_tile must be a multiple of 128 (lane width)")
        s_pad = _round_up(s, sample_tile)

    def _pad_samples(c):
        if s_pad == s:
            return c
        return jnp.pad(c, ((0, 0), (0, 0), (0, s_pad - s)))

    kernel = _make_power_spectrum_kernel(lp1, n1, n2, shared)

    spec_kwargs = {}
    if input_buffer_count is not None:  # e.g. 3 on v5e if input DMA is exposed
        spec_kwargs["pipeline_mode"] = pl.Buffered(input_buffer_count)

    in_specs = [pl.BlockSpec((lm1, n1, sample_tile), lambda i: (0, 0, i), **spec_kwargs)]
    inputs = [_pad_samples(c1)]
    if not shared:
        in_specs.append(pl.BlockSpec((lm1, n2, sample_tile), lambda i: (0, 0, i), **spec_kwargs))
        inputs.append(_pad_samples(c2))

    out = pl.pallas_call(
        kernel,
        out_shape=jax.ShapeDtypeStruct((s_pad, p_pad), jnp.float32),
        grid_spec=pltpu.PrefetchScalarGridSpec(
            num_scalar_prefetch=0,
            grid=(s_pad // sample_tile,),
            in_specs=in_specs,
            out_specs=pl.BlockSpec((sample_tile, p_pad), lambda i: (i, 0)),
        ),
        compiler_params=pltpu.CompilerParams(
            # sample tiles are embarrassingly parallel -> megacore split on v7x
            dimension_semantics=("parallel",),
            vmem_limit_bytes=32 * 1024 * 1024,
        ),
    )(*inputs)

    if s_pad != s or p_pad != p:
        out = out[:s, :p]
    return out


def _make_synthetic_spherical_expansion(key, lp1, m_pad, n, s):
    """Synthetic spherical-expansion coefficients in the padded (l, m) layout.

    Padded m rows (m >= 2l+1) are filled with NaN on purpose: packing must drop
    them so they never reach the kernel.  Returns (coefficients, validity mask).
    """
    coeffs = jax.random.normal(key, (lp1, m_pad, n, s), dtype=jnp.float32)
    l_idx = jnp.arange(lp1)[:, None, None, None]
    m_idx = jnp.arange(m_pad)[None, :, None, None]
    valid = m_idx < (2 * l_idx + 1)
    return jnp.where(valid, coeffs, jnp.nan), valid


if __name__ == "__main__":
    # Small synthetic problem: max_angular = 3 (=> 4 angular channels),
    # 256 atomic environments, 8 radial channels per calculator.
    L_MAX = 3
    LP1 = L_MAX + 1
    M_PAD = 2 * L_MAX + 1   # 7 (padded layout as an upstream calculator would give)
    S = 256
    N1 = 8
    N2 = 8

    key = jax.random.PRNGKey(0)
    k1, k2 = jax.random.split(key)
    c1_padded, valid = _make_synthetic_spherical_expansion(k1, LP1, M_PAD, N1, S)
    c2_padded, _ = _make_synthetic_spherical_expansion(k2, LP1, M_PAD, N2, S)

    # Pack away invalid m rows: kernel streams (L+1)^2 = 16 slabs, not 28.
    c1 = pack_spherical_expansion(c1_padded)   # (16, 8, 256)
    c2 = pack_spherical_expansion(c2_padded)   # (16, 8, 256)

    # TODO(synk): species-key bookkeeping (center / neighbor species blocks),
    # gradient blocks and metatensor TensorMap metadata are descriptor plumbing
    # with no array compute, so they are not reproduced here.

    # Two-calculator path (default tile -> 128, i.e. 2 grid steps / pipeline).
    out = jax.block_until_ready(power_spectrum(c1, c2))
    # Single-calculator path: one input stream (half the HBM traffic).
    out_shared = jax.block_until_ready(power_spectrum(c1))

    # Pure-JAX reference of the same math (zero out padded m rows first).
    c1m = jnp.where(valid, c1_padded, 0.0)
    c2m = jnp.where(valid, c2_padded, 0.0)
    factor = 1.0 / jnp.sqrt(2.0 * jnp.arange(LP1, dtype=jnp.float32) + 1.0)
    ref = jnp.einsum("lmas,lmbs->slab", c1m, c2m) * factor[None, :, None, None]
    ref = ref.reshape(S, LP1 * N1 * N2)
    ref_shared = jnp.einsum("lmas,lmbs->slab", c1m, c1m) * factor[None, :, None, None]
    ref_shared = ref_shared.reshape(S, LP1 * N1 * N1)

    assert out.shape == (S, LP1 * N1 * N2)
    assert out.dtype == jnp.float32
    assert bool(jnp.all(jnp.isfinite(out)))          # NaN padding must never leak in
    assert jnp.allclose(out, ref, atol=1e-5, rtol=1e-5)
    assert out_shared.shape == (S, LP1 * N1 * N1)
    assert bool(jnp.all(jnp.isfinite(out_shared)))
    assert jnp.allclose(out_shared, ref_shared, atol=1e-5, rtol=1e-5)

    print("KERNEL_OK")
</pallas_src>

<mosaic_0001>
module attributes {stable_mosaic.version = 11 : i64} {
  func.func @kernel(%arg0: i32, %arg1: memref<16x8x128xf32, #tpu.memory_space<vmem>>, %arg2: memref<16x8x128xf32, #tpu.memory_space<vmem>>, %arg3: memref<128x256xf32, #tpu.memory_space<vmem>>) attributes {dimension_semantics = [#tpu.dimension_semantics<parallel>], iteration_bounds = array<i64: 2>, scalar_prefetch = 0 : i64, scratch_operands = 0 : i64, tpu.core_type = #tpu.core_type<tc>, window_params = [{transform_indices = @transform_0, window_bounds = array<i64: 16, 8, 128>}, {transform_indices = @transform_1, window_bounds = array<i64: 16, 8, 128>}, {transform_indices = @transform_2, window_bounds = array<i64: 128, 256>}]} {
    %c0 = arith.constant 0 : index
    %c0_0 = arith.constant 0 : index
    %c0_1 = arith.constant 0 : index
    %0 = vector.load %arg1[%c0, %c0_0, %c0_1] : memref<16x8x128xf32, #tpu.memory_space<vmem>>, vector<1x1x128xf32>
    %1 = vector.shape_cast %0 : vector<1x1x128xf32> to vector<1x128xf32>
    %c0_2 = arith.constant 0 : index
    %c0_3 = arith.constant 0 : index
    %c0_4 = arith.constant 0 : index
    %2 = vector.load %arg2[%c0_2, %c0_3, %c0_4] : memref<16x8x128xf32, #tpu.memory_space<vmem>>, vector<1x8x128xf32>
    %3 = vector.shape_cast %2 : vector<1x8x128xf32> to vector<8x128xf32>
    %4 = vector.broadcast %1 : vector<1x128xf32> to vector<8x128xf32>
    %5 = arith.mulf %4, %3 : vector<8x128xf32>
    %cst = arith.constant 1.000000e+00 : f32
    %6 = vector.broadcast %cst : f32 to vector<8x128xf32>
    %7 = arith.mulf %6, %5 : vector<8x128xf32>
    %c0_5 = arith.constant 0 : index
    %c1 = arith.constant 1 : index
    %c0_6 = arith.constant 0 : index
    %8 = vector.load %arg1[%c0_5, %c1, %c0_6] : memref<16x8x128xf32, #tpu.memory_space<vmem>>, vector<1x1x128xf32>
    %9 = vector.shape_cast %8 : vector<1x1x128xf32> to vector<1x128xf32>
    %c0_7 = arith.constant 0 : index
    %c0_8 = arith.constant 0 : index
    %c0_9 = arith.constant 0 : index
    %10 = vector.load %arg2[%c0_7, %c0_8, %c0_9] : memref<16x8x128xf32, #tpu.memory_space<vmem>>, vector<1x8x128xf32>
    %11 = vector.shape_cast %10 : vector<1x8x128xf32> to vector<8x128xf32>
    %12 = vector.broadcast %9 : vector<1x128xf32> to vector<8x128xf32>
    %13 = arith.mulf %12, %11 : vector<8x128xf32>
    %cst_10 = arith.constant 1.000000e+00 : f32
    %14 = vector.broadcast %cst_10 : f32 to vector<8x128xf32>
    %15 = arith.mulf %14, %13 : vector<8x128xf32>
    %c0_11 = arith.constant 0 : index
    %c2 = arith.constant 2 : index
    %c0_12 = arith.constant 0 : index
    %16 = vector.load %arg1[%c0_11, %c2, %c0_12] : memref<16x8x128xf32, #tpu.memory_space<vmem>>, vector<1x1x128xf32>
    %17 = vector.shape_cast %16 : vector<1x1x128xf32> to vector<1x128xf32>
    %c0_13 = arith.constant 0 : index
    %c0_14 = arith.constant 0 : index
    %c0_15 = arith.constant 0 : index
    %18 = vector.load %arg2[%c0_13, %c0_14, %c0_15] : memref<16x8x128xf32, #tpu.memory_space<vmem>>, vector<1x8x128xf32>
    %19 = vector.shape_cast %18 : vector<1x8x128xf32> to vector<8x128xf32>
    %20 = vector.broadcast %17 : vector<1x128xf32> to vector<8x128xf32>
    %21 = arith.mulf %20, %19 : vector<8x128xf32>
    %cst_16 = arith.constant 1.000000e+00 : f32
    %22 = vector.broadcast %cst_16 : f32 to vector<8x128xf32>
    %23 = arith.mulf %22, %21 : vector<8x128xf32>
    %c0_17 = arith.constant 0 : index
    %c3 = arith.constant 3 : index
    %c0_18 = arith.constant 0 : index
    %24 = vector.load %arg1[%c0_17, %c3, %c0_18] : memref<16x8x128xf32, #tpu.memory_space<vmem>>, vector<1x1x128xf32>
    %25 = vector.shape_cast %24 : vector<1x1x128xf32> to vector<1x128xf32>
    %c0_19 = arith.constant 0 : index
    %c0_20 = arith.constant 0 : index
    %c0_21 = arith.constant 0 : index
    %26 = vector.load %arg2[%c0_19, %c0_20, %c0_21] : memref<16x8x128xf32, #tpu.memory_space<vmem>>, vector<1x8x128xf32>
    %27 = vector.shape_cast %26 : vector<1x8x128xf32> to vector<8x128xf32>
    %28 = vector.broadcast %25 : vector<1x128xf32> to vector<8x128xf32>
    %29 = arith.mulf %28, %27 : vector<8x128xf32>
    %cst_22 = arith.constant 1.000000e+00 : f32
    %30 = vector.broadcast %cst_22 : f32 to vector<8x128xf32>
    %31 = arith.mulf %30, %29 : vector<8x128xf32>
    %c0_23 = arith.constant 0 : index
    %c4 = arith.constant 4 : index
    %c0_24 = arith.constant 0 : index
    %32 = vector.load %arg1[%c0_23, %c4, %c0_24] : memref<16x8x128xf32, #tpu.memory_space<vmem>>, vector<1x1x128xf32>
    %33 = vector.shape_cast %32 : vector<1x1x128xf32> to vector<1x128xf32>
    %c0_25 = arith.constant 0 : index
    %c0_26 = arith.constant 0 : index
    %c0_27 = arith.constant 0 : index
    %34 = vector.load %arg2[%c0_25, %c0_26, %c0_27] : memref<16x8x128xf32, #tpu.memory_space<vmem>>, vector<1x8x128xf32>
    %35 = vector.shape_cast %34 : vector<1x8x128xf32> to vector<8x128xf32>
    %36 = vector.broadcast %33 : vector<1x128xf32> to vector<8x128xf32>
    %37 = arith.mulf %36, %35 : vector<8x128xf32>
    %cst_28 = arith.constant 1.000000e+00 : f32
    %38 = vector.broadcast %cst_28 : f32 to vector<8x128xf32>
    %39 = arith.mulf %38, %37 : vector<8x128xf32>
    %c0_29 = arith.constant 0 : index
    %c5 = arith.constant 5 : index
    %c0_30 = arith.constant 0 : index
    %40 = vector.load %arg1[%c0_29, %c5, %c0_30] : memref<16x8x128xf32, #tpu.memory_space<vmem>>, vector<1x1x128xf32>
    %41 = vector.shape_cast %40 : vector<1x1x128xf32> to vector<1x128xf32>
    %c0_31 = arith.constant 0 : index
    %c0_32 = arith.constant 0 : index
    %c0_33 = arith.constant 0 : index
    %42 = vector.load %arg2[%c0_31, %c0_32, %c0_33] : memref<16x8x128xf32, #tpu.memory_space<vmem>>, vector<1x8x128xf32>
    %43 = vector.shape_cast %42 : vector<1x8x128xf32> to vector<8x128xf32>
    %44 = vector.broadcast %41 : vector<1x128xf32> to vector<8x128xf32>
    %45 = arith.mulf %44, %43 : vector<8x128xf32>
    %cst_34 = arith.constant 1.000000e+00 : f32
    %46 = vector.broadcast %cst_34 : f32 to vector<8x128xf32>
    %47 = arith.mulf %46, %45 : vector<8x128xf32>
    %c0_35 = arith.constant 0 : index
    %c6 = arith.constant 6 : index
    %c0_36 = arith.constant 0 : index
    %48 = vector.load %arg1[%c0_35, %c6, %c0_36] : memref<16x8x128xf32, #tpu.memory_space<vmem>>, vector<1x1x128xf32>
    %49 = vector.shape_cast %48 : vector<1x1x128xf32> to vector<1x128xf32>
    %c0_37 = arith.constant 0 : index
    %c0_38 = arith.constant 0 : index
    %c0_39 = arith.constant 0 : index
    %50 = vector.load %arg2[%c0_37, %c0_38, %c0_39] : memref<16x8x128xf32, #tpu.memory_space<vmem>>, vector<1x8x128xf32>
    %51 = vector.shape_cast %50 : vector<1x8x128xf32> to vector<8x128xf32>
    %52 = vector.broadcast %49 : vector<1x128xf32> to vector<8x128xf32>
    %53 = arith.mulf %52, %51 : vector<8x128xf32>
    %cst_40 = arith.constant 1.000000e+00 : f32
    %54 = vector.broadcast %cst_40 : f32 to vector<8x128xf32>
    %55 = arith.mulf %54, %53 : vector<8x128xf32>
    %c0_41 = arith.constant 0 : index
    %c7 = arith.constant 7 : index
    %c0_42 = arith.constant 0 : index
    %56 = vector.load %arg1[%c0_41, %c7, %c0_42] : memref<16x8x128xf32, #tpu.memory_space<vmem>>, vector<1x1x128xf32>
    %57 = vector.shape_cast %56 : vector<1x1x128xf32> to vector<1x128xf32>
    %c0_43 = arith.constant 0 : index
    %c0_44 = arith.constant 0 : index
    %c0_45 = arith.constant 0 : index
    %58 = vector.load %arg2[%c0_43, %c0_44, %c0_45] : memref<16x8x128xf32, #tpu.memory_space<vmem>>, vector<1x8x128xf32>
    %59 = vector.shape_cast %58 : vector<1x8x128xf32> to vector<8x128xf32>
    %60 = vector.broadcast %57 : vector<1x128xf32> to vector<8x128xf32>
    %61 = arith.mulf %60, %59 : vector<8x128xf32>
    %cst_46 = arith.constant 1.000000e+00 : f32
    %62 = vector.broadcast %cst_46 : f32 to vector<8x128xf32>
    %63 = arith.mulf %62, %61 : vector<8x128xf32>
    %c1_47 = arith.constant 1 : index
    %c0_48 = arith.constant 0 : index
    %c0_49 = arith.constant 0 : index
    %64 = vector.load %arg1[%c1_47, %c0_48, %c0_49] : memref<16x8x128xf32, #tpu.memory_space<vmem>>, vector<1x1x128xf32>
    %65 = vector.shape_cast %64 : vector<1x1x128xf32> to vector<1x128xf32>
    %c1_50 = arith.constant 1 : index
    %c0_51 = arith.constant 0 : index
    %c0_52 = arith.constant 0 : index
    %66 = vector.load %arg2[%c1_50, %c0_51, %c0_52] : memref<16x8x128xf32, #tpu.memory_space<vmem>>, vector<1x8x128xf32>
    %67 = vector.shape_cast %66 : vector<1x8x128xf32> to vector<8x128xf32>
    %68 = vector.broadcast %65 : vector<1x128xf32> to vector<8x128xf32>
    %69 = arith.mulf %68, %67 : vector<8x128xf32>
    %c2_53 = arith.constant 2 : index
    %c0_54 = arith.constant 0 : index
    %c0_55 = arith.constant 0 : index
    %70 = vector.load %arg1[%c2_53, %c0_54, %c0_55] : memref<16x8x128xf32, #tpu.memory_space<vmem>>, vector<1x1x128xf32>
    %71 = vector.shape_cast %70 : vector<1x1x128xf32> to vector<1x128xf32>
    %c2_56 = arith.constant 2 : index
    %c0_57 = arith.constant 0 : index
    %c0_58 = arith.constant 0 : index
    %72 = vector.load %arg2[%c2_56, %c0_57, %c0_58] : memref<16x8x128xf32, #tpu.memory_space<vmem>>, vector<1x8x128xf32>
    %73 = vector.shape_cast %72 : vector<1x8x128xf32> to vector<8x128xf32>
    %74 = vector.broadcast %71 : vector<1x128xf32> to vector<8x128xf32>
    %75 = arith.mulf %74, %73 : vector<8x128xf32>
    %76 = arith.addf %69, %75 : vector<8x128xf32>
    %c3_59 = arith.constant 3 : index
    %c0_60 = arith.constant 0 : index
    %c0_61 = arith.constant 0 : index
    %77 = vector.load %arg1[%c3_59, %c0_60, %c0_61] : memref<16x8x128xf32, #tpu.memory_space<vmem>>, vector<1x1x128xf32>
    %78 = vector.shape_cast %77 : vector<1x1x128xf32> to vector<1x128xf32>
    %c3_62 = arith.constant 3 : index
    %c0_63 = arith.constant 0 : index
    %c0_64 = arith.constant 0 : index
    %79 = vector.load %arg2[%c3_62, %c0_63, %c0_64] : memref<16x8x128xf32, #tpu.memory_space<vmem>>, vector<1x8x128xf32>
    %80 = vector.shape_cast %79 : vector<1x8x128xf32> to vector<8x128xf32>
    %81 = vector.broadcast %78 : vector<1x128xf32> to vector<8x128xf32>
    %82 = arith.mulf %81, %80 : vector<8x128xf32>
    %83 = arith.addf %76, %82 : vector<8x128xf32>
    %cst_65 = arith.constant 0.577350259 : f32
    %84 = vector.broadcast %cst_65 : f32 to vector<8x128xf32>
    %85 = arith.mulf %84, %83 : vector<8x128xf32>
    %c1_66 = arith.constant 1 : index
    %c1_67 = arith.constant 1 : index
    %c0_68 = arith.constant 0 : index
    %86 = vector.load %arg1[%c1_66, %c1_67, %c0_68] : memref<16x8x128xf32, #tpu.memory_space<vmem>>, vector<1x1x128xf32>
    %87 = vector.shape_cast %86 : vector<1x1x128xf32> to vector<1x128xf32>
    %c1_69 = arith.constant 1 : index
    %c0_70 = arith.constant 0 : index
    %c0_71 = arith.constant 0 : index
    %88 = vector.load %arg2[%c1_69, %c0_70, %c0_71] : memref<16x8x128xf32, #tpu.memory_space<vmem>>, vector<1x8x128xf32>
    %89 = vector.shape_cast %88 : vector<1x8x128xf32> to vector<8x128xf32>
    %90 = vector.broadcast %87 : vector<1x128xf32> to vector<8x128xf32>
    %91 = arith.mulf %90, %89 : vector<8x128xf32>
    %c2_72 = arith.constant 2 : index
    %c1_73 = arith.constant 1 : index
    %c0_74 = arith.constant 0 : index
    %92 = vector.load %arg1[%c2_72, %c1_73, %c0_74] : memref<16x8x128xf32, #tpu.memory_space<vmem>>, vector<1x1x128xf32>
    %93 = vector.shape_cast %92 : vector<1x1x128xf32> to vector<1x128xf32>
    %c2_75 = arith.constant 2 : index
    %c0_76 = arith.constant 0 : index
    %c0_77 = arith.constant 0 : index
    %94 = vector.load %arg2[%c2_75, %c0_76, %c0_77] : memref<16x8x128xf32, #tpu.memory_space<vmem>>, vector<1x8x128xf32>
    %95 = vector.shape_cast %94 : vector<1x8x128xf32> to vector<8x128xf32>
    %96 = vector.broadcast %93 : vector<1x128xf32> to vector<8x128xf32>
    %97 = arith.mulf %96, %95 : vector<8x128xf32>
    %98 = arith.addf %91, %97 : vector<8x128xf32>
    %c3_78 = arith.constant 3 : index
    %c1_79 = arith.constant 1 : index
    %c0_80 = arith.constant 0 : index
    %99 = vector.load %arg1[%c3_78, %c1_79, %c0_80] : memref<16x8x128xf32, #tpu.memory_space<vmem>>, vector<1x1x128xf32>
    %100 = vector.shape_cast %99 : vector<1x1x128xf32> to vector<1x128xf32>
    %c3_81 = arith.constant 3 : index
    %c0_82 = arith.constant 0 : index
    %c0_83 = arith.constant 0 : index
    %101 = vector.load %arg2[%c3_81, %c0_82, %c0_83] : memref<16x8x128xf32, #tpu.memory_space<vmem>>, vector<1x8x128xf32>
    %102 = vector.shape_cast %101 : vector<1x8x128xf32> to vector<8x128xf32>
    %103 = vector.broadcast %100 : vector<1x128xf32> to vector<8x128xf32>
    %104 = arith.mulf %103, %102 : vector<8x128xf32>
    %105 = arith.addf %98, %104 : vector<8x128xf32>
    %cst_84 = arith.constant 0.577350259 : f32
    %106 = vector.broadcast %cst_84 : f32 to vector<8x128xf32>
    %107 = arith.mulf %106, %105 : vector<8x128xf32>
    %c1_85 = arith.constant 1 : index
    %c2_86 = arith.constant 2 : index
    %c0_87 = arith.constant 0 : index
    %108 = vector.load %arg1[%c1_85, %c2_86, %c0_87] : memref<16x8x128xf32, #tpu.memory_space<vmem>>, vector<1x1x128xf32>
    %109 = vector.shape_cast %108 : vector<1x1x128xf32> to vector<1x128xf32>
    %c1_88 = arith.constant 1 : index
    %c0_89 = arith.constant 0 : index
    %c0_90 = arith.constant 0 : index
    %110 = vector.load %arg2[%c1_88, %c0_89, %c0_90] : memref<16x8x128xf32, #tpu.memory_space<vmem>>, vector<1x8x128xf32>
    %111 = vector.shape_cast %110 : vector<1x8x128xf32> to vector<8x128xf32>
    %112 = vector.broadcast %109 : vector<1x128xf32> to vector<8x128xf32>
    %113 = arith.mulf %112, %111 : vector<8x128xf32>
    %c2_91 = arith.constant 2 : index
    %c2_92 = arith.constant 2 : index
    %c0_93 = arith.constant 0 : index
    %114 = vector.load %arg1[%c2_91, %c2_92, %c0_93] : memref<16x8x128xf32, #tpu.memory_space<vmem>>, vector<1x1x128xf32>
    %115 = vector.shape_cast %114 : vector<1x1x128xf32> to vector<1x128xf32>
    %c2_94 = arith.constant 2 : index
    %c0_95 = arith.constant 0 : index
    %c0_96 = arith.constant 0 : index
    %116 = vector.load %arg2[%c2_94, %c0_95, %c0_96] : memref<16x8x128xf32, #tpu.memory_space<vmem>>, vector<1x8x128xf32>
    %117 = vector.shape_cast %116 : vector<1x8x128xf32> to vector<8x128xf32>
    %118 = vector.broadcast %115 : vector<1x128xf32> to vector<8x128xf32>
    %119 = arith.mulf %118, %117 : vector<8x128xf32>
    %120 = arith.addf %113, %119 : vector<8x128xf32>
    %c3_97 = arith.constant 3 : index
    %c2_98 = arith.constant 2 : index
    %c0_99 = arith.constant 0 : index
    %121 = vector.load %arg1[%c3_97, %c2_98, %c0_99] : memref<16x8x128xf32, #tpu.memory_space<vmem>>, vector<1x1x128xf32>
    %122 = vector.shape_cast %121 : vector<1x1x128xf32> to vector<1x128xf32>
    %c3_100 = arith.constant 3 : index
    %c0_101 = arith.constant 0 : index
    %c0_102 = arith.constant 0 : index
    %123 = vector.load %arg2[%c3_100, %c0_101, %c0_102] : memref<16x8x128xf32, #tpu.memory_space<vmem>>, vector<1x8x128xf32>
    %124 = vector.shape_cast %123 : vector<1x8x128xf32> to vector<8x128xf32>
    %125 = vector.broadcast %122 : vector<1x128xf32> to vector<8x128xf32>
    %126 = arith.mulf %125, %124 : vector<8x128xf32>
    %127 = arith.addf %120, %126 : vector<8x128xf32>
    %cst_103 = arith.constant 0.577350259 : f32
    %128 = vector.broadcast %cst_103 : f32 to vector<8x128xf32>
    %129 = arith.mulf %128, %127 : vector<8x128xf32>
    %c1_104 = arith.constant 1 : index
    %c3_105 = arith.constant 3 : index
    %c0_106 = arith.constant 0 : index
    %130 = vector.load %arg1[%c1_104, %c3_105, %c0_106] : memref<16x8x128xf32, #tpu.memory_space<vmem>>, vector<1x1x128xf32>
    %131 = vector.shape_cast %130 : vector<1x1x128xf32> to vector<1x128xf32>
    %c1_107 = arith.constant 1 : index
    %c0_108 = arith.constant 0 : index
    %c0_109 = arith.constant 0 : index
    %132 = vector.load %arg2[%c1_107, %c0_108, %c0_109] : memref<16x8x128xf32, #tpu.memory_space<vmem>>, vector<1x8x128xf32>
    %133 = vector.shape_cast %132 : vector<1x8x128xf32> to vector<8x128xf32>
    %134 = vector.broadcast %131 : vector<1x128xf32> to vector<8x128xf32>
    %135 = arith.mulf %134, %133 : vector<8x128xf32>
    %c2_110 = arith.constant 2 : index
    %c3_111 = arith.constant 3 : index
    %c0_112 = arith.constant 0 : index
    %136 = vector.load %arg1[%c2_110, %c3_111, %c0_112] : memref<16x8x128xf32, #tpu.memory_space<vmem>>, vector<1x1x128xf32>
    %137 = vector.shape_cast %136 : vector<1x1x128xf32> to vector<1x128xf32>
    %c2_113 = arith.constant 2 : index
    %c0_114 = arith.constant 0 : index
    %c0_115 = arith.constant 0 : index
    %138 = vector.load %arg2[%c2_113, %c0_114, %c0_115] : memref<16x8x128xf32, #tpu.memory_space<vmem>>, vector<1x8x128xf32>
    %139 = vector.shape_cast %138 : vector<1x8x128xf32> to vector<8x128xf32>
    %140 = vector.broadcast %137 : vector<1x128xf32> to vector<8x128xf32>
    %141 = arith.mulf %140, %139 : vector<8x128xf32>
    %142 = arith.addf %135, %141 : vector<8x128xf32>
    %c3_116 = arith.constant 3 : index
    %c3_117 = arith.constant 3 : index
    %c0_118 = arith.constant 0 : index
    %143 = vector.load %arg1[%c3_116, %c3_117, %c0_118] : memref<16x8x128xf32, #tpu.memory_space<vmem>>, vector<1x1x128xf32>
    %144 = vector.shape_cast %143 : vector<1x1x128xf32> to vector<1x128xf32>
    %c3_119 = arith.constant 3 : index
    %c0_120 = arith.constant 0 : index
    %c0_121 = arith.constant 0 : index
    %145 = vector.load %arg2[%c3_119, %c0_120, %c0_121] : memref<16x8x128xf32, #tpu.memory_space<vmem>>, vector<1x8x128xf32>
    %146 = vector.shape_cast %145 : vector<1x8x128xf32> to vector<8x128xf32>
    %147 = vector.broadcast %144 : vector<1x128xf32> to vector<8x128xf32>
    %148 = arith.mulf %147, %146 : vector<8x128xf32>
    %149 = arith.addf %142, %148 : vector<8x128xf32>
    %cst_122 = arith.constant 0.577350259 : f32
    %150 = vector.broadcast %cst_122 : f32 to vector<8x128xf32>
    %151 = arith.mulf %150, %149 : vector<8x128xf32>
    %c1_123 = arith.constant 1 : index
    %c4_124 = arith.constant 4 : index
    %c0_125 = arith.constant 0 : index
    %152 = vector.load %arg1[%c1_123, %c4_124, %c0_125] : memref<16x8x128xf32, #tpu.memory_space<vmem>>, vector<1x1x128xf32>
    %153 = vector.shape_cast %152 : vector<1x1x128xf32> to vector<1x128xf32>
    %c1_126 = arith.constant 1 : index
    %c0_127 = arith.constant 0 : index
    %c0_128 = arith.constant 0 : index
    %154 = vector.load %arg2[%c1_126, %c0_127, %c0_128] : memref<16x8x128xf32, #tpu.memory_space<vmem>>, vector<1x8x128xf32>
    %155 = vector.shape_cast %154 : vector<1x8x128xf32> to vector<8x128xf32>
    %156 = vector.broadcast %153 : vector<1x128xf32> to vector<8x128xf32>
    %157 = arith.mulf %156, %155 : vector<8x128xf32>
    %c2_129 = arith.constant 2 : index
    %c4_130 = arith.constant 4 : index
    %c0_131 = arith.constant 0 : index
    %158 = vector.load %arg1[%c2_129, %c4_130, %c0_131] : memref<16x8x128xf32, #tpu.memory_space<vmem>>, vector<1x1x128xf32>
    %159 = vector.shape_cast %158 : vector<1x1x128xf32> to vector<1x128xf32>
    %c2_132 = arith.constant 2 : index
    %c0_133 = arith.constant 0 : index
    %c0_134 = arith.constant 0 : index
    %160 = vector.load %arg2[%c2_132, %c0_133, %c0_134] : memref<16x8x128xf32, #tpu.memory_space<vmem>>, vector<1x8x128xf32>
    %161 = vector.shape_cast %160 : vector<1x8x128xf32> to vector<8x128xf32>
    %162 = vector.broadcast %159 : vector<1x128xf32> to vector<8x128xf32>
    %163 = arith.mulf %162, %161 : vector<8x128xf32>
    %164 = arith.addf %157, %163 : vector<8x128xf32>
    %c3_135 = arith.constant 3 : index
    %c4_136 = arith.constant 4 : index
    %c0_137 = arith.constant 0 : index
    %165 = vector.load %arg1[%c3_135, %c4_136, %c0_137] : memref<16x8x128xf32, #tpu.memory_space<vmem>>, vector<1x1x128xf32>
    %166 = vector.shape_cast %165 : vector<1x1x128xf32> to vector<1x128xf32>
    %c3_138 = arith.constant 3 : index
    %c0_139 = arith.constant 0 : index
    %c0_140 = arith.constant 0 : index
    %167 = vector.load %arg2[%c3_138, %c0_139, %c0_140] : memref<16x8x128xf32, #tpu.memory_space<vmem>>, vector<1x8x128xf32>
    %168 = vector.shape_cast %167 : vector<1x8x128xf32> to vector<8x128xf32>
    %169 = vector.broadcast %166 : vector<1x128xf32> to vector<8x128xf32>
    %170 = arith.mulf %169, %168 : vector<8x128xf32>
    %171 = arith.addf %164, %170 : vector<8x128xf32>
    %cst_141 = arith.constant 0.577350259 : f32
    %172 = vector.broadcast %cst_141 : f32 to vector<8x128xf32>
    %173 = arith.mulf %172, %171 : vector<8x128xf32>
    %c1_142 = arith.constant 1 : index
    %c5_143 = arith.constant 5 : index
    %c0_144 = arith.constant 0 : index
    %174 = vector.load %arg1[%c1_142, %c5_143, %c0_144] : memref<16x8x128xf32, #tpu.memory_space<vmem>>, vector<1x1x128xf32>
    %175 = vector.shape_cast %174 : vector<1x1x128xf32> to vector<1x128xf32>
    %c1_145 = arith.constant 1 : index
    %c0_146 = arith.constant 0 : index
    %c0_147 = arith.constant 0 : index
    %176 = vector.load %arg2[%c1_145, %c0_146, %c0_147] : memref<16x8x128xf32, #tpu.memory_space<vmem>>, vector<1x8x128xf32>
    %177 = vector.shape_cast %176 : vector<1x8x128xf32> to vector<8x128xf32>
    %178 = vector.broadcast %175 : vector<1x128xf32> to vector<8x128xf32>
    %179 = arith.mulf %178, %177 : vector<8x128xf32>
    %c2_148 = arith.constant 2 : index
    %c5_149 = arith.constant 5 : index
    %c0_150 = arith.constant 0 : index
    %180 = vector.load %arg1[%c2_148, %c5_149, %c0_150] : memref<16x8x128xf32, #tpu.memory_space<vmem>>, vector<1x1x128xf32>
    %181 = vector.shape_cast %180 : vector<1x1x128xf32> to vector<1x128xf32>
    %c2_151 = arith.constant 2 : index
    %c0_152 = arith.constant 0 : index
    %c0_153 = arith.constant 0 : index
    %182 = vector.load %arg2[%c2_151, %c0_152, %c0_153] : memref<16x8x128xf32, #tpu.memory_space<vmem>>, vector<1x8x128xf32>
    %183 = vector.shape_cast %182 : vector<1x8x128xf32> to vector<8x128xf32>
    %184 = vector.broadcast %181 : vector<1x128xf32> to vector<8x128xf32>
    %185 = arith.mulf %184, %183 : vector<8x128xf32>
    %186 = arith.addf %179, %185 : vector<8x128xf32>
    %c3_154 = arith.constant 3 : index
    %c5_155 = arith.constant 5 : index
    %c0_156 = arith.constant 0 : index
    %187 = vector.load %arg1[%c3_154, %c5_155, %c0_156] : memref<16x8x128xf32, #tpu.memory_space<vmem>>, vector<1x1x128xf32>
    %188 = vector.shape_cast %187 : vector<1x1x128xf32> to vector<1x128xf32>
    %c3_157 = arith.constant 3 : index
    %c0_158 = arith.constant 0 : index
    %c0_159 = arith.constant 0 : index
    %189 = vector.load %arg2[%c3_157, %c0_158, %c0_159] : memref<16x8x128xf32, #tpu.memory_space<vmem>>, vector<1x8x128xf32>
    %190 = vector.shape_cast %189 : vector<1x8x128xf32> to vector<8x128xf32>
    %191 = vector.broadcast %188 : vector<1x128xf32> to vector<8x128xf32>
    %192 = arith.mulf %191, %190 : vector<8x128xf32>
    %193 = arith.addf %186, %192 : vector<8x128xf32>
    %cst_160 = arith.constant 0.577350259 : f32
    %194 = vector.broadcast %cst_160 : f32 to vector<8x128xf32>
    %195 = arith.mulf %194, %193 : vector<8x128xf32>
    %c1_161 = arith.constant 1 : index
    %c6_162 = arith.constant 6 : index
    %c0_163 = arith.constant 0 : index
    %196 = vector.load %arg1[%c1_161, %c6_162, %c0_163] : memref<16x8x128xf32, #tpu.memory_space<vmem>>, vector<1x1x128xf32>
    %197 = vector.shape_cast %196 : vector<1x1x128xf32> to vector<1x128xf32>
    %c1_164 = arith.constant 1 : index
    %c0_165 = arith.constant 0 : index
    %c0_166 = arith.constant 0 : index
    %198 = vector.load %arg2[%c1_164, %c0_165, %c0_166] : memref<16x8x128xf32, #tpu.memory_space<vmem>>, vector<1x8x128xf32>
    %199 = vector.shape_cast %198 : vector<1x8x128xf32> to vector<8x128xf32>
    %200 = vector.broadcast %197 : vector<1x128xf32> to vector<8x128xf32>
    %201 = arith.mulf %200, %199 : vector<8x128xf32>
    %c2_167 = arith.constant 2 : index
    %c6_168 = arith.constant 6 : index
    %c0_169 = arith.constant 0 : index
    %202 = vector.load %arg1[%c2_167, %c6_168, %c0_169] : memref<16x8x128xf32, #tpu.memory_space<vmem>>, vector<1x1x128xf32>
    %203 = vector.shape_cast %202 : vector<1x1x128xf32> to vector<1x128xf32>
    %c2_170 = arith.constant 2 : index
    %c0_171 = arith.constant 0 : index
    %c0_172 = arith.constant 0 : index
    %204 = vector.load %arg2[%c2_170, %c0_171, %c0_172] : memref<16x8x128xf32, #tpu.memory_space<vmem>>, vector<1x8x128xf32>
    %205 = vector.shape_cast %204 : vector<1x8x128xf32> to vector<8x128xf32>
    %206 = vector.broadcast %203 : vector<1x128xf32> to vector<8x128xf32>
    %207 = arith.mulf %206, %205 : vector<8x128xf32>
    %208 = arith.addf %201, %207 : vector<8x128xf32>
    %c3_173 = arith.constant 3 : index
    %c6_174 = arith.constant 6 : index
    %c0_175 = arith.constant 0 : index
    %209 = vector.load %arg1[%c3_173, %c6_174, %c0_175] : memref<16x8x128xf32, #tpu.memory_space<vmem>>, vector<1x1x128xf32>
    %210 = vector.shape_cast %209 : vector<1x1x128xf32> to vector<1x128xf32>
    %c3_176 = arith.constant 3 : index
    %c0_177 = arith.constant 0 : index
    %c0_178 = arith.constant 0 : index
    %211 = vector.load %arg2[%c3_176, %c0_177, %c0_178] : memref<16x8x128xf32, #tpu.memory_space<vmem>>, vector<1x8x128xf32>
    %212 = vector.shape_cast %211 : vector<1x8x128xf32> to vector<8x128xf32>
    %213 = vector.broadcast %210 : vector<1x128xf32> to vector<8x128xf32>
    %214 = arith.mulf %213, %212 : vector<8x128xf32>
    %215 = arith.addf %208, %214 : vector<8x128xf32>
    %cst_179 = arith.constant 0.577350259 : f32
    %216 = vector.broadcast %cst_179 : f32 to vector<8x128xf32>
    %217 = arith.mulf %216, %215 : vector<8x128xf32>
    %c1_180 = arith.constant 1 : index
    %c7_181 = arith.constant 7 : index
    %c0_182 = arith.constant 0 : index
    %218 = vector.load %arg1[%c1_180, %c7_181, %c0_182] : memref<16x8x128xf32, #tpu.memory_space<vmem>>, vector<1x1x128xf32>
    %219 = vector.shape_cast %218 : vector<1x1x128xf32> to vector<1x128xf32>
    %c1_183 = arith.constant 1 : index
    %c0_184 = arith.constant 0 : index
    %c0_185 = arith.constant 0 : index
    %220 = vector.load %arg2[%c1_183, %c0_184, %c0_185] : memref<16x8x128xf32, #tpu.memory_space<vmem>>, vector<1x8x128xf32>
    %221 = vector.shape_cast %220 : vector<1x8x128xf32> to vector<8x128xf32>
    %222 = vector.broadcast %219 : vector<1x128xf32> to vector<8x128xf32>
    %223 = arith.mulf %222, %221 : vector<8x128xf32>
    %c2_186 = arith.constant 2 : index
    %c7_187 = arith.constant 7 : index
    %c0_188 = arith.constant 0 : index
    %224 = vector.load %arg1[%c2_186, %c7_187, %c0_188] : memref<16x8x128xf32, #tpu.memory_space<vmem>>, vector<1x1x128xf32>
    %225 = vector.shape_cast %224 : vector<1x1x128xf32> to vector<1x128xf32>
    %c2_189 = arith.constant 2 : index
    %c0_190 = arith.constant 0 : index
    %c0_191 = arith.constant 0 : index
    %226 = vector.load %arg2[%c2_189, %c0_190, %c0_191] : memref<16x8x128xf32, #tpu.memory_space<vmem>>, vector<1x8x128xf32>
    %227 = vector.shape_cast %226 : vector<1x8x128xf32> to vector<8x128xf32>
    %228 = vector.broadcast %225 : vector<1x128xf32> to vector<8x128xf32>
    %229 = arith.mulf %228, %227 : vector<8x128xf32>
    %230 = arith.addf %223, %229 : vector<8x128xf32>
    %c3_192 = arith.constant 3 : index
    %c7_193 = arith.constant 7 : index
    %c0_194 = arith.constant 0 : index
    %231 = vector.load %arg1[%c3_192, %c7_193, %c0_194] : memref<16x8x128xf32, #tpu.memory_space<vmem>>, vector<1x1x128xf32>
    %232 = vector.shape_cast %231 : vector<1x1x128xf32> to vector<1x128xf32>
    %c3_195 = arith.constant 3 : index
    %c0_196 = arith.constant 0 : index
    %c0_197 = arith.constant 0 : index
    %233 = vector.load %arg2[%c3_195, %c0_196, %c0_197] : memref<16x8x128xf32, #tpu.memory_space<vmem>>, vector<1x8x128xf32>
    %234 = vector.shape_cast %233 : vector<1x8x128xf32> to vector<8x128xf32>
    %235 = vector.broadcast %232 : vector<1x128xf32> to vector<8x128xf32>
    %236 = arith.mulf %235, %234 : vector<8x128xf32>
    %237 = arith.addf %230, %236 : vector<8x128xf32>
    %cst_198 = arith.constant 0.577350259 : f32
    %238 = vector.broadcast %cst_198 : f32 to vector<8x128xf32>
    %239 = arith.mulf %238, %237 : vector<8x128xf32>
    %240 = tpu.concatenate %7, %15, %23, %31, %39, %47, %55, %63, %85, %107, %129, %151, %173, %195, %217, %239 in 0 : vector<8x128xf32>, vector<8x128xf32>, vector<8x128xf32>, vector<8x128xf32>, vector<8x128xf32>, vector<8x128xf32>, vector<8x128xf32>, vector<8x128xf32>, vector<8x128xf32>, vector<8x128xf32>, vector<8x128xf32>, vector<8x128xf32>, vector<8x128xf32>, vector<8x128xf32>, vector<8x128xf32>, vector<8x128xf32> -> vector<128x128xf32>
    %241 = tpu.transpose %240, [1, 0] : vector<128x128xf32> -> vector<128x128xf32>
    %c0_199 = arith.constant 0 : index
    %c0_200 = arith.constant 0 : index
    %242 = vector.load %arg3[%c0_199, %c0_200] : memref<128x256xf32, #tpu.memory_space<vmem>>, vector<128x128xf32>
    tpu.vector_store %arg3[%c0_199, %c0_200], %241 {strides = array<i32>} : memref<128x256xf32, #tpu.memory_space<vmem>>, vector<128x128xf32>,
    %c4_201 = arith.constant 4 : index
    %c0_202 = arith.constant 0 : index
    %c0_203 = arith.constant 0 : index
    %243 = vector.load %arg1[%c4_201, %c0_202, %c0_203] : memref<16x8x128xf32, #tpu.memory_space<vmem>>, vector<1x1x128xf32>
    %244 = vector.shape_cast %243 : vector<1x1x128xf32> to vector<1x128xf32>
    %c4_204 = arith.constant 4 : index
    %c0_205 = arith.constant 0 : index
    %c0_206 = arith.constant 0 : index
    %245 = vector.load %arg2[%c4_204, %c0_205, %c0_206] : memref<16x8x128xf32, #tpu.memory_space<vmem>>, vector<1x8x128xf32>
    %246 = vector.shape_cast %245 : vector<1x8x128xf32> to vector<8x128xf32>
    %247 = vector.broadcast %244 : vector<1x128xf32> to vector<8x128xf32>
    %248 = arith.mulf %247, %246 : vector<8x128xf32>
    %c5_207 = arith.constant 5 : index
    %c0_208 = arith.constant 0 : index
    %c0_209 = arith.constant 0 : index
    %249 = vector.load %arg1[%c5_207, %c0_208, %c0_209] : memref<16x8x128xf32, #tpu.memory_space<vmem>>, vector<1x1x128xf32>
    %250 = vector.shape_cast %249 : vector<1x1x128xf32> to vector<1x128xf32>
    %c5_210 = arith.constant 5 : index
    %c0_211 = arith.constant 0 : index
    %c0_212 = arith.constant 0 : index
    %251 = vector.load %arg2[%c5_210, %c0_211, %c0_212] : memref<16x8x128xf32, #tpu.memory_space<vmem>>, vector<1x8x128xf32>
    %252 = vector.shape_cast %251 : vector<1x8x128xf32> to vector<8x128xf32>
    %253 = vector.broadcast %250 : vector<1x128xf32> to vector<8x128xf32>
    %254 = arith.mulf %253, %252 : vector<8x128xf32>
    %255 = arith.addf %248, %254 : vector<8x128xf32>
    %c6_213 = arith.constant 6 : index
    %c0_214 = arith.constant 0 : index
    %c0_215 = arith.constant 0 : index
    %256 = vector.load %arg1[%c6_213, %c0_214, %c0_215] : memref<16x8x128xf32, #tpu.memory_space<vmem>>, vector<1x1x128xf32>
    %257 = vector.shape_cast %256 : vector<1x1x128xf32> to vector<1x128xf32>
    %c6_216 = arith.constant 6 : index
    %c0_217 = arith.constant 0 : index
    %c0_218 = arith.constant 0 : index
    %258 = vector.load %arg2[%c6_216, %c0_217, %c0_218] : memref<16x8x128xf32, #tpu.memory_space<vmem>>, vector<1x8x128xf32>
    %259 = vector.shape_cast %258 : vector<1x8x128xf32> to vector<8x128xf32>
    %260 = vector.broadcast %257 : vector<1x128xf32> to vector<8x128xf32>
    %261 = arith.mulf %260, %259 : vector<8x128xf32>
    %262 = arith.addf %255, %261 : vector<8x128xf32>
    %c7_219 = arith.constant 7 : index
    %c0_220 = arith.constant 0 : index
    %c0_221 = arith.constant 0 : index
    %263 = vector.load %arg1[%c7_219, %c0_220, %c0_221] : memref<16x8x128xf32, #tpu.memory_space<vmem>>, vector<1x1x128xf32>
    %264 = vector.shape_cast %263 : vector<1x1x128xf32> to vector<1x128xf32>
    %c7_222 = arith.constant 7 : index
    %c0_223 = arith.constant 0 : index
    %c0_224 = arith.constant 0 : index
    %265 = vector.load %arg2[%c7_222, %c0_223, %c0_224] : memref<16x8x128xf32, #tpu.memory_space<vmem>>, vector<1x8x128xf32>
    %266 = vector.shape_cast %265 : vector<1x8x128xf32> to vector<8x128xf32>
    %267 = vector.broadcast %264 : vector<1x128xf32> to vector<8x128xf32>
    %268 = arith.mulf %267, %266 : vector<8x128xf32>
    %269 = arith.addf %262, %268 : vector<8x128xf32>
    %c8 = arith.constant 8 : index
    %c0_225 = arith.constant 0 : index
    %c0_226 = arith.constant 0 : index
    %270 = vector.load %arg1[%c8, %c0_225, %c0_226] : memref<16x8x128xf32, #tpu.memory_space<vmem>>, vector<1x1x128xf32>
    %271 = vector.shape_cast %270 : vector<1x1x128xf32> to vector<1x128xf32>
    %c8_227 = arith.constant 8 : index
    %c0_228 = arith.constant 0 : index
    %c0_229 = arith.constant 0 : index
    %272 = vector.load %arg2[%c8_227, %c0_228, %c0_229] : memref<16x8x128xf32, #tpu.memory_space<vmem>>, vector<1x8x128xf32>
    %273 = vector.shape_cast %272 : vector<1x8x128xf32> to vector<8x128xf32>
    %274 = vector.broadcast %271 : vector<1x128xf32> to vector<8x128xf32>
    %275 = arith.mulf %274, %273 : vector<8x128xf32>
    %276 = arith.addf %269, %275 : vector<8x128xf32>
    %cst_230 = arith.constant 0.44721359 : f32
    %277 = vector.broadcast %cst_230 : f32 to vector<8x128xf32>
    %278 = arith.mulf %277, %276 : vector<8x128xf32>
    %c4_231 = arith.constant 4 : index
    %c1_232 = arith.constant 1 : index
    %c0_233 = arith.constant 0 : index
    %279 = vector.load %arg1[%c4_231, %c1_232, %c0_233] : memref<16x8x128xf32, #tpu.memory_space<vmem>>, vector<1x1x128xf32>
    %280 = vector.shape_cast %279 : vector<1x1x128xf32> to vector<1x128xf32>
    %c4_234 = arith.constant 4 : index
    %c0_235 = arith.constant 0 : index
    %c0_236 = arith.constant 0 : index
    %281 = vector.load %arg2[%c4_234, %c0_235, %c0_236] : memref<16x8x128xf32, #tpu.memory_space<vmem>>, vector<1x8x128xf32>
    %282 = vector.shape_cast %281 : vector<1x8x128xf32> to vector<8x128xf32>
    %283 = vector.broadcast %280 : vector<1x128xf32> to vector<8x128xf32>
    %284 = arith.mulf %283, %282 : vector<8x128xf32>
    %c5_237 = arith.constant 5 : index
    %c1_238 = arith.constant 1 : index
    %c0_239 = arith.constant 0 : index
    %285 = vector.load %arg1[%c5_237, %c1_238, %c0_239] : memref<16x8x128xf32, #tpu.memory_space<vmem>>, vector<1x1x128xf32>
    %286 = vector.shape_cast %285 : vector<1x1x128xf32> to vector<1x128xf32>
    %c5_240 = arith.constant 5 : index
    %c0_241 = arith.constant 0 : index
    %c0_242 = arith.constant 0 : index
    %287 = vector.load %arg2[%c5_240, %c0_241, %c0_242] : memref<16x8x128xf32, #tpu.memory_space<vmem>>, vector<1x8x128xf32>
    %288 = vector.shape_cast %287 : vector<1x8x128xf32> to vector<8x128xf32>
    %289 = vector.broadcast %286 : vector<1x128xf32> to vector<8x128xf32>
    %290 = arith.mulf %289, %288 : vector<8x128xf32>
    %291 = arith.addf %284, %290 : vector<8x128xf32>
    %c6_243 = arith.constant 6 : index
    %c1_244 = arith.constant 1 : index
    %c0_245 = arith.constant 0 : index
    %292 = vector.load %arg1[%c6_243, %c1_244, %c0_245] : memref<16x8x128xf32, #tpu.memory_space<vmem>>, vector<1x1x128xf32>
    %293 = vector.shape_cast %292 : vector<1x1x128xf32> to vector<1x128xf32>
    %c6_246 = arith.constant 6 : index
    %c0_247 = arith.constant 0 : index
    %c0_248 = arith.constant 0 : index
    %294 = vector.load %arg2[%c6_246, %c0_247, %c0_248] : memref<16x8x128xf32, #tpu.memory_space<vmem>>, vector<1x8x128xf32>
    %295 = vector.shape_cast %294 : vector<1x8x128xf32> to vector<8x128xf32>
    %296 = vector.broadcast %293 : vector<1x128xf32> to vector<8x128xf32>
    %297 = arith.mulf %296, %295 : vector<8x128xf32>
    %298 = arith.addf %291, %297 : vector<8x128xf32>
    %c7_249 = arith.constant 7 : index
    %c1_250 = arith.constant 1 : index
    %c0_251 = arith.constant 0 : index
    %299 = vector.load %arg1[%c7_249, %c1_250, %c0_251] : memref<16x8x128xf32, #tpu.memory_space<vmem>>, vector<1x1x128xf32>
    %300 = vector.shape_cast %299 : vector<1x1x128xf32> to vector<1x128xf32>
    %c7_252 = arith.constant 7 : index
    %c0_253 = arith.constant 0 : index
    %c0_254 = arith.constant 0 : index
    %301 = vector.load %arg2[%c7_252, %c0_253, %c0_254] : memref<16x8x128xf32, #tpu.memory_space<vmem>>, vector<1x8x128xf32>
    %302 = vector.shape_cast %301 : vector<1x8x128xf32> to vector<8x128xf32>
    %303 = vector.broadcast %300 : vector<1x128xf32> to vector<8x128xf32>
    %304 = arith.mulf %303, %302 : vector<8x128xf32>
    %305 = arith.addf %298, %304 : vector<8x128xf32>
    %c8_255 = arith.constant 8 : index
    %c1_256 = arith.constant 1 : index
    %c0_257 = arith.constant 0 : index
    %306 = vector.load %arg1[%c8_255, %c1_256, %c0_257] : memref<16x8x128xf32, #tpu.memory_space<vmem>>, vector<1x1x128xf32>
    %307 = vector.shape_cast %306 : vector<1x1x128xf32> to vector<1x128xf32>
    %c8_258 = arith.constant 8 : index
    %c0_259 = arith.constant 0 : index
    %c0_260 = arith.constant 0 : index
    %308 = vector.load %arg2[%c8_258, %c0_259, %c0_260] : memref<16x8x128xf32, #tpu.memory_space<vmem>>, vector<1x8x128xf32>
    %309 = vector.shape_cast %308 : vector<1x8x128xf32> to vector<8x128xf32>
    %310 = vector.broadcast %307 : vector<1x128xf32> to vector<8x128xf32>
    %311 = arith.mulf %310, %309 : vector<8x128xf32>
    %312 = arith.addf %305, %311 : vector<8x128xf32>
    %cst_261 = arith.constant 0.44721359 : f32
    %313 = vector.broadcast %cst_261 : f32 to vector<8x128xf32>
    %314 = arith.mulf %313, %312 : vector<8x128xf32>
    %c4_262 = arith.constant 4 : index
    %c2_263 = arith.constant 2 : index
    %c0_264 = arith.constant 0 : index
    %315 = vector.load %arg1[%c4_262, %c2_263, %c0_264] : memref<16x8x128xf32, #tpu.memory_space<vmem>>, vector<1x1x128xf32>
    %316 = vector.shape_cast %315 : vector<1x1x128xf32> to vector<1x128xf32>
    %c4_265 = arith.constant 4 : index
    %c0_266 = arith.constant 0 : index
    %c0_267 = arith.constant 0 : index
    %317 = vector.load %arg2[%c4_265, %c0_266, %c0_267] : memref<16x8x128xf32, #tpu.memory_space<vmem>>, vector<1x8x128xf32>
    %318 = vector.shape_cast %317 : vector<1x8x128xf32> to vector<8x128xf32>
    %319 = vector.broadcast %316 : vector<1x128xf32> to vector<8x128xf32>
    %320 = arith.mulf %319, %318 : vector<8x128xf32>
    %c5_268 = arith.constant 5 : index
    %c2_269 = arith.constant 2 : index
    %c0_270 = arith.constant 0 : index
    %321 = vector.load %arg1[%c5_268, %c2_269, %c0_270] : memref<16x8x128xf32, #tpu.memory_space<vmem>>, vector<1x1x128xf32>
    %322 = vector.shape_cast %321 : vector<1x1x128xf32> to vector<1x128xf32>
    %c5_271 = arith.constant 5 : index
    %c0_272 = arith.constant 0 : index
    %c0_273 = arith.constant 0 : index
    %323 = vector.load %arg2[%c5_271, %c0_272, %c0_273] : memref<16x8x128xf32, #tpu.memory_space<vmem>>, vector<1x8x128xf32>
    %324 = vector.shape_cast %323 : vector<1x8x128xf32> to vector<8x128xf32>
    %325 = vector.broadcast %322 : vector<1x128xf32> to vector<8x128xf32>
    %326 = arith.mulf %325, %324 : vector<8x128xf32>
    %327 = arith.addf %320, %326 : vector<8x128xf32>
    %c6_274 = arith.constant 6 : index
    %c2_275 = arith.constant 2 : index
    %c0_276 = arith.constant 0 : index
    %328 = vector.load %arg1[%c6_274, %c2_275, %c0_276] : memref<16x8x128xf32, #tpu.memory_space<vmem>>, vector<1x1x128xf32>
    %329 = vector.shape_cast %328 : vector<1x1x128xf32> to vector<1x128xf32>
    %c6_277 = arith.constant 6 : index
    %c0_278 = arith.constant 0 : index
    %c0_279 = arith.constant 0 : index
    %330 = vector.load %arg2[%c6_277, %c0_278, %c0_279] : memref<16x8x128xf32, #tpu.memory_space<vmem>>, vector<1x8x128xf32>
    %331 = vector.shape_cast %330 : vector<1x8x128xf32> to vector<8x128xf32>
    %332 = vector.broadcast %329 : vector<1x128xf32> to vector<8x128xf32>
    %333 = arith.mulf %332, %331 : vector<8x128xf32>
    %334 = arith.addf %327, %333 : vector<8x128xf32>
    %c7_280 = arith.constant 7 : index
    %c2_281 = arith.constant 2 : index
    %c0_282 = arith.constant 0 : index
    %335 = vector.load %arg1[%c7_280, %c2_281, %c0_282] : memref<16x8x128xf32, #tpu.memory_space<vmem>>, vector<1x1x128xf32>
    %336 = vector.shape_cast %335 : vector<1x1x128xf32> to vector<1x128xf32>
    %c7_283 = arith.constant 7 : index
    %c0_284 = arith.constant 0 : index
    %c0_285 = arith.constant 0 : index
    %337 = vector.load %arg2[%c7_283, %c0_284, %c0_285] : memref<16x8x128xf32, #tpu.memory_space<vmem>>, vector<1x8x128xf32>
    %338 = vector.shape_cast %337 : vector<1x8x128xf32> to vector<8x128xf32>
    %339 = vector.broadcast %336 : vector<1x128xf32> to vector<8x128xf32>
    %340 = arith.mulf %339, %338 : vector<8x128xf32>
    %341 = arith.addf %334, %340 : vector<8x128xf32>
    %c8_286 = arith.constant 8 : index
    %c2_287 = arith.constant 2 : index
    %c0_288 = arith.constant 0 : index
    %342 = vector.load %arg1[%c8_286, %c2_287, %c0_288] : memref<16x8x128xf32, #tpu.memory_space<vmem>>, vector<1x1x128xf32>
    %343 = vector.shape_cast %342 : vector<1x1x128xf32> to vector<1x128xf32>
    %c8_289 = arith.constant 8 : index
    %c0_290 = arith.constant 0 : index
    %c0_291 = arith.constant 0 : index
    %344 = vector.load %arg2[%c8_289, %c0_290, %c0_291] : memref<16x8x128xf32, #tpu.memory_space<vmem>>, vector<1x8x128xf32>
    %345 = vector.shape_cast %344 : vector<1x8x128xf32> to vector<8x128xf32>
    %346 = vector.broadcast %343 : vector<1x128xf32> to vector<8x128xf32>
    %347 = arith.mulf %346, %345 : vector<8x128xf32>
    %348 = arith.addf %341, %347 : vector<8x128xf32>
    %cst_292 = arith.constant 0.44721359 : f32
    %349 = vector.broadcast %cst_292 : f32 to vector<8x128xf32>
    %350 = arith.mulf %349, %348 : vector<8x128xf32>
    %c4_293 = arith.constant 4 : index
    %c3_294 = arith.constant 3 : index
    %c0_295 = arith.constant 0 : index
    %351 = vector.load %arg1[%c4_293, %c3_294, %c0_295] : memref<16x8x128xf32, #tpu.memory_space<vmem>>, vector<1x1x128xf32>
    %352 = vector.shape_cast %351 : vector<1x1x128xf32> to vector<1x128xf32>
    %c4_296 = arith.constant 4 : index
    %c0_297 = arith.constant 0 : index
    %c0_298 = arith.constant 0 : index
    %353 = vector.load %arg2[%c4_296, %c0_297, %c0_298] : memref<16x8x128xf32, #tpu.memory_space<vmem>>, vector<1x8x128xf32>
    %354 = vector.shape_cast %353 : vector<1x8x128xf32> to vector<8x128xf32>
    %355 = vector.broadcast %352 : vector<1x128xf32> to vector<8x128xf32>
    %356 = arith.mulf %355, %354 : vector<8x128xf32>
    %c5_299 = arith.constant 5 : index
    %c3_300 = arith.constant 3 : index
    %c0_301 = arith.constant 0 : index
    %357 = vector.load %arg1[%c5_299, %c3_300, %c0_301] : memref<16x8x128xf32, #tpu.memory_space<vmem>>, vector<1x1x128xf32>
    %358 = vector.shape_cast %357 : vector<1x1x128xf32> to vector<1x128xf32>
    %c5_302 = arith.constant 5 : index
    %c0_303 = arith.constant 0 : index
    %c0_304 = arith.constant 0 : index
    %359 = vector.load %arg2[%c5_302, %c0_303, %c0_304] : memref<16x8x128xf32, #tpu.memory_space<vmem>>, vector<1x8x128xf32>
    %360 = vector.shape_cast %359 : vector<1x8x128xf32> to vector<8x128xf32>
    %361 = vector.broadcast %358 : vector<1x128xf32> to vector<8x128xf32>
    %362 = arith.mulf %361, %360 : vector<8x128xf32>
    %363 = arith.addf %356, %362 : vector<8x128xf32>
    %c6_305 = arith.constant 6 : index
    %c3_306 = arith.constant 3 : index
    %c0_307 = arith.constant 0 : index
    %364 = vector.load %arg1[%c6_305, %c3_306, %c0_307] : memref<16x8x128xf32, #tpu.memory_space<vmem>>, vector<1x1x128xf32>
    %365 = vector.shape_cast %364 : vector<1x1x128xf32> to vector<1x128xf32>
    %c6_308 = arith.constant 6 : index
    %c0_309 = arith.constant 0 : index
    %c0_310 = arith.constant 0 : index
    %366 = vector.load %arg2[%c6_308, %c0_309, %c0_310] : memref<16x8x128xf32, #tpu.memory_space<vmem>>, vector<1x8x128xf32>
    %367 = vector.shape_cast %366 : vector<1x8x128xf32> to vector<8x128xf32>
    %368 = vector.broadcast %365 : vector<1x128xf32> to vector<8x128xf32>
    %369 = arith.mulf %368, %367 : vector<8x128xf32>
    %370 = arith.addf %363, %369 : vector<8x128xf32>
    %c7_311 = arith.constant 7 : index
    %c3_312 = arith.constant 3 : index
    %c0_313 = arith.constant 0 : index
    %371 = vector.load %arg1[%c7_311, %c3_312, %c0_313] : memref<16x8x128xf32, #tpu.memory_space<vmem>>, vector<1x1x128xf32>
    %372 = vector.shape_cast %371 : vector<1x1x128xf32> to vector<1x128xf32>
    %c7_314 = arith.constant 7 : index
    %c0_315 = arith.constant 0 : index
    %c0_316 = arith.constant 0 : index
    %373 = vector.load %arg2[%c7_314, %c0_315, %c0_316] : memref<16x8x128xf32, #tpu.memory_space<vmem>>, vector<1x8x128xf32>
    %374 = vector.shape_cast %373 : vector<1x8x128xf32> to vector<8x128xf32>
    %375 = vector.broadcast %372 : vector<1x128xf32> to vector<8x128xf32>
    %376 = arith.mulf %375, %374 : vector<8x128xf32>
    %377 = arith.addf %370, %376 : vector<8x128xf32>
    %c8_317 = arith.constant 8 : index
    %c3_318 = arith.constant 3 : index
    %c0_319 = arith.constant 0 : index
    %378 = vector.load %arg1[%c8_317, %c3_318, %c0_319] : memref<16x8x128xf32, #tpu.memory_space<vmem>>, vector<1x1x128xf32>
    %379 = vector.shape_cast %378 : vector<1x1x128xf32> to vector<1x128xf32>
    %c8_320 = arith.constant 8 : index
    %c0_321 = arith.constant 0 : index
    %c0_322 = arith.constant 0 : index
    %380 = vector.load %arg2[%c8_320, %c0_321, %c0_322] : memref<16x8x128xf32, #tpu.memory_space<vmem>>, vector<1x8x128xf32>
    %381 = vector.shape_cast %380 : vector<1x8x128xf32> to vector<8x128xf32>
    %382 = vector.broadcast %379 : vector<1x128xf32> to vector<8x128xf32>
    %383 = arith.mulf %382, %381 : vector<8x128xf32>
    %384 = arith.addf %377, %383 : vector<8x128xf32>
    %cst_323 = arith.constant 0.44721359 : f32
    %385 = vector.broadcast %cst_323 : f32 to vector<8x128xf32>
    %386 = arith.mulf %385, %384 : vector<8x128xf32>
    %c4_324 = arith.constant 4 : index
    %c4_325 = arith.constant 4 : index
    %c0_326 = arith.constant 0 : index
    %387 = vector.load %arg1[%c4_324, %c4_325, %c0_326] : memref<16x8x128xf32, #tpu.memory_space<vmem>>, vector<1x1x128xf32>
    %388 = vector.shape_cast %387 : vector<1x1x128xf32> to vector<1x128xf32>
    %c4_327 = arith.constant 4 : index
    %c0_328 = arith.constant 0 : index
    %c0_329 = arith.constant 0 : index
    %389 = vector.load %arg2[%c4_327, %c0_328, %c0_329] : memref<16x8x128xf32, #tpu.memory_space<vmem>>, vector<1x8x128xf32>
    %390 = vector.shape_cast %389 : vector<1x8x128xf32> to vector<8x128xf32>
    %391 = vector.broadcast %388 : vector<1x128xf32> to vector<8x128xf32>
    %392 = arith.mulf %391, %390 : vector<8x128xf32>
    %c5_330 = arith.constant 5 : index
    %c4_331 = arith.constant 4 : index
    %c0_332 = arith.constant 0 : index
    %393 = vector.load %arg1[%c5_330, %c4_331, %c0_332] : memref<16x8x128xf32, #tpu.memory_space<vmem>>, vector<1x1x128xf32>
    %394 = vector.shape_cast %393 : vector<1x1x128xf32> to vector<1x128xf32>
    %c5_333 = arith.constant 5 : index
    %c0_334 = arith.constant 0 : index
    %c0_335 = arith.constant 0 : index
    %395 = vector.load %arg2[%c5_333, %c0_334, %c0_335] : memref<16x8x128xf32, #tpu.memory_space<vmem>>, vector<1x8x128xf32>
    %396 = vector.shape_cast %395 : vector<1x8x128xf32> to vector<8x128xf32>
    %397 = vector.broadcast %394 : vector<1x128xf32> to vector<8x128xf32>
    %398 = arith.mulf %397, %396 : vector<8x128xf32>
    %399 = arith.addf %392, %398 : vector<8x128xf32>
    %c6_336 = arith.constant 6 : index
    %c4_337 = arith.constant 4 : index
    %c0_338 = arith.constant 0 : index
    %400 = vector.load %arg1[%c6_336, %c4_337, %c0_338] : memref<16x8x128xf32, #tpu.memory_space<vmem>>, vector<1x1x128xf32>
    %401 = vector.shape_cast %400 : vector<1x1x128xf32> to vector<1x128xf32>
    %c6_339 = arith.constant 6 : index
    %c0_340 = arith.constant 0 : index
    %c0_341 = arith.constant 0 : index
    %402 = vector.load %arg2[%c6_339, %c0_340, %c0_341] : memref<16x8x128xf32, #tpu.memory_space<vmem>>, vector<1x8x128xf32>
    %403 = vector.shape_cast %402 : vector<1x8x128xf32> to vector<8x128xf32>
    %404 = vector.broadcast %401 : vector<1x128xf32> to vector<8x128xf32>
    %405 = arith.mulf %404, %403 : vector<8x128xf32>
    %406 = arith.addf %399, %405 : vector<8x128xf32>
    %c7_342 = arith.constant 7 : index
    %c4_343 = arith.constant 4 : index
    %c0_344 = arith.constant 0 : index
    %407 = vector.load %arg1[%c7_342, %c4_343, %c0_344] : memref<16x8x128xf32, #tpu.memory_space<vmem>>, vector<1x1x128xf32>
    %408 = vector.shape_cast %407 : vector<1x1x128xf32> to vector<1x128xf32>
    %c7_345 = arith.constant 7 : index
    %c0_346 = arith.constant 0 : index
    %c0_347 = arith.constant 0 : index
    %409 = vector.load %arg2[%c7_345, %c0_346, %c0_347] : memref<16x8x128xf32, #tpu.memory_space<vmem>>, vector<1x8x128xf32>
    %410 = vector.shape_cast %409 : vector<1x8x128xf32> to vector<8x128xf32>
    %411 = vector.broadcast %408 : vector<1x128xf32> to vector<8x128xf32>
    %412 = arith.mulf %411, %410 : vector<8x128xf32>
    %413 = arith.addf %406, %412 : vector<8x128xf32>
    %c8_348 = arith.constant 8 : index
    %c4_349 = arith.constant 4 : index
    %c0_350 = arith.constant 0 : index
    %414 = vector.load %arg1[%c8_348, %c4_349, %c0_350] : memref<16x8x128xf32, #tpu.memory_space<vmem>>, vector<1x1x128xf32>
    %415 = vector.shape_cast %414 : vector<1x1x128xf32> to vector<1x128xf32>
    %c8_351 = arith.constant 8 : index
    %c0_352 = arith.constant 0 : index
    %c0_353 = arith.constant 0 : index
    %416 = vector.load %arg2[%c8_351, %c0_352, %c0_353] : memref<16x8x128xf32, #tpu.memory_space<vmem>>, vector<1x8x128xf32>
    %417 = vector.shape_cast %416 : vector<1x8x128xf32> to vector<8x128xf32>
    %418 = vector.broadcast %415 : vector<1x128xf32> to vector<8x128xf32>
    %419 = arith.mulf %418, %417 : vector<8x128xf32>
    %420 = arith.addf %413, %419 : vector<8x128xf32>
    %cst_354 = arith.constant 0.44721359 : f32
    %421 = vector.broadcast %cst_354 : f32 to vector<8x128xf32>
    %422 = arith.mulf %421, %420 : vector<8x128xf32>
    %c4_355 = arith.constant 4 : index
    %c5_356 = arith.constant 5 : index
    %c0_357 = arith.constant 0 : index
    %423 = vector.load %arg1[%c4_355, %c5_356, %c0_357] : memref<16x8x128xf32, #tpu.memory_space<vmem>>, vector<1x1x128xf32>
    %424 = vector.shape_cast %423 : vector<1x1x128xf32> to vector<1x128xf32>
    %c4_358 = arith.constant 4 : index
    %c0_359 = arith.constant 0 : index
    %c0_360 = arith.constant 0 : index
    %425 = vector.load %arg2[%c4_358, %c0_359, %c0_360] : memref<16x8x128xf32, #tpu.memory_space<vmem>>, vector<1x8x128xf32>
    %426 = vector.shape_cast %425 : vector<1x8x128xf32> to vector<8x128xf32>
    %427 = vector.broadcast %424 : vector<1x128xf32> to vector<8x128xf32>
    %428 = arith.mulf %427, %426 : vector<8x128xf32>
    %c5_361 = arith.constant 5 : index
    %c5_362 = arith.constant 5 : index
    %c0_363 = arith.constant 0 : index
    %429 = vector.load %arg1[%c5_361, %c5_362, %c0_363] : memref<16x8x128xf32, #tpu.memory_space<vmem>>, vector<1x1x128xf32>
    %430 = vector.shape_cast %429 : vector<1x1x128xf32> to vector<1x128xf32>
    %c5_364 = arith.constant 5 : index
    %c0_365 = arith.constant 0 : index
    %c0_366 = arith.constant 0 : index
    %431 = vector.load %arg2[%c5_364, %c0_365, %c0_366] : memref<16x8x128xf32, #tpu.memory_space<vmem>>, vector<1x8x128xf32>
    %432 = vector.shape_cast %431 : vector<1x8x128xf32> to vector<8x128xf32>
    %433 = vector.broadcast %430 : vector<1x128xf32> to vector<8x128xf32>
    %434 = arith.mulf %433, %432 : vector<8x128xf32>
    %435 = arith.addf %428, %434 : vector<8x128xf32>
    %c6_367 = arith.constant 6 : index
    %c5_368 = arith.constant 5 : index
    %c0_369 = arith.constant 0 : index
    %436 = vector.load %arg1[%c6_367, %c5_368, %c0_369] : memref<16x8x128xf32, #tpu.memory_space<vmem>>, vector<1x1x128xf32>
    %437 = vector.shape_cast %436 : vector<1x1x128xf32> to vector<1x128xf32>
    %c6_370 = arith.constant 6 : index
    %c0_371 = arith.constant 0 : index
    %c0_372 = arith.constant 0 : index
    %438 = vector.load %arg2[%c6_370, %c0_371, %c0_372] : memref<16x8x128xf32, #tpu.memory_space<vmem>>, vector<1x8x128xf32>
    %439 = vector.shape_cast %438 : vector<1x8x128xf32> to vector<8x128xf32>
    %440 = vector.broadcast %437 : vector<1x128xf32> to vector<8x128xf32>
    %441 = arith.mulf %440, %439 : vector<8x128xf32>
    %442 = arith.addf %435, %441 : vector<8x128xf32>
    %c7_373 = arith.constant 7 : index
    %c5_374 = arith.constant 5 : index
    %c0_375 = arith.constant 0 : index
    %443 = vector.load %arg1[%c7_373, %c5_374, %c0_375] : memref<16x8x128xf32, #tpu.memory_space<vmem>>, vector<1x1x128xf32>
    %444 = vector.shape_cast %443 : vector<1x1x128xf32> to vector<1x128xf32>
    %c7_376 = arith.constant 7 : index
    %c0_377 = arith.constant 0 : index
    %c0_378 = arith.constant 0 : index
    %445 = vector.load %arg2[%c7_376, %c0_377, %c0_378] : memref<16x8x128xf32, #tpu.memory_space<vmem>>, vector<1x8x128xf32>
    %446 = vector.shape_cast %445 : vector<1x8x128xf32> to vector<8x128xf32>
    %447 = vector.broadcast %444 : vector<1x128xf32> to vector<8x128xf32>
    %448 = arith.mulf %447, %446 : vector<8x128xf32>
    %449 = arith.addf %442, %448 : vector<8x128xf32>
    %c8_379 = arith.constant 8 : index
    %c5_380 = arith.constant 5 : index
    %c0_381 = arith.constant 0 : index
    %450 = vector.load %arg1[%c8_379, %c5_380, %c0_381] : memref<16x8x128xf32, #tpu.memory_space<vmem>>, vector<1x1x128xf32>
    %451 = vector.shape_cast %450 : vector<1x1x128xf32> to vector<1x128xf32>
    %c8_382 = arith.constant 8 : index
    %c0_383 = arith.constant 0 : index
    %c0_384 = arith.constant 0 : index
    %452 = vector.load %arg2[%c8_382, %c0_383, %c0_384] : memref<16x8x128xf32, #tpu.memory_space<vmem>>, vector<1x8x128xf32>
    %453 = vector.shape_cast %452 : vector<1x8x128xf32> to vector<8x128xf32>
    %454 = vector.broadcast %451 : vector<1x128xf32> to vector<8x128xf32>
    %455 = arith.mulf %454, %453 : vector<8x128xf32>
    %456 = arith.addf %449, %455 : vector<8x128xf32>
    %cst_385 = arith.constant 0.44721359 : f32
    %457 = vector.broadcast %cst_385 : f32 to vector<8x128xf32>
    %458 = arith.mulf %457, %456 : vector<8x128xf32>
    %c4_386 = arith.constant 4 : index
    %c6_387 = arith.constant 6 : index
    %c0_388 = arith.constant 0 : index
    %459 = vector.load %arg1[%c4_386, %c6_387, %c0_388] : memref<16x8x128xf32, #tpu.memory_space<vmem>>, vector<1x1x128xf32>
    %460 = vector.shape_cast %459 : vector<1x1x128xf32> to vector<1x128xf32>
    %c4_389 = arith.constant 4 : index
    %c0_390 = arith.constant 0 : index
    %c0_391 = arith.constant 0 : index
    %461 = vector.load %arg2[%c4_389, %c0_390, %c0_391] : memref<16x8x128xf32, #tpu.memory_space<vmem>>, vector<1x8x128xf32>
    %462 = vector.shape_cast %461 : vector<1x8x128xf32> to vector<8x128xf32>
    %463 = vector.broadcast %460 : vector<1x128xf32> to vector<8x128xf32>
    %464 = arith.mulf %463, %462 : vector<8x128xf32>
    %c5_392 = arith.constant 5 : index
    %c6_393 = arith.constant 6 : index
    %c0_394 = arith.constant 0 : index
    %465 = vector.load %arg1[%c5_392, %c6_393, %c0_394] : memref<16x8x128xf32, #tpu.memory_space<vmem>>, vector<1x1x128xf32>
    %466 = vector.shape_cast %465 : vector<1x1x128xf32> to vector<1x128xf32>
    %c5_395 = arith.constant 5 : index
    %c0_396 = arith.constant 0 : index
    %c0_397 = arith.constant 0 : index
    %467 = vector.load %arg2[%c5_395, %c0_396, %c0_397] : memref<16x8x128xf32, #tpu.memory_space<vmem>>, vector<1x8x128xf32>
    %468 = vector.shape_cast %467 : vector<1x8x128xf32> to vector<8x128xf32>
    %469 = vector.broadcast %466 : vector<1x128xf32> to vector<8x128xf32>
    %470 = arith.mulf %469, %468 : vector<8x128xf32>
    %471 = arith.addf %464, %470 : vector<8x128xf32>
    %c6_398 = arith.constant 6 : index
    %c6_399 = arith.constant 6 : index
    %c0_400 = arith.constant 0 : index
    %472 = vector.load %arg1[%c6_398, %c6_399, %c0_400] : memref<16x8x128xf32, #tpu.memory_space<vmem>>, vector<1x1x128xf32>
    %473 = vector.shape_cast %472 : vector<1x1x128xf32> to vector<1x128xf32>
    %c6_401 = arith.constant 6 : index
    %c0_402 = arith.constant 0 : index
    %c0_403 = arith.constant 0 : index
    %474 = vector.load %arg2[%c6_401, %c0_402, %c0_403] : memref<16x8x128xf32, #tpu.memory_space<vmem>>, vector<1x8x128xf32>
    %475 = vector.shape_cast %474 : vector<1x8x128xf32> to vector<8x128xf32>
    %476 = vector.broadcast %473 : vector<1x128xf32> to vector<8x128xf32>
    %477 = arith.mulf %476, %475 : vector<8x128xf32>
    %478 = arith.addf %471, %477 : vector<8x128xf32>
    %c7_404 = arith.constant 7 : index
    %c6_405 = arith.constant 6 : index
    %c0_406 = arith.constant 0 : index
    %479 = vector.load %arg1[%c7_404, %c6_405, %c0_406] : memref<16x8x128xf32, #tpu.memory_space<vmem>>, vector<1x1x128xf32>
    %480 = vector.shape_cast %479 : vector<1x1x128xf32> to vector<1x128xf32>
    %c7_407 = arith.constant 7 : index
    %c0_408 = arith.constant 0 : index
    %c0_409 = arith.constant 0 : index
    %481 = vector.load %arg2[%c7_407, %c0_408, %c0_409] : memref<16x8x128xf32, #tpu.memory_space<vmem>>, vector<1x8x128xf32>
    %482 = vector.shape_cast %481 : vector<1x8x128xf32> to vector<8x128xf32>
    %483 = vector.broadcast %480 : vector<1x128xf32> to vector<8x128xf32>
    %484 = arith.mulf %483, %482 : vector<8x128xf32>
    %485 = arith.addf %478, %484 : vector<8x128xf32>
    %c8_410 = arith.constant 8 : index
    %c6_411 = arith.constant 6 : index
    %c0_412 = arith.constant 0 : index
    %486 = vector.load %arg1[%c8_410, %c6_411, %c0_412] : memref<16x8x128xf32, #tpu.memory_space<vmem>>, vector<1x1x128xf32>
    %487 = vector.shape_cast %486 : vector<1x1x128xf32> to vector<1x128xf32>
    %c8_413 = arith.constant 8 : index
    %c0_414 = arith.constant 0 : index
    %c0_415 = arith.constant 0 : index
    %488 = vector.load %arg2[%c8_413, %c0_414, %c0_415] : memref<16x8x128xf32, #tpu.memory_space<vmem>>, vector<1x8x128xf32>
    %489 = vector.shape_cast %488 : vector<1x8x128xf32> to vector<8x128xf32>
    %490 = vector.broadcast %487 : vector<1x128xf32> to vector<8x128xf32>
    %491 = arith.mulf %490, %489 : vector<8x128xf32>
    %492 = arith.addf %485, %491 : vector<8x128xf32>
    %cst_416 = arith.constant 0.44721359 : f32
    %493 = vector.broadcast %cst_416 : f32 to vector<8x128xf32>
    %494 = arith.mulf %493, %492 : vector<8x128xf32>
    %c4_417 = arith.constant 4 : index
    %c7_418 = arith.constant 7 : index
    %c0_419 = arith.constant 0 : index
    %495 = vector.load %arg1[%c4_417, %c7_418, %c0_419] : memref<16x8x128xf32, #tpu.memory_space<vmem>>, vector<1x1x128xf32>
    %496 = vector.shape_cast %495 : vector<1x1x128xf32> to vector<1x128xf32>
    %c4_420 = arith.constant 4 : index
    %c0_421 = arith.constant 0 : index
    %c0_422 = arith.constant 0 : index
    %497 = vector.load %arg2[%c4_420, %c0_421, %c0_422] : memref<16x8x128xf32, #tpu.memory_space<vmem>>, vector<1x8x128xf32>
    %498 = vector.shape_cast %497 : vector<1x8x128xf32> to vector<8x128xf32>
    %499 = vector.broadcast %496 : vector<1x128xf32> to vector<8x128xf32>
    %500 = arith.mulf %499, %498 : vector<8x128xf32>
    %c5_423 = arith.constant 5 : index
    %c7_424 = arith.constant 7 : index
    %c0_425 = arith.constant 0 : index
    %501 = vector.load %arg1[%c5_423, %c7_424, %c0_425] : memref<16x8x128xf32, #tpu.memory_space<vmem>>, vector<1x1x128xf32>
    %502 = vector.shape_cast %501 : vector<1x1x128xf32> to vector<1x128xf32>
    %c5_426 = arith.constant 5 : index
    %c0_427 = arith.constant 0 : index
    %c0_428 = arith.constant 0 : index
    %503 = vector.load %arg2[%c5_426, %c0_427, %c0_428] : memref<16x8x128xf32, #tpu.memory_space<vmem>>, vector<1x8x128xf32>
    %504 = vector.shape_cast %503 : vector<1x8x128xf32> to vector<8x128xf32>
    %505 = vector.broadcast %502 : vector<1x128xf32> to vector<8x128xf32>
    %506 = arith.mulf %505, %504 : vector<8x128xf32>
    %507 = arith.addf %500, %506 : vector<8x128xf32>
    %c6_429 = arith.constant 6 : index
    %c7_430 = arith.constant 7 : index
    %c0_431 = arith.constant 0 : index
    %508 = vector.load %arg1[%c6_429, %c7_430, %c0_431] : memref<16x8x128xf32, #tpu.memory_space<vmem>>, vector<1x1x128xf32>
    %509 = vector.shape_cast %508 : vector<1x1x128xf32> to vector<1x128xf32>
    %c6_432 = arith.constant 6 : index
    %c0_433 = arith.constant 0 : index
    %c0_434 = arith.constant 0 : index
    %510 = vector.load %arg2[%c6_432, %c0_433, %c0_434] : memref<16x8x128xf32, #tpu.memory_space<vmem>>, vector<1x8x128xf32>
    %511 = vector.shape_cast %510 : vector<1x8x128xf32> to vector<8x128xf32>
    %512 = vector.broadcast %509 : vector<1x128xf32> to vector<8x128xf32>
    %513 = arith.mulf %512, %511 : vector<8x128xf32>
    %514 = arith.addf %507, %513 : vector<8x128xf32>
    %c7_435 = arith.constant 7 : index
    %c7_436 = arith.constant 7 : index
    %c0_437 = arith.constant 0 : index
    %515 = vector.load %arg1[%c7_435, %c7_436, %c0_437] : memref<16x8x128xf32, #tpu.memory_space<vmem>>, vector<1x1x128xf32>
    %516 = vector.shape_cast %515 : vector<1x1x128xf32> to vector<1x128xf32>
    %c7_438 = arith.constant 7 : index
    %c0_439 = arith.constant 0 : index
    %c0_440 = arith.constant 0 : index
    %517 = vector.load %arg2[%c7_438, %c0_439, %c0_440] : memref<16x8x128xf32, #tpu.memory_space<vmem>>, vector<1x8x128xf32>
    %518 = vector.shape_cast %517 : vector<1x8x128xf32> to vector<8x128xf32>
    %519 = vector.broadcast %516 : vector<1x128xf32> to vector<8x128xf32>
    %520 = arith.mulf %519, %518 : vector<8x128xf32>
    %521 = arith.addf %514, %520 : vector<8x128xf32>
    %c8_441 = arith.constant 8 : index
    %c7_442 = arith.constant 7 : index
    %c0_443 = arith.constant 0 : index
    %522 = vector.load %arg1[%c8_441, %c7_442, %c0_443] : memref<16x8x128xf32, #tpu.memory_space<vmem>>, vector<1x1x128xf32>
    %523 = vector.shape_cast %522 : vector<1x1x128xf32> to vector<1x128xf32>
    %c8_444 = arith.constant 8 : index
    %c0_445 = arith.constant 0 : index
    %c0_446 = arith.constant 0 : index
    %524 = vector.load %arg2[%c8_444, %c0_445, %c0_446] : memref<16x8x128xf32, #tpu.memory_space<vmem>>, vector<1x8x128xf32>
    %525 = vector.shape_cast %524 : vector<1x8x128xf32> to vector<8x128xf32>
    %526 = vector.broadcast %523 : vector<1x128xf32> to vector<8x128xf32>
    %527 = arith.mulf %526, %525 : vector<8x128xf32>
    %528 = arith.addf %521, %527 : vector<8x128xf32>
    %cst_447 = arith.constant 0.44721359 : f32
    %529 = vector.broadcast %cst_447 : f32 to vector<8x128xf32>
    %530 = arith.mulf %529, %528 : vector<8x128xf32>
    %c9 = arith.constant 9 : index
    %c0_448 = arith.constant 0 : index
    %c0_449 = arith.constant 0 : index
    %531 = vector.load %arg1[%c9, %c0_448, %c0_449] : memref<16x8x128xf32, #tpu.memory_space<vmem>>, vector<1x1x128xf32>
    %532 = vector.shape_cast %531 : vector<1x1x128xf32> to vector<1x128xf32>
    %c9_450 = arith.constant 9 : index
    %c0_451 = arith.constant 0 : index
    %c0_452 = arith.constant 0 : index
    %533 = vector.load %arg2[%c9_450, %c0_451, %c0_452] : memref<16x8x128xf32, #tpu.memory_space<vmem>>, vector<1x8x128xf32>
    %534 = vector.shape_cast %533 : vector<1x8x128xf32> to vector<8x128xf32>
    %535 = vector.broadcast %532 : vector<1x128xf32> to vector<8x128xf32>
    %536 = arith.mulf %535, %534 : vector<8x128xf32>
    %c10 = arith.constant 10 : index
    %c0_453 = arith.constant 0 : index
    %c0_454 = arith.constant 0 : index
    %537 = vector.load %arg1[%c10, %c0_453, %c0_454] : memref<16x8x128xf32, #tpu.memory_space<vmem>>, vector<1x1x128xf32>
    %538 = vector.shape_cast %537 : vector<1x1x128xf32> to vector<1x128xf32>
    %c10_455 = arith.constant 10 : index
    %c0_456 = arith.constant 0 : index
    %c0_457 = arith.constant 0 : index
    %539 = vector.load %arg2[%c10_455, %c0_456, %c0_457] : memref<16x8x128xf32, #tpu.memory_space<vmem>>, vector<1x8x128xf32>
    %540 = vector.shape_cast %539 : vector<1x8x128xf32> to vector<8x128xf32>
    %541 = vector.broadcast %538 : vector<1x128xf32> to vector<8x128xf32>
    %542 = arith.mulf %541, %540 : vector<8x128xf32>
    %543 = arith.addf %536, %542 : vector<8x128xf32>
    %c11 = arith.constant 11 : index
    %c0_458 = arith.constant 0 : index
    %c0_459 = arith.constant 0 : index
    %544 = vector.load %arg1[%c11, %c0_458, %c0_459] : memref<16x8x128xf32, #tpu.memory_space<vmem>>, vector<1x1x128xf32>
    %545 = vector.shape_cast %544 : vector<1x1x128xf32> to vector<1x128xf32>
    %c11_460 = arith.constant 11 : index
    %c0_461 = arith.constant 0 : index
    %c0_462 = arith.constant 0 : index
    %546 = vector.load %arg2[%c11_460, %c0_461, %c0_462] : memref<16x8x128xf32, #tpu.memory_space<vmem>>, vector<1x8x128xf32>
    %547 = vector.shape_cast %546 : vector<1x8x128xf32> to vector<8x128xf32>
    %548 = vector.broadcast %545 : vector<1x128xf32> to vector<8x128xf32>
    %549 = arith.mulf %548, %547 : vector<8x128xf32>
    %550 = arith.addf %543, %549 : vector<8x128xf32>
    %c12 = arith.constant 12 : index
    %c0_463 = arith.constant 0 : index
    %c0_464 = arith.constant 0 : index
    %551 = vector.load %arg1[%c12, %c0_463, %c0_464] : memref<16x8x128xf32, #tpu.memory_space<vmem>>, vector<1x1x128xf32>
    %552 = vector.shape_cast %551 : vector<1x1x128xf32> to vector<1x128xf32>
    %c12_465 = arith.constant 12 : index
    %c0_466 = arith.constant 0 : index
    %c0_467 = arith.constant 0 : index
    %553 = vector.load %arg2[%c12_465, %c0_466, %c0_467] : memref<16x8x128xf32, #tpu.memory_space<vmem>>, vector<1x8x128xf32>
    %554 = vector.shape_cast %553 : vector<1x8x128xf32> to vector<8x128xf32>
    %555 = vector.broadcast %552 : vector<1x128xf32> to vector<8x128xf32>
    %556 = arith.mulf %555, %554 : vector<8x128xf32>
    %557 = arith.addf %550, %556 : vector<8x128xf32>
    %c13 = arith.constant 13 : index
    %c0_468 = arith.constant 0 : index
    %c0_469 = arith.constant 0 : index
    %558 = vector.load %arg1[%c13, %c0_468, %c0_469] : memref<16x8x128xf32, #tpu.memory_space<vmem>>, vector<1x1x128xf32>
    %559 = vector.shape_cast %558 : vector<1x1x128xf32> to vector<1x128xf32>
    %c13_470 = arith.constant 13 : index
    %c0_471 = arith.constant 0 : index
    %c0_472 = arith.constant 0 : index
    %560 = vector.load %arg2[%c13_470, %c0_471, %c0_472] : memref<16x8x128xf32, #tpu.memory_space<vmem>>, vector<1x8x128xf32>
    %561 = vector.shape_cast %560 : vector<1x8x128xf32> to vector<8x128xf32>
    %562 = vector.broadcast %559 : vector<1x128xf32> to vector<8x128xf32>
    %563 = arith.mulf %562, %561 : vector<8x128xf32>
    %564 = arith.addf %557, %563 : vector<8x128xf32>
    %c14 = arith.constant 14 : index
    %c0_473 = arith.constant 0 : index
    %c0_474 = arith.constant 0 : index
    %565 = vector.load %arg1[%c14, %c0_473, %c0_474] : memref<16x8x128xf32, #tpu.memory_space<vmem>>, vector<1x1x128xf32>
    %566 = vector.shape_cast %565 : vector<1x1x128xf32> to vector<1x128xf32>
    %c14_475 = arith.constant 14 : index
    %c0_476 = arith.constant 0 : index
    %c0_477 = arith.constant 0 : index
    %567 = vector.load %arg2[%c14_475, %c0_476, %c0_477] : memref<16x8x128xf32, #tpu.memory_space<vmem>>, vector<1x8x128xf32>
    %568 = vector.shape_cast %567 : vector<1x8x128xf32> to vector<8x128xf32>
    %569 = vector.broadcast %566 : vector<1x128xf32> to vector<8x128xf32>
    %570 = arith.mulf %569, %568 : vector<8x128xf32>
    %571 = arith.addf %564, %570 : vector<8x128xf32>
    %c15 = arith.constant 15 : index
    %c0_478 = arith.constant 0 : index
    %c0_479 = arith.constant 0 : index
    %572 = vector.load %arg1[%c15, %c0_478, %c0_479] : memref<16x8x128xf32, #tpu.memory_space<vmem>>, vector<1x1x128xf32>
    %573 = vector.shape_cast %572 : vector<1x1x128xf32> to vector<1x128xf32>
    %c15_480 = arith.constant 15 : index
    %c0_481 = arith.constant 0 : index
    %c0_482 = arith.constant 0 : index
    %574 = vector.load %arg2[%c15_480, %c0_481, %c0_482] : memref<16x8x128xf32, #tpu.memory_space<vmem>>, vector<1x8x128xf32>
    %575 = vector.shape_cast %574 : vector<1x8x128xf32> to vector<8x128xf32>
    %576 = vector.broadcast %573 : vector<1x128xf32> to vector<8x128xf32>
    %577 = arith.mulf %576, %575 : vector<8x128xf32>
    %578 = arith.addf %571, %577 : vector<8x128xf32>
    %cst_483 = arith.constant 0.377964467 : f32
    %579 = vector.broadcast %cst_483 : f32 to vector<8x128xf32>
    %580 = arith.mulf %579, %578 : vector<8x128xf32>
    %c9_484 = arith.constant 9 : index
    %c1_485 = arith.constant 1 : index
    %c0_486 = arith.constant 0 : index
    %581 = vector.load %arg1[%c9_484, %c1_485, %c0_486] : memref<16x8x128xf32, #tpu.memory_space<vmem>>, vector<1x1x128xf32>
    %582 = vector.shape_cast %581 : vector<1x1x128xf32> to vector<1x128xf32>
    %c9_487 = arith.constant 9 : index
    %c0_488 = arith.constant 0 : index
    %c0_489 = arith.constant 0 : index
    %583 = vector.load %arg2[%c9_487, %c0_488, %c0_489] : memref<16x8x128xf32, #tpu.memory_space<vmem>>, vector<1x8x128xf32>
    %584 = vector.shape_cast %583 : vector<1x8x128xf32> to vector<8x128xf32>
    %585 = vector.broadcast %582 : vector<1x128xf32> to vector<8x128xf32>
    %586 = arith.mulf %585, %584 : vector<8x128xf32>
    %c10_490 = arith.constant 10 : index
    %c1_491 = arith.constant 1 : index
    %c0_492 = arith.constant 0 : index
    %587 = vector.load %arg1[%c10_490, %c1_491, %c0_492] : memref<16x8x128xf32, #tpu.memory_space<vmem>>, vector<1x1x128xf32>
    %588 = vector.shape_cast %587 : vector<1x1x128xf32> to vector<1x128xf32>
    %c10_493 = arith.constant 10 : index
    %c0_494 = arith.constant 0 : index
    %c0_495 = arith.constant 0 : index
    %589 = vector.load %arg2[%c10_493, %c0_494, %c0_495] : memref<16x8x128xf32, #tpu.memory_space<vmem>>, vector<1x8x128xf32>
    %590 = vector.shape_cast %589 : vector<1x8x128xf32> to vector<8x128xf32>
    %591 = vector.broadcast %588 : vector<1x128xf32> to vector<8x128xf32>
    %592 = arith.mulf %591, %590 : vector<8x128xf32>
    %593 = arith.addf %586, %592 : vector<8x128xf32>
    %c11_496 = arith.constant 11 : index
    %c1_497 = arith.constant 1 : index
    %c0_498 = arith.constant 0 : index
    %594 = vector.load %arg1[%c11_496, %c1_497, %c0_498] : memref<16x8x128xf32, #tpu.memory_space<vmem>>, vector<1x1x128xf32>
    %595 = vector.shape_cast %594 : vector<1x1x128xf32> to vector<1x128xf32>
    %c11_499 = arith.constant 11 : index
    %c0_500 = arith.constant 0 : index
    %c0_501 = arith.constant 0 : index
    %596 = vector.load %arg2[%c11_499, %c0_500, %c0_501] : memref<16x8x128xf32, #tpu.memory_space<vmem>>, vector<1x8x128xf32>
    %597 = vector.shape_cast %596 : vector<1x8x128xf32> to vector<8x128xf32>
    %598 = vector.broadcast %595 : vector<1x128xf32> to vector<8x128xf32>
    %599 = arith.mulf %598, %597 : vector<8x128xf32>
    %600 = arith.addf %593, %599 : vector<8x128xf32>
    %c12_502 = arith.constant 12 : index
    %c1_503 = arith.constant 1 : index
    %c0_504 = arith.constant 0 : index
    %601 = vector.load %arg1[%c12_502, %c1_503, %c0_504] : memref<16x8x128xf32, #tpu.memory_space<vmem>>, vector<1x1x128xf32>
    %602 = vector.shape_cast %601 : vector<1x1x128xf32> to vector<1x128xf32>
    %c12_505 = arith.constant 12 : index
    %c0_506 = arith.constant 0 : index
    %c0_507 = arith.constant 0 : index
    %603 = vector.load %arg2[%c12_505, %c0_506, %c0_507] : memref<16x8x128xf32, #tpu.memory_space<vmem>>, vector<1x8x128xf32>
    %604 = vector.shape_cast %603 : vector<1x8x128xf32> to vector<8x128xf32>
    %605 = vector.broadcast %602 : vector<1x128xf32> to vector<8x128xf32>
    %606 = arith.mulf %605, %604 : vector<8x128xf32>
    %607 = arith.addf %600, %606 : vector<8x128xf32>
    %c13_508 = arith.constant 13 : index
    %c1_509 = arith.constant 1 : index
    %c0_510 = arith.constant 0 : index
    %608 = vector.load %arg1[%c13_508, %c1_509, %c0_510] : memref<16x8x128xf32, #tpu.memory_space<vmem>>, vector<1x1x128xf32>
    %609 = vector.shape_cast %608 : vector<1x1x128xf32> to vector<1x128xf32>
    %c13_511 = arith.constant 13 : index
    %c0_512 = arith.constant 0 : index
    %c0_513 = arith.constant 0 : index
    %610 = vector.load %arg2[%c13_511, %c0_512, %c0_513] : memref<16x8x128xf32, #tpu.memory_space<vmem>>, vector<1x8x128xf32>
    %611 = vector.shape_cast %610 : vector<1x8x128xf32> to vector<8x128xf32>
    %612 = vector.broadcast %609 : vector<1x128xf32> to vector<8x128xf32>
    %613 = arith.mulf %612, %611 : vector<8x128xf32>
    %614 = arith.addf %607, %613 : vector<8x128xf32>
    %c14_514 = arith.constant 14 : index
    %c1_515 = arith.constant 1 : index
    %c0_516 = arith.constant 0 : index
    %615 = vector.load %arg1[%c14_514, %c1_515, %c0_516] : memref<16x8x128xf32, #tpu.memory_space<vmem>>, vector<1x1x128xf32>
    %616 = vector.shape_cast %615 : vector<1x1x128xf32> to vector<1x128xf32>
    %c14_517 = arith.constant 14 : index
    %c0_518 = arith.constant 0 : index
    %c0_519 = arith.constant 0 : index
    %617 = vector.load %arg2[%c14_517, %c0_518, %c0_519] : memref<16x8x128xf32, #tpu.memory_space<vmem>>, vector<1x8x128xf32>
    %618 = vector.shape_cast %617 : vector<1x8x128xf32> to vector<8x128xf32>
    %619 = vector.broadcast %616 : vector<1x128xf32> to vector<8x128xf32>
    %620 = arith.mulf %619, %618 : vector<8x128xf32>
    %621 = arith.addf %614, %620 : vector<8x128xf32>
    %c15_520 = arith.constant 15 : index
    %c1_521 = arith.constant 1 : index
    %c0_522 = arith.constant 0 : index
    %622 = vector.load %arg1[%c15_520, %c1_521, %c0_522] : memref<16x8x128xf32, #tpu.memory_space<vmem>>, vector<1x1x128xf32>
    %623 = vector.shape_cast %622 : vector<1x1x128xf32> to vector<1x128xf32>
    %c15_523 = arith.constant 15 : index
    %c0_524 = arith.constant 0 : index
    %c0_525 = arith.constant 0 : index
    %624 = vector.load %arg2[%c15_523, %c0_524, %c0_525] : memref<16x8x128xf32, #tpu.memory_space<vmem>>, vector<1x8x128xf32>
    %625 = vector.shape_cast %624 : vector<1x8x128xf32> to vector<8x128xf32>
    %626 = vector.broadcast %623 : vector<1x128xf32> to vector<8x128xf32>
    %627 = arith.mulf %626, %625 : vector<8x128xf32>
    %628 = arith.addf %621, %627 : vector<8x128xf32>
    %cst_526 = arith.constant 0.377964467 : f32
    %629 = vector.broadcast %cst_526 : f32 to vector<8x128xf32>
    %630 = arith.mulf %629, %628 : vector<8x128xf32>
    %c9_527 = arith.constant 9 : index
    %c2_528 = arith.constant 2 : index
    %c0_529 = arith.constant 0 : index
    %631 = vector.load %arg1[%c9_527, %c2_528, %c0_529] : memref<16x8x128xf32, #tpu.memory_space<vmem>>, vector<1x1x128xf32>
    %632 = vector.shape_cast %631 : vector<1x1x128xf32> to vector<1x128xf32>
    %c9_530 = arith.constant 9 : index
    %c0_531 = arith.constant 0 : index
    %c0_532 = arith.constant 0 : index
    %633 = vector.load %arg2[%c9_530, %c0_531, %c0_532] : memref<16x8x128xf32, #tpu.memory_space<vmem>>, vector<1x8x128xf32>
    %634 = vector.shape_cast %633 : vector<1x8x128xf32> to vector<8x128xf32>
    %635 = vector.broadcast %632 : vector<1x128xf32> to vector<8x128xf32>
    %636 = arith.mulf %635, %634 : vector<8x128xf32>
    %c10_533 = arith.constant 10 : index
    %c2_534 = arith.constant 2 : index
    %c0_535 = arith.constant 0 : index
    %637 = vector.load %arg1[%c10_533, %c2_534, %c0_535] : memref<16x8x128xf32, #tpu.memory_space<vmem>>, vector<1x1x128xf32>
    %638 = vector.shape_cast %637 : vector<1x1x128xf32> to vector<1x128xf32>
    %c10_536 = arith.constant 10 : index
    %c0_537 = arith.constant 0 : index
    %c0_538 = arith.constant 0 : index
    %639 = vector.load %arg2[%c10_536, %c0_537, %c0_538] : memref<16x8x128xf32, #tpu.memory_space<vmem>>, vector<1x8x128xf32>
    %640 = vector.shape_cast %639 : vector<1x8x128xf32> to vector<8x128xf32>
    %641 = vector.broadcast %638 : vector<1x128xf32> to vector<8x128xf32>
    %642 = arith.mulf %641, %640 : vector<8x128xf32>
    %643 = arith.addf %636, %642 : vector<8x128xf32>
    %c11_539 = arith.constant 11 : index
    %c2_540 = arith.constant 2 : index
    %c0_541 = arith.constant 0 : index
    %644 = vector.load %arg1[%c11_539, %c2_540, %c0_541] : memref<16x8x128xf32, #tpu.memory_space<vmem>>, vector<1x1x128xf32>
    %645 = vector.shape_cast %644 : vector<1x1x128xf32> to vector<1x128xf32>
    %c11_542 = arith.constant 11 : index
    %c0_543 = arith.constant 0 : index
    %c0_544 = arith.constant 0 : index
    %646 = vector.load %arg2[%c11_542, %c0_543, %c0_544] : memref<16x8x128xf32, #tpu.memory_space<vmem>>, vector<1x8x128xf32>
    %647 = vector.shape_cast %646 : vector<1x8x128xf32> to vector<8x128xf32>
    %648 = vector.broadcast %645 : vector<1x128xf32> to vector<8x128xf32>
    %649 = arith.mulf %648, %647 : vector<8x128xf32>
    %650 = arith.addf %643, %649 : vector<8x128xf32>
    %c12_545 = arith.constant 12 : index
    %c2_546 = arith.constant 2 : index
    %c0_547 = arith.constant 0 : index
    %651 = vector.load %arg1[%c12_545, %c2_546, %c0_547] : memref<16x8x128xf32, #tpu.memory_space<vmem>>, vector<1x1x128xf32>
    %652 = vector.shape_cast %651 : vector<1x1x128xf32> to vector<1x128xf32>
    %c12_548 = arith.constant 12 : index
    %c0_549 = arith.constant 0 : index
    %c0_550 = arith.constant 0 : index
    %653 = vector.load %arg2[%c12_548, %c0_549, %c0_550] : memref<16x8x128xf32, #tpu.memory_space<vmem>>, vector<1x8x128xf32>
    %654 = vector.shape_cast %653 : vector<1x8x128xf32> to vector<8x128xf32>
    %655 = vector.broadcast %652 : vector<1x128xf32> to vector<8x128xf32>
    %656 = arith.mulf %655, %654 : vector<8x128xf32>
    %657 = arith.addf %650, %656 : vector<8x128xf32>
    %c13_551 = arith.constant 13 : index
    %c2_552 = arith.constant 2 : index
    %c0_553 = arith.constant 0 : index
    %658 = vector.load %arg1[%c13_551, %c2_552, %c0_553] : memref<16x8x128xf32, #tpu.memory_space<vmem>>, vector<1x1x128xf32>
    %659 = vector.shape_cast %658 : vector<1x1x128xf32> to vector<1x128xf32>
    %c13_554 = arith.constant 13 : index
    %c0_555 = arith.constant 0 : index
    %c0_556 = arith.constant 0 : index
    %660 = vector.load %arg2[%c13_554, %c0_555, %c0_556] : memref<16x8x128xf32, #tpu.memory_space<vmem>>, vector<1x8x128xf32>
    %661 = vector.shape_cast %660 : vector<1x8x128xf32> to vector<8x128xf32>
    %662 = vector.broadcast %659 : vector<1x128xf32> to vector<8x128xf32>
    %663 = arith.mulf %662, %661 : vector<8x128xf32>
    %664 = arith.addf %657, %663 : vector<8x128xf32>
    %c14_557 = arith.constant 14 : index
    %c2_558 = arith.constant 2 : index
    %c0_559 = arith.constant 0 : index
    %665 = vector.load %arg1[%c14_557, %c2_558, %c0_559] : memref<16x8x128xf32, #tpu.memory_space<vmem>>, vector<1x1x128xf32>
    %666 = vector.shape_cast %665 : vector<1x1x128xf32> to vector<1x128xf32>
    %c14_560 = arith.constant 14 : index
    %c0_561 = arith.constant 0 : index
    %c0_562 = arith.constant 0 : index
    %667 = vector.load %arg2[%c14_560, %c0_561, %c0_562] : memref<16x8x128xf32, #tpu.memory_space<vmem>>, vector<1x8x128xf32>
    %668 = vector.shape_cast %667 : vector<1x8x128xf32> to vector<8x128xf32>
    %669 = vector.broadcast %666 : vector<1x128xf32> to vector<8x128xf32>
    %670 = arith.mulf %669, %668 : vector<8x128xf32>
    %671 = arith.addf %664, %670 : vector<8x128xf32>
    %c15_563 = arith.constant 15 : index
    %c2_564 = arith.constant 2 : index
    %c0_565 = arith.constant 0 : index
    %672 = vector.load %arg1[%c15_563, %c2_564, %c0_565] : memref<16x8x128xf32, #tpu.memory_space<vmem>>, vector<1x1x128xf32>
    %673 = vector.shape_cast %672 : vector<1x1x128xf32> to vector<1x128xf32>
    %c15_566 = arith.constant 15 : index
    %c0_567 = arith.constant 0 : index
    %c0_568 = arith.constant 0 : index
    %674 = vector.load %arg2[%c15_566, %c0_567, %c0_568] : memref<16x8x128xf32, #tpu.memory_space<vmem>>, vector<1x8x128xf32>
    %675 = vector.shape_cast %674 : vector<1x8x128xf32> to vector<8x128xf32>
    %676 = vector.broadcast %673 : vector<1x128xf32> to vector<8x128xf32>
    %677 = arith.mulf %676, %675 : vector<8x128xf32>
    %678 = arith.addf %671, %677 : vector<8x128xf32>
    %cst_569 = arith.constant 0.377964467 : f32
    %679 = vector.broadcast %cst_569 : f32 to vector<8x128xf32>
    %680 = arith.mulf %679, %678 : vector<8x128xf32>
    %c9_570 = arith.constant 9 : index
    %c3_571 = arith.constant 3 : index
    %c0_572 = arith.constant 0 : index
    %681 = vector.load %arg1[%c9_570, %c3_571, %c0_572] : memref<16x8x128xf32, #tpu.memory_space<vmem>>, vector<1x1x128xf32>
    %682 = vector.shape_cast %681 : vector<1x1x128xf32> to vector<1x128xf32>
    %c9_573 = arith.constant 9 : index
    %c0_574 = arith.constant 0 : index
    %c0_575 = arith.constant 0 : index
    %683 = vector.load %arg2[%c9_573, %c0_574, %c0_575] : memref<16x8x128xf32, #tpu.memory_space<vmem>>, vector<1x8x128xf32>
    %684 = vector.shape_cast %683 : vector<1x8x128xf32> to vector<8x128xf32>
    %685 = vector.broadcast %682 : vector<1x128xf32> to vector<8x128xf32>
    %686 = arith.mulf %685, %684 : vector<8x128xf32>
    %c10_576 = arith.constant 10 : index
    %c3_577 = arith.constant 3 : index
    %c0_578 = arith.constant 0 : index
    %687 = vector.load %arg1[%c10_576, %c3_577, %c0_578] : memref<16x8x128xf32, #tpu.memory_space<vmem>>, vector<1x1x128xf32>
    %688 = vector.shape_cast %687 : vector<1x1x128xf32> to vector<1x128xf32>
    %c10_579 = arith.constant 10 : index
    %c0_580 = arith.constant 0 : index
    %c0_581 = arith.constant 0 : index
    %689 = vector.load %arg2[%c10_579, %c0_580, %c0_581] : memref<16x8x128xf32, #tpu.memory_space<vmem>>, vector<1x8x128xf32>
    %690 = vector.shape_cast %689 : vector<1x8x128xf32> to vector<8x128xf32>
    %691 = vector.broadcast %688 : vector<1x128xf32> to vector<8x128xf32>
    %692 = arith.mulf %691, %690 : vector<8x128xf32>
    %693 = arith.addf %686, %692 : vector<8x128xf32>
    %c11_582 = arith.constant 11 : index
    %c3_583 = arith.constant 3 : index
    %c0_584 = arith.constant 0 : index
    %694 = vector.load %arg1[%c11_582, %c3_583, %c0_584] : memref<16x8x128xf32, #tpu.memory_space<vmem>>, vector<1x1x128xf32>
    %695 = vector.shape_cast %694 : vector<1x1x128xf32> to vector<1x128xf32>
    %c11_585 = arith.constant 11 : index
    %c0_586 = arith.constant 0 : index
    %c0_587 = arith.constant 0 : index
    %696 = vector.load %arg2[%c11_585, %c0_586, %c0_587] : memref<16x8x128xf32, #tpu.memory_space<vmem>>, vector<1x8x128xf32>
    %697 = vector.shape_cast %696 : vector<1x8x128xf32> to vector<8x128xf32>
    %698 = vector.broadcast %695 : vector<1x128xf32> to vector<8x128xf32>
    %699 = arith.mulf %698, %697 : vector<8x128xf32>
    %700 = arith.addf %693, %699 : vector<8x128xf32>
    %c12_588 = arith.constant 12 : index
    %c3_589 = arith.constant 3 : index
    %c0_590 = arith.constant 0 : index
    %701 = vector.load %arg1[%c12_588, %c3_589, %c0_590] : memref<16x8x128xf32, #tpu.memory_space<vmem>>, vector<1x1x128xf32>
    %702 = vector.shape_cast %701 : vector<1x1x128xf32> to vector<1x128xf32>
    %c12_591 = arith.constant 12 : index
    %c0_592 = arith.constant 0 : index
    %c0_593 = arith.constant 0 : index
    %703 = vector.load %arg2[%c12_591, %c0_592, %c0_593] : memref<16x8x128xf32, #tpu.memory_space<vmem>>, vector<1x8x128xf32>
    %704 = vector.shape_cast %703 : vector<1x8x128xf32> to vector<8x128xf32>
    %705 = vector.broadcast %702 : vector<1x128xf32> to vector<8x128xf32>
    %706 = arith.mulf %705, %704 : vector<8x128xf32>
    %707 = arith.addf %700, %706 : vector<8x128xf32>
    %c13_594 = arith.constant 13 : index
    %c3_595 = arith.constant 3 : index
    %c0_596 = arith.constant 0 : index
    %708 = vector.load %arg1[%c13_594, %c3_595, %c0_596] : memref<16x8x128xf32, #tpu.memory_space<vmem>>, vector<1x1x128xf32>
    %709 = vector.shape_cast %708 : vector<1x1x128xf32> to vector<1x128xf32>
    %c13_597 = arith.constant 13 : index
    %c0_598 = arith.constant 0 : index
    %c0_599 = arith.constant 0 : index
    %710 = vector.load %arg2[%c13_597, %c0_598, %c0_599] : memref<16x8x128xf32, #tpu.memory_space<vmem>>, vector<1x8x128xf32>
    %711 = vector.shape_cast %710 : vector<1x8x128xf32> to vector<8x128xf32>
    %712 = vector.broadcast %709 : vector<1x128xf32> to vector<8x128xf32>
    %713 = arith.mulf %712, %711 : vector<8x128xf32>
    %714 = arith.addf %707, %713 : vector<8x128xf32>
    %c14_600 = arith.constant 14 : index
    %c3_601 = arith.constant 3 : index
    %c0_602 = arith.constant 0 : index
    %715 = vector.load %arg1[%c14_600, %c3_601, %c0_602] : memref<16x8x128xf32, #tpu.memory_space<vmem>>, vector<1x1x128xf32>
    %716 = vector.shape_cast %715 : vector<1x1x128xf32> to vector<1x128xf32>
    %c14_603 = arith.constant 14 : index
    %c0_604 = arith.constant 0 : index
    %c0_605 = arith.constant 0 : index
    %717 = vector.load %arg2[%c14_603, %c0_604, %c0_605] : memref<16x8x128xf32, #tpu.memory_space<vmem>>, vector<1x8x128xf32>
    %718 = vector.shape_cast %717 : vector<1x8x128xf32> to vector<8x128xf32>
    %719 = vector.broadcast %716 : vector<1x128xf32> to vector<8x128xf32>
    %720 = arith.mulf %719, %718 : vector<8x128xf32>
    %721 = arith.addf %714, %720 : vector<8x128xf32>
    %c15_606 = arith.constant 15 : index
    %c3_607 = arith.constant 3 : index
    %c0_608 = arith.constant 0 : index
    %722 = vector.load %arg1[%c15_606, %c3_607, %c0_608] : memref<16x8x128xf32, #tpu.memory_space<vmem>>, vector<1x1x128xf32>
    %723 = vector.shape_cast %722 : vector<1x1x128xf32> to vector<1x128xf32>
    %c15_609 = arith.constant 15 : index
    %c0_610 = arith.constant 0 : index
    %c0_611 = arith.constant 0 : index
    %724 = vector.load %arg2[%c15_609, %c0_610, %c0_611] : memref<16x8x128xf32, #tpu.memory_space<vmem>>, vector<1x8x128xf32>
    %725 = vector.shape_cast %724 : vector<1x8x128xf32> to vector<8x128xf32>
    %726 = vector.broadcast %723 : vector<1x128xf32> to vector<8x128xf32>
    %727 = arith.mulf %726, %725 : vector<8x128xf32>
    %728 = arith.addf %721, %727 : vector<8x128xf32>
    %cst_612 = arith.constant 0.377964467 : f32
    %729 = vector.broadcast %cst_612 : f32 to vector<8x128xf32>
    %730 = arith.mulf %729, %728 : vector<8x128xf32>
    %c9_613 = arith.constant 9 : index
    %c4_614 = arith.constant 4 : index
    %c0_615 = arith.constant 0 : index
    %731 = vector.load %arg1[%c9_613, %c4_614, %c0_615] : memref<16x8x128xf32, #tpu.memory_space<vmem>>, vector<1x1x128xf32>
    %732 = vector.shape_cast %731 : vector<1x1x128xf32> to vector<1x128xf32>
    %c9_616 = arith.constant 9 : index
    %c0_617 = arith.constant 0 : index
    %c0_618 = arith.constant 0 : index
    %733 = vector.load %arg2[%c9_616, %c0_617, %c0_618] : memref<16x8x128xf32, #tpu.memory_space<vmem>>, vector<1x8x128xf32>
    %734 = vector.shape_cast %733 : vector<1x8x128xf32> to vector<8x128xf32>
    %735 = vector.broadcast %732 : vector<1x128xf32> to vector<8x128xf32>
    %736 = arith.mulf %735, %734 : vector<8x128xf32>
    %c10_619 = arith.constant 10 : index
    %c4_620 = arith.constant 4 : index
    %c0_621 = arith.constant 0 : index
    %737 = vector.load %arg1[%c10_619, %c4_620, %c0_621] : memref<16x8x128xf32, #tpu.memory_space<vmem>>, vector<1x1x128xf32>
    %738 = vector.shape_cast %737 : vector<1x1x128xf32> to vector<1x128xf32>
    %c10_622 = arith.constant 10 : index
    %c0_623 = arith.constant 0 : index
    %c0_624 = arith.constant 0 : index
    %739 = vector.load %arg2[%c10_622, %c0_623, %c0_624] : memref<16x8x128xf32, #tpu.memory_space<vmem>>, vector<1x8x128xf32>
    %740 = vector.shape_cast %739 : vector<1x8x128xf32> to vector<8x128xf32>
    %741 = vector.broadcast %738 : vector<1x128xf32> to vector<8x128xf32>
    %742 = arith.mulf %741, %740 : vector<8x128xf32>
    %743 = arith.addf %736, %742 : vector<8x128xf32>
    %c11_625 = arith.constant 11 : index
    %c4_626 = arith.constant 4 : index
    %c0_627 = arith.constant 0 : index
    %744 = vector.load %arg1[%c11_625, %c4_626, %c0_627] : memref<16x8x128xf32, #tpu.memory_space<vmem>>, vector<1x1x128xf32>
    %745 = vector.shape_cast %744 : vector<1x1x128xf32> to vector<1x128xf32>
    %c11_628 = arith.constant 11 : index
    %c0_629 = arith.constant 0 : index
    %c0_630 = arith.constant 0 : index
    %746 = vector.load %arg2[%c11_628, %c0_629, %c0_630] : memref<16x8x128xf32, #tpu.memory_space<vmem>>, vector<1x8x128xf32>
    %747 = vector.shape_cast %746 : vector<1x8x128xf32> to vector<8x128xf32>
    %748 = vector.broadcast %745 : vector<1x128xf32> to vector<8x128xf32>
    %749 = arith.mulf %748, %747 : vector<8x128xf32>
    %750 = arith.addf %743, %749 : vector<8x128xf32>
    %c12_631 = arith.constant 12 : index
    %c4_632 = arith.constant 4 : index
    %c0_633 = arith.constant 0 : index
    %751 = vector.load %arg1[%c12_631, %c4_632, %c0_633] : memref<16x8x128xf32, #tpu.memory_space<vmem>>, vector<1x1x128xf32>
    %752 = vector.shape_cast %751 : vector<1x1x128xf32> to vector<1x128xf32>
    %c12_634 = arith.constant 12 : index
    %c0_635 = arith.constant 0 : index
    %c0_636 = arith.constant 0 : index
    %753 = vector.load %arg2[%c12_634, %c0_635, %c0_636] : memref<16x8x128xf32, #tpu.memory_space<vmem>>, vector<1x8x128xf32>
    %754 = vector.shape_cast %753 : vector<1x8x128xf32> to vector<8x128xf32>
    %755 = vector.broadcast %752 : vector<1x128xf32> to vector<8x128xf32>
    %756 = arith.mulf %755, %754 : vector<8x128xf32>
    %757 = arith.addf %750, %756 : vector<8x128xf32>
    %c13_637 = arith.constant 13 : index
    %c4_638 = arith.constant 4 : index
    %c0_639 = arith.constant 0 : index
    %758 = vector.load %arg1[%c13_637, %c4_638, %c0_639] : memref<16x8x128xf32, #tpu.memory_space<vmem>>, vector<1x1x128xf32>
    %759 = vector.shape_cast %758 : vector<1x1x128xf32> to vector<1x128xf32>
    %c13_640 = arith.constant 13 : index
    %c0_641 = arith.constant 0 : index
    %c0_642 = arith.constant 0 : index
    %760 = vector.load %arg2[%c13_640, %c0_641, %c0_642] : memref<16x8x128xf32, #tpu.memory_space<vmem>>, vector<1x8x128xf32>
    %761 = vector.shape_cast %760 : vector<1x8x128xf32> to vector<8x128xf32>
    %762 = vector.broadcast %759 : vector<1x128xf32> to vector<8x128xf32>
    %763 = arith.mulf %762, %761 : vector<8x128xf32>
    %764 = arith.addf %757, %763 : vector<8x128xf32>
    %c14_643 = arith.constant 14 : index
    %c4_644 = arith.constant 4 : index
    %c0_645 = arith.constant 0 : index
    %765 = vector.load %arg1[%c14_643, %c4_644, %c0_645] : memref<16x8x128xf32, #tpu.memory_space<vmem>>, vector<1x1x128xf32>
    %766 = vector.shape_cast %765 : vector<1x1x128xf32> to vector<1x128xf32>
    %c14_646 = arith.constant 14 : index
    %c0_647 = arith.constant 0 : index
    %c0_648 = arith.constant 0 : index
    %767 = vector.load %arg2[%c14_646, %c0_647, %c0_648] : memref<16x8x128xf32, #tpu.memory_space<vmem>>, vector<1x8x128xf32>
    %768 = vector.shape_cast %767 : vector<1x8x128xf32> to vector<8x128xf32>
    %769 = vector.broadcast %766 : vector<1x128xf32> to vector<8x128xf32>
    %770 = arith.mulf %769, %768 : vector<8x128xf32>
    %771 = arith.addf %764, %770 : vector<8x128xf32>
    %c15_649 = arith.constant 15 : index
    %c4_650 = arith.constant 4 : index
    %c0_651 = arith.constant 0 : index
    %772 = vector.load %arg1[%c15_649, %c4_650, %c0_651] : memref<16x8x128xf32, #tpu.memory_space<vmem>>, vector<1x1x128xf32>
    %773 = vector.shape_cast %772 : vector<1x1x128xf32> to vector<1x128xf32>
    %c15_652 = arith.constant 15 : index
    %c0_653 = arith.constant 0 : index
    %c0_654 = arith.constant 0 : index
    %774 = vector.load %arg2[%c15_652, %c0_653, %c0_654] : memref<16x8x128xf32, #tpu.memory_space<vmem>>, vector<1x8x128xf32>
    %775 = vector.shape_cast %774 : vector<1x8x128xf32> to vector<8x128xf32>
    %776 = vector.broadcast %773 : vector<1x128xf32> to vector<8x128xf32>
    %777 = arith.mulf %776, %775 : vector<8x128xf32>
    %778 = arith.addf %771, %777 : vector<8x128xf32>
    %cst_655 = arith.constant 0.377964467 : f32
    %779 = vector.broadcast %cst_655 : f32 to vector<8x128xf32>
    %780 = arith.mulf %779, %778 : vector<8x128xf32>
    %c9_656 = arith.constant 9 : index
    %c5_657 = arith.constant 5 : index
    %c0_658 = arith.constant 0 : index
    %781 = vector.load %arg1[%c9_656, %c5_657, %c0_658] : memref<16x8x128xf32, #tpu.memory_space<vmem>>, vector<1x1x128xf32>
    %782 = vector.shape_cast %781 : vector<1x1x128xf32> to vector<1x128xf32>
    %c9_659 = arith.constant 9 : index
    %c0_660 = arith.constant 0 : index
    %c0_661 = arith.constant 0 : index
    %783 = vector.load %arg2[%c9_659, %c0_660, %c0_661] : memref<16x8x128xf32, #tpu.memory_space<vmem>>, vector<1x8x128xf32>
    %784 = vector.shape_cast %783 : vector<1x8x128xf32> to vector<8x128xf32>
    %785 = vector.broadcast %782 : vector<1x128xf32> to vector<8x128xf32>
    %786 = arith.mulf %785, %784 : vector<8x128xf32>
    %c10_662 = arith.constant 10 : index
    %c5_663 = arith.constant 5 : index
    %c0_664 = arith.constant 0 : index
    %787 = vector.load %arg1[%c10_662, %c5_663, %c0_664] : memref<16x8x128xf32, #tpu.memory_space<vmem>>, vector<1x1x128xf32>
    %788 = vector.shape_cast %787 : vector<1x1x128xf32> to vector<1x128xf32>
    %c10_665 = arith.constant 10 : index
    %c0_666 = arith.constant 0 : index
    %c0_667 = arith.constant 0 : index
    %789 = vector.load %arg2[%c10_665, %c0_666, %c0_667] : memref<16x8x128xf32, #tpu.memory_space<vmem>>, vector<1x8x128xf32>
    %790 = vector.shape_cast %789 : vector<1x8x128xf32> to vector<8x128xf32>
    %791 = vector.broadcast %788 : vector<1x128xf32> to vector<8x128xf32>
    %792 = arith.mulf %791, %790 : vector<8x128xf32>
    %793 = arith.addf %786, %792 : vector<8x128xf32>
    %c11_668 = arith.constant 11 : index
    %c5_669 = arith.constant 5 : index
    %c0_670 = arith.constant 0 : index
    %794 = vector.load %arg1[%c11_668, %c5_669, %c0_670] : memref<16x8x128xf32, #tpu.memory_space<vmem>>, vector<1x1x128xf32>
    %795 = vector.shape_cast %794 : vector<1x1x128xf32> to vector<1x128xf32>
    %c11_671 = arith.constant 11 : index
    %c0_672 = arith.constant 0 : index
    %c0_673 = arith.constant 0 : index
    %796 = vector.load %arg2[%c11_671, %c0_672, %c0_673] : memref<16x8x128xf32, #tpu.memory_space<vmem>>, vector<1x8x128xf32>
    %797 = vector.shape_cast %796 : vector<1x8x128xf32> to vector<8x128xf32>
    %798 = vector.broadcast %795 : vector<1x128xf32> to vector<8x128xf32>
    %799 = arith.mulf %798, %797 : vector<8x128xf32>
    %800 = arith.addf %793, %799 : vector<8x128xf32>
    %c12_674 = arith.constant 12 : index
    %c5_675 = arith.constant 5 : index
    %c0_676 = arith.constant 0 : index
    %801 = vector.load %arg1[%c12_674, %c5_675, %c0_676] : memref<16x8x128xf32, #tpu.memory_space<vmem>>, vector<1x1x128xf32>
    %802 = vector.shape_cast %801 : vector<1x1x128xf32> to vector<1x128xf32>
    %c12_677 = arith.constant 12 : index
    %c0_678 = arith.constant 0 : index
    %c0_679 = arith.constant 0 : index
    %803 = vector.load %arg2[%c12_677, %c0_678, %c0_679] : memref<16x8x128xf32, #tpu.memory_space<vmem>>, vector<1x8x128xf32>
    %804 = vector.shape_cast %803 : vector<1x8x128xf32> to vector<8x128xf32>
    %805 = vector.broadcast %802 : vector<1x128xf32> to vector<8x128xf32>
    %806 = arith.mulf %805, %804 : vector<8x128xf32>
    %807 = arith.addf %800, %806 : vector<8x128xf32>
    %c13_680 = arith.constant 13 : index
    %c5_681 = arith.constant 5 : index
    %c0_682 = arith.constant 0 : index
    %808 = vector.load %arg1[%c13_680, %c5_681, %c0_682] : memref<16x8x128xf32, #tpu.memory_space<vmem>>, vector<1x1x128xf32>
    %809 = vector.shape_cast %808 : vector<1x1x128xf32> to vector<1x128xf32>
    %c13_683 = arith.constant 13 : index
    %c0_684 = arith.constant 0 : index
    %c0_685 = arith.constant 0 : index
    %810 = vector.load %arg2[%c13_683, %c0_684, %c0_685] : memref<16x8x128xf32, #tpu.memory_space<vmem>>, vector<1x8x128xf32>
    %811 = vector.shape_cast %810 : vector<1x8x128xf32> to vector<8x128xf32>
    %812 = vector.broadcast %809 : vector<1x128xf32> to vector<8x128xf32>
    %813 = arith.mulf %812, %811 : vector<8x128xf32>
    %814 = arith.addf %807, %813 : vector<8x128xf32>
    %c14_686 = arith.constant 14 : index
    %c5_687 = arith.constant 5 : index
    %c0_688 = arith.constant 0 : index
    %815 = vector.load %arg1[%c14_686, %c5_687, %c0_688] : memref<16x8x128xf32, #tpu.memory_space<vmem>>, vector<1x1x128xf32>
    %816 = vector.shape_cast %815 : vector<1x1x128xf32> to vector<1x128xf32>
    %c14_689 = arith.constant 14 : index
    %c0_690 = arith.constant 0 : index
    %c0_691 = arith.constant 0 : index
    %817 = vector.load %arg2[%c14_689, %c0_690, %c0_691] : memref<16x8x128xf32, #tpu.memory_space<vmem>>, vector<1x8x128xf32>
    %818 = vector.shape_cast %817 : vector<1x8x128xf32> to vector<8x128xf32>
    %819 = vector.broadcast %816 : vector<1x128xf32> to vector<8x128xf32>
    %820 = arith.mulf %819, %818 : vector<8x128xf32>
    %821 = arith.addf %814, %820 : vector<8x128xf32>
    %c15_692 = arith.constant 15 : index
    %c5_693 = arith.constant 5 : index
    %c0_694 = arith.constant 0 : index
    %822 = vector.load %arg1[%c15_692, %c5_693, %c0_694] : memref<16x8x128xf32, #tpu.memory_space<vmem>>, vector<1x1x128xf32>
    %823 = vector.shape_cast %822 : vector<1x1x128xf32> to vector<1x128xf32>
    %c15_695 = arith.constant 15 : index
    %c0_696 = arith.constant 0 : index
    %c0_697 = arith.constant 0 : index
    %824 = vector.load %arg2[%c15_695, %c0_696, %c0_697] : memref<16x8x128xf32, #tpu.memory_space<vmem>>, vector<1x8x128xf32>
    %825 = vector.shape_cast %824 : vector<1x8x128xf32> to vector<8x128xf32>
    %826 = vector.broadcast %823 : vector<1x128xf32> to vector<8x128xf32>
    %827 = arith.mulf %826, %825 : vector<8x128xf32>
    %828 = arith.addf %821, %827 : vector<8x128xf32>
    %cst_698 = arith.constant 0.377964467 : f32
    %829 = vector.broadcast %cst_698 : f32 to vector<8x128xf32>
    %830 = arith.mulf %829, %828 : vector<8x128xf32>
    %c9_699 = arith.constant 9 : index
    %c6_700 = arith.constant 6 : index
    %c0_701 = arith.constant 0 : index
    %831 = vector.load %arg1[%c9_699, %c6_700, %c0_701] : memref<16x8x128xf32, #tpu.memory_space<vmem>>, vector<1x1x128xf32>
    %832 = vector.shape_cast %831 : vector<1x1x128xf32> to vector<1x128xf32>
    %c9_702 = arith.constant 9 : index
    %c0_703 = arith.constant 0 : index
    %c0_704 = arith.constant 0 : index
    %833 = vector.load %arg2[%c9_702, %c0_703, %c0_704] : memref<16x8x128xf32, #tpu.memory_space<vmem>>, vector<1x8x128xf32>
    %834 = vector.shape_cast %833 : vector<1x8x128xf32> to vector<8x128xf32>
    %835 = vector.broadcast %832 : vector<1x128xf32> to vector<8x128xf32>
    %836 = arith.mulf %835, %834 : vector<8x128xf32>
    %c10_705 = arith.constant 10 : index
    %c6_706 = arith.constant 6 : index
    %c0_707 = arith.constant 0 : index
    %837 = vector.load %arg1[%c10_705, %c6_706, %c0_707] : memref<16x8x128xf32, #tpu.memory_space<vmem>>, vector<1x1x128xf32>
    %838 = vector.shape_cast %837 : vector<1x1x128xf32> to vector<1x128xf32>
    %c10_708 = arith.constant 10 : index
    %c0_709 = arith.constant 0 : index
    %c0_710 = arith.constant 0 : index
    %839 = vector.load %arg2[%c10_708, %c0_709, %c0_710] : memref<16x8x128xf32, #tpu.memory_space<vmem>>, vector<1x8x128xf32>
    %840 = vector.shape_cast %839 : vector<1x8x128xf32> to vector<8x128xf32>
    %841 = vector.broadcast %838 : vector<1x128xf32> to vector<8x128xf32>
    %842 = arith.mulf %841, %840 : vector<8x128xf32>
    %843 = arith.addf %836, %842 : vector<8x128xf32>
    %c11_711 = arith.constant 11 : index
    %c6_712 = arith.constant 6 : index
    %c0_713 = arith.constant 0 : index
    %844 = vector.load %arg1[%c11_711, %c6_712, %c0_713] : memref<16x8x128xf32, #tpu.memory_space<vmem>>, vector<1x1x128xf32>
    %845 = vector.shape_cast %844 : vector<1x1x128xf32> to vector<1x128xf32>
    %c11_714 = arith.constant 11 : index
    %c0_715 = arith.constant 0 : index
    %c0_716 = arith.constant 0 : index
    %846 = vector.load %arg2[%c11_714, %c0_715, %c0_716] : memref<16x8x128xf32, #tpu.memory_space<vmem>>, vector<1x8x128xf32>
    %847 = vector.shape_cast %846 : vector<1x8x128xf32> to vector<8x128xf32>
    %848 = vector.broadcast %845 : vector<1x128xf32> to vector<8x128xf32>
    %849 = arith.mulf %848, %847 : vector<8x128xf32>
    %850 = arith.addf %843, %849 : vector<8x128xf32>
    %c12_717 = arith.constant 12 : index
    %c6_718 = arith.constant 6 : index
    %c0_719 = arith.constant 0 : index
    %851 = vector.load %arg1[%c12_717, %c6_718, %c0_719] : memref<16x8x128xf32, #tpu.memory_space<vmem>>, vector<1x1x128xf32>
    %852 = vector.shape_cast %851 : vector<1x1x128xf32> to vector<1x128xf32>
    %c12_720 = arith.constant 12 : index
    %c0_721 = arith.constant 0 : index
    %c0_722 = arith.constant 0 : index
    %853 = vector.load %arg2[%c12_720, %c0_721, %c0_722] : memref<16x8x128xf32, #tpu.memory_space<vmem>>, vector<1x8x128xf32>
    %854 = vector.shape_cast %853 : vector<1x8x128xf32> to vector<8x128xf32>
    %855 = vector.broadcast %852 : vector<1x128xf32> to vector<8x128xf32>
    %856 = arith.mulf %855, %854 : vector<8x128xf32>
    %857 = arith.addf %850, %856 : vector<8x128xf32>
    %c13_723 = arith.constant 13 : index
    %c6_724 = arith.constant 6 : index
    %c0_725 = arith.constant 0 : index
    %858 = vector.load %arg1[%c13_723, %c6_724, %c0_725] : memref<16x8x128xf32, #tpu.memory_space<vmem>>, vector<1x1x128xf32>
    %859 = vector.shape_cast %858 : vector<1x1x128xf32> to vector<1x128xf32>
    %c13_726 = arith.constant 13 : index
    %c0_727 = arith.constant 0 : index
    %c0_728 = arith.constant 0 : index
    %860 = vector.load %arg2[%c13_726, %c0_727, %c0_728] : memref<16x8x128xf32, #tpu.memory_space<vmem>>, vector<1x8x128xf32>
    %861 = vector.shape_cast %860 : vector<1x8x128xf32> to vector<8x128xf32>
    %862 = vector.broadcast %859 : vector<1x128xf32> to vector<8x128xf32>
    %863 = arith.mulf %862, %861 : vector<8x128xf32>
    %864 = arith.addf %857, %863 : vector<8x128xf32>
    %c14_729 = arith.constant 14 : index
    %c6_730 = arith.constant 6 : index
    %c0_731 = arith.constant 0 : index
    %865 = vector.load %arg1[%c14_729, %c6_730, %c0_731] : memref<16x8x128xf32, #tpu.memory_space<vmem>>, vector<1x1x128xf32>
    %866 = vector.shape_cast %865 : vector<1x1x128xf32> to vector<1x128xf32>
    %c14_732 = arith.constant 14 : index
    %c0_733 = arith.constant 0 : index
    %c0_734 = arith.constant 0 : index
    %867 = vector.load %arg2[%c14_732, %c0_733, %c0_734] : memref<16x8x128xf32, #tpu.memory_space<vmem>>, vector<1x8x128xf32>
    %868 = vector.shape_cast %867 : vector<1x8x128xf32> to vector<8x128xf32>
    %869 = vector.broadcast %866 : vector<1x128xf32> to vector<8x128xf32>
    %870 = arith.mulf %869, %868 : vector<8x128xf32>
    %871 = arith.addf %864, %870 : vector<8x128xf32>
    %c15_735 = arith.constant 15 : index
    %c6_736 = arith.constant 6 : index
    %c0_737 = arith.constant 0 : index
    %872 = vector.load %arg1[%c15_735, %c6_736, %c0_737] : memref<16x8x128xf32, #tpu.memory_space<vmem>>, vector<1x1x128xf32>
    %873 = vector.shape_cast %872 : vector<1x1x128xf32> to vector<1x128xf32>
    %c15_738 = arith.constant 15 : index
    %c0_739 = arith.constant 0 : index
    %c0_740 = arith.constant 0 : index
    %874 = vector.load %arg2[%c15_738, %c0_739, %c0_740] : memref<16x8x128xf32, #tpu.memory_space<vmem>>, vector<1x8x128xf32>
    %875 = vector.shape_cast %874 : vector<1x8x128xf32> to vector<8x128xf32>
    %876 = vector.broadcast %873 : vector<1x128xf32> to vector<8x128xf32>
    %877 = arith.mulf %876, %875 : vector<8x128xf32>
    %878 = arith.addf %871, %877 : vector<8x128xf32>
    %cst_741 = arith.constant 0.377964467 : f32
    %879 = vector.broadcast %cst_741 : f32 to vector<8x128xf32>
    %880 = arith.mulf %879, %878 : vector<8x128xf32>
    %c9_742 = arith.constant 9 : index
    %c7_743 = arith.constant 7 : index
    %c0_744 = arith.constant 0 : index
    %881 = vector.load %arg1[%c9_742, %c7_743, %c0_744] : memref<16x8x128xf32, #tpu.memory_space<vmem>>, vector<1x1x128xf32>
    %882 = vector.shape_cast %881 : vector<1x1x128xf32> to vector<1x128xf32>
    %c9_745 = arith.constant 9 : index
    %c0_746 = arith.constant 0 : index
    %c0_747 = arith.constant 0 : index
    %883 = vector.load %arg2[%c9_745, %c0_746, %c0_747] : memref<16x8x128xf32, #tpu.memory_space<vmem>>, vector<1x8x128xf32>
    %884 = vector.shape_cast %883 : vector<1x8x128xf32> to vector<8x128xf32>
    %885 = vector.broadcast %882 : vector<1x128xf32> to vector<8x128xf32>
    %886 = arith.mulf %885, %884 : vector<8x128xf32>
    %c10_748 = arith.constant 10 : index
    %c7_749 = arith.constant 7 : index
    %c0_750 = arith.constant 0 : index
    %887 = vector.load %arg1[%c10_748, %c7_749, %c0_750] : memref<16x8x128xf32, #tpu.memory_space<vmem>>, vector<1x1x128xf32>
    %888 = vector.shape_cast %887 : vector<1x1x128xf32> to vector<1x128xf32>
    %c10_751 = arith.constant 10 : index
    %c0_752 = arith.constant 0 : index
    %c0_753 = arith.constant 0 : index
    %889 = vector.load %arg2[%c10_751, %c0_752, %c0_753] : memref<16x8x128xf32, #tpu.memory_space<vmem>>, vector<1x8x128xf32>
    %890 = vector.shape_cast %889 : vector<1x8x128xf32> to vector<8x128xf32>
    %891 = vector.broadcast %888 : vector<1x128xf32> to vector<8x128xf32>
    %892 = arith.mulf %891, %890 : vector<8x128xf32>
    %893 = arith.addf %886, %892 : vector<8x128xf32>
    %c11_754 = arith.constant 11 : index
    %c7_755 = arith.constant 7 : index
    %c0_756 = arith.constant 0 : index
    %894 = vector.load %arg1[%c11_754, %c7_755, %c0_756] : memref<16x8x128xf32, #tpu.memory_space<vmem>>, vector<1x1x128xf32>
    %895 = vector.shape_cast %894 : vector<1x1x128xf32> to vector<1x128xf32>
    %c11_757 = arith.constant 11 : index
    %c0_758 = arith.constant 0 : index
    %c0_759 = arith.constant 0 : index
    %896 = vector.load %arg2[%c11_757, %c0_758, %c0_759] : memref<16x8x128xf32, #tpu.memory_space<vmem>>, vector<1x8x128xf32>
    %897 = vector.shape_cast %896 : vector<1x8x128xf32> to vector<8x128xf32>
    %898 = vector.broadcast %895 : vector<1x128xf32> to vector<8x128xf32>
    %899 = arith.mulf %898, %897 : vector<8x128xf32>
    %900 = arith.addf %893, %899 : vector<8x128xf32>
    %c12_760 = arith.constant 12 : index
    %c7_761 = arith.constant 7 : index
    %c0_762 = arith.constant 0 : index
    %901 = vector.load %arg1[%c12_760, %c7_761, %c0_762] : memref<16x8x128xf32, #tpu.memory_space<vmem>>, vector<1x1x128xf32>
    %902 = vector.shape_cast %901 : vector<1x1x128xf32> to vector<1x128xf32>
    %c12_763 = arith.constant 12 : index
    %c0_764 = arith.constant 0 : index
    %c0_765 = arith.constant 0 : index
    %903 = vector.load %arg2[%c12_763, %c0_764, %c0_765] : memref<16x8x128xf32, #tpu.memory_space<vmem>>, vector<1x8x128xf32>
    %904 = vector.shape_cast %903 : vector<1x8x128xf32> to vector<8x128xf32>
    %905 = vector.broadcast %902 : vector<1x128xf32> to vector<8x128xf32>
    %906 = arith.mulf %905, %904 : vector<8x128xf32>
    %907 = arith.addf %900, %906 : vector<8x128xf32>
    %c13_766 = arith.constant 13 : index
    %c7_767 = arith.constant 7 : index
    %c0_768 = arith.constant 0 : index
    %908 = vector.load %arg1[%c13_766, %c7_767, %c0_768] : memref<16x8x128xf32, #tpu.memory_space<vmem>>, vector<1x1x128xf32>
    %909 = vector.shape_cast %908 : vector<1x1x128xf32> to vector<1x128xf32>
    %c13_769 = arith.constant 13 : index
    %c0_770 = arith.constant 0 : index
    %c0_771 = arith.constant 0 : index
    %910 = vector.load %arg2[%c13_769, %c0_770, %c0_771] : memref<16x8x128xf32, #tpu.memory_space<vmem>>, vector<1x8x128xf32>
    %911 = vector.shape_cast %910 : vector<1x8x128xf32> to vector<8x128xf32>
    %912 = vector.broadcast %909 : vector<1x128xf32> to vector<8x128xf32>
    %913 = arith.mulf %912, %911 : vector<8x128xf32>
    %914 = arith.addf %907, %913 : vector<8x128xf32>
    %c14_772 = arith.constant 14 : index
    %c7_773 = arith.constant 7 : index
    %c0_774 = arith.constant 0 : index
    %915 = vector.load %arg1[%c14_772, %c7_773, %c0_774] : memref<16x8x128xf32, #tpu.memory_space<vmem>>, vector<1x1x128xf32>
    %916 = vector.shape_cast %915 : vector<1x1x128xf32> to vector<1x128xf32>
    %c14_775 = arith.constant 14 : index
    %c0_776 = arith.constant 0 : index
    %c0_777 = arith.constant 0 : index
    %917 = vector.load %arg2[%c14_775, %c0_776, %c0_777] : memref<16x8x128xf32, #tpu.memory_space<vmem>>, vector<1x8x128xf32>
    %918 = vector.shape_cast %917 : vector<1x8x128xf32> to vector<8x128xf32>
    %919 = vector.broadcast %916 : vector<1x128xf32> to vector<8x128xf32>
    %920 = arith.mulf %919, %918 : vector<8x128xf32>
    %921 = arith.addf %914, %920 : vector<8x128xf32>
    %c15_778 = arith.constant 15 : index
    %c7_779 = arith.constant 7 : index
    %c0_780 = arith.constant 0 : index
    %922 = vector.load %arg1[%c15_778, %c7_779, %c0_780] : memref<16x8x128xf32, #tpu.memory_space<vmem>>, vector<1x1x128xf32>
    %923 = vector.shape_cast %922 : vector<1x1x128xf32> to vector<1x128xf32>
    %c15_781 = arith.constant 15 : index
    %c0_782 = arith.constant 0 : index
    %c0_783 = arith.constant 0 : index
    %924 = vector.load %arg2[%c15_781, %c0_782, %c0_783] : memref<16x8x128xf32, #tpu.memory_space<vmem>>, vector<1x8x128xf32>
    %925 = vector.shape_cast %924 : vector<1x8x128xf32> to vector<8x128xf32>
    %926 = vector.broadcast %923 : vector<1x128xf32> to vector<8x128xf32>
    %927 = arith.mulf %926, %925 : vector<8x128xf32>
    %928 = arith.addf %921, %927 : vector<8x128xf32>
    %cst_784 = arith.constant 0.377964467 : f32
    %929 = vector.broadcast %cst_784 : f32 to vector<8x128xf32>
    %930 = arith.mulf %929, %928 : vector<8x128xf32>
    %931 = tpu.concatenate %278, %314, %350, %386, %422, %458, %494, %530, %580, %630, %680, %730, %780, %830, %880, %930 in 0 : vector<8x128xf32>, vector<8x128xf32>, vector<8x128xf32>, vector<8x128xf32>, vector<8x128xf32>, vector<8x128xf32>, vector<8x128xf32>, vector<8x128xf32>, vector<8x128xf32>, vector<8x128xf32>, vector<8x128xf32>, vector<8x128xf32>, vector<8x128xf32>, vector<8x128xf32>, vector<8x128xf32>, vector<8x128xf32> -> vector<128x128xf32>
    %932 = tpu.transpose %931, [1, 0] : vector<128x128xf32> -> vector<128x128xf32>
    %c0_785 = arith.constant 0 : index
    %c128 = arith.constant 128 : index
    %933 = vector.load %arg3[%c0_785, %c128] : memref<128x256xf32, #tpu.memory_space<vmem>>, vector<128x128xf32>
    tpu.vector_store %arg3[%c0_785, %c128], %932 {strides = array<i32>} : memref<128x256xf32, #tpu.memory_space<vmem>>, vector<128x128xf32>,
    return
  }
  func.func @transform_0(%arg0: i32) -> (i32, i32, i32) {
    %c0_i32 = arith.constant 0 : i32
    %c0_i32_0 = arith.constant 0 : i32
    %c0_i32_1 = arith.constant 0 : i32
    return %c0_i32, %c0_i32_0, %arg0 : i32, i32, i32
  }
  func.func @transform_1(%arg0: i32) -> (i32, i32, i32) {
    %c0_i32 = arith.constant 0 : i32
    %c0_i32_0 = arith.constant 0 : i32
    %c0_i32_1 = arith.constant 0 : i32
    return %c0_i32, %c0_i32_0, %arg0 : i32, i32, i32
  }
  func.func @transform_2(%arg0: i32) -> (i32, i32) {
    %c0_i32 = arith.constant 0 : i32
    %c0_i32_0 = arith.constant 0 : i32
    return %arg0, %c0_i32 : i32, i32
  }
}

</mosaic_0001>

<llo_original>
// kernel: tpu_custom_call.1
$region0: #{tpu_custom_call.1}
  #allocation0 [shape = 'u32[]', space=smem, size = 0x4, offset = 0x4, fixed_abs, tag = 'smem constant byte address 0x4 - core index']
  #allocation1 [shape = 'u32[144,128]{1,0:T(1,128)}', space=vmem, size = 0x12000, scoped, tag = 'internal scratch']
  %s0 = inlined_call_operand.hbm [shape: f32[16,8,256], index: 0, kind: input, shape index: {}]
  %s1 = inlined_call_operand.hbm [shape: f32[16,8,256], index: 1, kind: input, shape index: {}]
  %s2 = inlined_call_operand.hbm [shape: f32[256,256], index: 2, kind: output, shape index: {}]
  %s3 = sld [smem:[#allocation0]]
  $region49: #{tpu_custom_call.1} parent=0
    _
  %s5 = ssub.s32 1, %s3
  %s6 = scalar_select 0, %s5, %s3
  $region1: #{tpu_custom_call.1} parent=0
    #allocation2 [shape = 'u8[131072]{0}', space=vmem, size = 0x20000, scoped, tag = 'input window, operand 0']
    #allocation3 [shape = 's32[2]{0}', space=sflag, size = 0x8, scoped, tag = 'scoped memory for tpu_custom_call.1']
    #allocation4 [shape = 's32[2]{0}', space=sflag, size = 0x8, scoped, tag = 'scoped memory for tpu_custom_call.1']
    #allocation5 [shape = 'u8[131072]{0}', space=vmem, size = 0x20000, scoped, tag = 'input window, operand 1']
    #allocation6 [shape = 's32[2]{0}', space=sflag, size = 0x8, scoped, tag = 'scoped memory for tpu_custom_call.1']
    #allocation7 [shape = 'u8[262144]{0}', space=vmem, size = 0x40000, scoped, tag = 'output window, operand 0']
    %7 = vsyncpa [#allocation3], 0
    %s8 = scalar_lea.sflag [#allocation3], 1
    %9 = vsyncpa %s8, 0
    %10 = vsyncpa [#allocation6], 0
    %s11 = scalar_lea.sflag [#allocation6], 1
    %12 = vsyncpa %s11, 0
    %13 = vsyncpa [#allocation4], 0
    %s14 = scalar_lea.sflag [#allocation4], 1
    %15 = vsyncpa %s14, 0
    loop: start=0, step=1, limit=4
    $region2: #{tpu_custom_call.1} parent=1 // loop_pre_header
      _
    $region3: #{tpu_custom_call.1} parent=1 // loop_header
      %s17 = sphi 0, %s21
      %p18 = scmp.ge.s32.totalorder %s17, 4
      %s27 = sphi 0, %s29
      %s30 = sphi 0, %s27
      %s31 = sphi 0, %s30
      %s47 = sphi 0, %s31
      %s53 = sphi 0, %s55
      %s56 = sphi 0, %s53
      %s57 = sphi 0, %s56
      %s73 = sphi 0, %s57
      %s79 = sphi 0, %s81
      %s82 = sphi 0, %s79
      %s83 = sphi 0, %s82
      %s99 = sphi 0, %s83
    $region4: #{tpu_custom_call.1} parent=1 // loop_header_branch
      %20 = sbr.rel (%p18) target = $region8
    $region5: #{tpu_custom_call.1} parent=1 // loop_body
      %s22 = ssub.s32 %s17, 1
      %s23 = ssub.s32 %s17, 2
      %s24 = sadd.s32 %s17, 1
      %s25 = ssub.s32 %s17, %s24
      %p26 = scmp.eq.s32.totalorder %s25, 0
      %s28 = sadd.s32 %s27, 1
      %s29 = scalar_select %p26, %s27, %s28
      %p32 = pneg %p26
      %p33 = scmp.eq.s32.totalorder %s17, 1
      %p34 = por %p32, %p33
      %p35 = scmp.ne.s32.totalorder %s27, %s30
      %p36 = scmp.eq.s32.totalorder %s17, 0
      %p37 = por %p35, %p36
      %p38 = scmp.ne.s32.totalorder %s27, %s30
      %p39 = scmp.eq.s32.totalorder %s22, 1
      %p40 = por %p38, %p39
      %p41 = scmp.ne.s32.totalorder %s30, %s31
      %p42 = scmp.eq.s32.totalorder %s22, 0
      %p43 = por %p41, %p42
      %p44 = scmp.ne.s32.totalorder %s30, %s31
      %p45 = scmp.eq.s32.totalorder %s23, 1
      %p46 = por %p44, %p45
      %p48 = scmp.ne.s32.totalorder %s31, %s47
      %p49 = scmp.eq.s32.totalorder %s23, 0
      %p50 = por %p48, %p49
      %s51 = ssub.s32 %s17, %s24
      %p52 = scmp.eq.s32.totalorder %s51, 0
      %s54 = sadd.s32 %s53, 1
      %s55 = scalar_select %p52, %s53, %s54
      %p58 = pneg %p52
      %p59 = scmp.eq.s32.totalorder %s17, 1
      %p60 = por %p58, %p59
      %p61 = scmp.ne.s32.totalorder %s53, %s56
      %p62 = scmp.eq.s32.totalorder %s17, 0
      %p63 = por %p61, %p62
      %p64 = scmp.ne.s32.totalorder %s53, %s56
      %p65 = scmp.eq.s32.totalorder %s22, 1
      %p66 = por %p64, %p65
      %p67 = scmp.ne.s32.totalorder %s56, %s57
      %p68 = scmp.eq.s32.totalorder %s22, 0
      %p69 = por %p67, %p68
      %p70 = scmp.ne.s32.totalorder %s56, %s57
      %p71 = scmp.eq.s32.totalorder %s23, 1
      %p72 = por %p70, %p71
      %p74 = scmp.ne.s32.totalorder %s57, %s73
      %p75 = scmp.eq.s32.totalorder %s23, 0
      %p76 = por %p74, %p75
      %s77 = ssub.s32 %s17, %s24
      %p78 = scmp.eq.s32.totalorder %s77, 0
      %s80 = sadd.s32 %s79, 1
      %s81 = scalar_select %p78, %s79, %s80
      %p84 = pneg %p78
      %p85 = scmp.eq.s32.totalorder %s17, 1
      %p86 = por %p84, %p85
      %p87 = scmp.ne.s32.totalorder %s79, %s82
      %p88 = scmp.eq.s32.totalorder %s17, 0
      %p89 = por %p87, %p88
      %p90 = scmp.ne.s32.totalorder %s79, %s82
      %p91 = scmp.eq.s32.totalorder %s22, 1
      %p92 = por %p90, %p91
      %p93 = scmp.ne.s32.totalorder %s82, %s83
      %p94 = scmp.eq.s32.totalorder %s22, 0
      %p95 = por %p93, %p94
      %p96 = scmp.ne.s32.totalorder %s82, %s83
      %p97 = scmp.eq.s32.totalorder %s23, 1
      %p98 = por %p96, %p97
      %p100 = scmp.ne.s32.totalorder %s83, %s99
      %p101 = scmp.eq.s32.totalorder %s23, 0
      %p102 = por %p100, %p101
      %p103 = scmp.le.s32.totalorder 1, %s17
      %p104 = scmp.lt.s32.totalorder %s17, 3
      %p105 = pnand %p103, %p104
      %p106 = pneg %p105
      // Predicated region
      $region9: #{tpu_custom_call.1} parent=5 // pred_check
        _
      $region10: #{tpu_custom_call.1} parent=5 // pred_check_branch
        %108 = sbr.rel (%p105) target = $region12
      $region11: #{tpu_custom_call.1} parent=5 // pred_region
        %s109 = ssub.s32 %s17, 1
      $region12: #{tpu_custom_call.1} parent=5 // pred_fallthru
        _
      %p110 = scmp.lt.s32.totalorder %s17, 2
      // Predicated region
      $region13: #{tpu_custom_call.1} parent=5 // pred_check
        %p111 = pneg %p110
      $region14: #{tpu_custom_call.1} parent=5 // pred_check_branch
        %113 = sbr.rel (%p111) target = $region16
      $region15: #{tpu_custom_call.1} parent=5 // pred_region
        // Predicated region
        $region17: #{tpu_custom_call.1} parent=15 // pred_check
          %p114 = pneg %p37
        $region18: #{tpu_custom_call.1} parent=15 // pred_check_branch
          %116 = sbr.rel (%p114) target = $region20
        $region19: #{tpu_custom_call.1} parent=15 // pred_region
          %s117 = sand.u32 %s27, 1
          %s118 = scalar_lea.sflag [#allocation3], %s117
          %s119 = sand.u32 %s27, 1
          %s120 = smul.addr %s119, 128
          %s121 = scalar_lea.vmem [#allocation2], %s120
          %s123 = ssub.s32 2048, 2048
          %124 = vsyncadd %s118, %s123
          %s125 = smul.addr %s17, 128
          %s126 = scalar_lea.hbm %s0, %s125
          %s127 = sshll.u32 %s121, 4
          %s128 = int_to_ptr.vmem [resolvable:$true] %s127
          %133 = dma.hbm_to_vmem [thread:$0]  %s126, 2048, %s128, %s118, 256, 128, 8
        $region20: #{tpu_custom_call.1} parent=15 // pred_fallthru
          _
        // Predicated region
        $region21: #{tpu_custom_call.1} parent=15 // pred_check
          %p134 = pneg %p63
        $region22: #{tpu_custom_call.1} parent=15 // pred_check_branch
          %136 = sbr.rel (%p134) target = $region24
        $region23: #{tpu_custom_call.1} parent=15 // pred_region
          %s137 = sand.u32 %s53, 1
          %s138 = scalar_lea.sflag [#allocation6], %s137
          %s139 = sand.u32 %s53, 1
          %s140 = smul.addr %s139, 128
          %s141 = scalar_lea.vmem [#allocation5], %s140
          %s143 = ssub.s32 2048, 2048
          %144 = vsyncadd %s138, %s143
          %s145 = smul.addr %s17, 128
          %s146 = scalar_lea.hbm %s1, %s145
          %s147 = sshll.u32 %s141, 4
          %s148 = int_to_ptr.vmem [resolvable:$true] %s147
          %153 = dma.hbm_to_vmem [thread:$0]  %s146, 2048, %s148, %s138, 256, 128, 8
        $region24: #{tpu_custom_call.1} parent=15 // pred_fallthru
          _
      $region16: #{tpu_custom_call.1} parent=5 // pred_fallthru
        _
      %p154 = scmp.le.s32.totalorder 1, %s17
      %p155 = scmp.lt.s32.totalorder %s17, 3
      %p156 = pnand %p154, %p155
      %p157 = pneg %p156
      // Predicated region
      $region25: #{tpu_custom_call.1} parent=5 // pred_check
        _
      $region26: #{tpu_custom_call.1} parent=5 // pred_check_branch
        %159 = sbr.rel (%p156) target = $region28
      $region27: #{tpu_custom_call.1} parent=5 // pred_region
        %s160 = ssub.s32 %s17, 1
        %s161 = sand.u32 %s30, 1
        %s162 = scalar_lea.sflag [#allocation3], %s161
        %s163 = sand.u32 %s30, 1
        %s164 = smul.addr %s163, 128
        %s165 = scalar_lea.vmem [#allocation2], %s164
        // Predicated region
        $region29: #{tpu_custom_call.1} parent=27 // pred_check
          %p166 = pneg %p43
        $region30: #{tpu_custom_call.1} parent=27 // pred_check_branch
          %168 = sbr.rel (%p166) target = $region32
        $region31: #{tpu_custom_call.1} parent=27 // pred_region
          %169 = dma.done %s162, 2048
        $region32: #{tpu_custom_call.1} parent=27 // pred_fallthru
          _
        %s170 = sand.u32 %s56, 1
        %s171 = scalar_lea.sflag [#allocation6], %s170
        %s172 = sand.u32 %s56, 1
        %s173 = smul.addr %s172, 128
        %s174 = scalar_lea.vmem [#allocation5], %s173
        // Predicated region
        $region33: #{tpu_custom_call.1} parent=27 // pred_check
          %p175 = pneg %p69
        $region34: #{tpu_custom_call.1} parent=27 // pred_check_branch
          %177 = sbr.rel (%p175) target = $region36
        $region35: #{tpu_custom_call.1} parent=27 // pred_region
          %178 = dma.done %s171, 2048
        $region36: #{tpu_custom_call.1} parent=27 // pred_fallthru
          _
        %s179 = sand.u32 %s30, 1
        %s180 = scalar_lea.sflag [#allocation3], %s179
        %s181 = sand.u32 %s30, 1
        %s182 = smul.addr %s181, 128
        %s183 = scalar_lea.vmem [#allocation2], %s182
        %p184 = pneg %p43
        %p185 = pneg %p40
        %s186 = sand.u32 %s56, 1
        %s187 = scalar_lea.sflag [#allocation6], %s186
        %s188 = sand.u32 %s56, 1
        %s189 = smul.addr %s188, 128
        %s190 = scalar_lea.vmem [#allocation5], %s189
        %p191 = pneg %p69
        %p192 = pneg %p66
        %p193 = pneg %p95
        %p194 = pneg %p92
        %s195 = sand.u32 %s82, 1
        %s196 = scalar_lea.sflag [#allocation4], %s195
        %s197 = sand.u32 %s82, 1
        %s198 = smul.addr %s197, 256
        %s199 = scalar_lea.vmem [#allocation7], %s198
        %s200 = smul.u32 16, %s22
        %v201 = vld [vmem:[%s165] sm:$0x1]
        %v202 = vld [vmem:[%s174] sm:$0xff]
        %v203 = vlaneseq
        %v204 = vshrl.u32 %v203, 7
        %v205 = vsub.s32 0, %v204
        %v206 = vrot.slane %v201, %v205
        %v207 = vmul.f32 %v206, %v202
        %v208 = vld [vmem:[%s165 + $0x1] sm:$0x1]
        %v209 = vlaneseq
        %v210 = vshrl.u32 %v209, 7
        %v211 = vsub.s32 0, %v210
        %v212 = vrot.slane %v208, %v211
        %v213 = vmul.f32 %v212, %v202
        %v214 = vld [vmem:[%s165 + $0x2] sm:$0x1]
        %v215 = vlaneseq
        %v216 = vshrl.u32 %v215, 7
        %v217 = vsub.s32 0, %v216
        %v218 = vrot.slane %v214, %v217
        %v219 = vmul.f32 %v218, %v202
        %v220 = vld [vmem:[%s165 + $0x3] sm:$0x1]
        %v221 = vlaneseq
        %v222 = vshrl.u32 %v221, 7
        %v223 = vsub.s32 0, %v222
        %v224 = vrot.slane %v220, %v223
        %v225 = vmul.f32 %v224, %v202
        %v226 = vld [vmem:[%s165 + $0x4] sm:$0x1]
        %v227 = vlaneseq
        %v228 = vshrl.u32 %v227, 7
        %v229 = vsub.s32 0, %v228
        %v230 = vrot.slane %v226, %v229
        %v231 = vmul.f32 %v230, %v202
        %v232 = vld [vmem:[%s165 + $0x5] sm:$0x1]
        %v233 = vlaneseq
        %v234 = vshrl.u32 %v233, 7
        %v235 = vsub.s32 0, %v234
        %v236 = vrot.slane %v232, %v235
        %v237 = vmul.f32 %v236, %v202
        %v238 = vld [vmem:[%s165 + $0x6] sm:$0x1]
        %v239 = vlaneseq
        %v240 = vshrl.u32 %v239, 7
        %v241 = vsub.s32 0, %v240
        %v242 = vrot.slane %v238, %v241
        %v243 = vmul.f32 %v242, %v202
        %v244 = vld [vmem:[%s165 + $0x7] sm:$0x1]
        %v245 = vlaneseq
        %v246 = vshrl.u32 %v245, 7
        %v247 = vsub.s32 0, %v246
        %v248 = vrot.slane %v244, %v247
        %v249 = vmul.f32 %v248, %v202
        %s250 = scalar_lea.vmem %s165, 8 [#allocation2]
        %v251 = vld [vmem:[%s250] sm:$0x1]
        %s252 = scalar_lea.vmem %s174, 8 [#allocation5]
        %v253 = vld [vmem:[%s252] sm:$0xff]
        %v254 = vlaneseq
        %v255 = vshrl.u32 %v254, 7
        %v256 = vsub.s32 0, %v255
        %v257 = vrot.slane %v251, %v256
        %v258 = vmul.f32 %v257, %v253
        %s259 = scalar_lea.vmem %s165, 16 [#allocation2]
        %v260 = vld [vmem:[%s259] sm:$0x1]
        %s261 = scalar_lea.vmem %s174, 16 [#allocation5]
        %v262 = vld [vmem:[%s261] sm:$0xff]
        %v263 = vlaneseq
        %v264 = vshrl.u32 %v263, 7
        %v265 = vsub.s32 0, %v264
        %v266 = vrot.slane %v260, %v265
        %v267 = vmul.f32 %v266, %v262
        %v268 = vadd.f32 %v258, %v267
        %s269 = scalar_lea.vmem %s165, 24 [#allocation2]
        %v270 = vld [vmem:[%s269] sm:$0x1]
        %s271 = scalar_lea.vmem %s174, 24 [#allocation5]
        %v272 = vld [vmem:[%s271] sm:$0xff]
        %v273 = vlaneseq
        %v274 = vshrl.u32 %v273, 7
        %v275 = vsub.s32 0, %v274
        %v276 = vrot.slane %v270, %v275
        %v277 = vmul.f32 %v276, %v272
        %v278 = vadd.f32 %v268, %v277
        %v279 = vmul.f32 %v278, 0.57735026
        %v280 = vld [vmem:[%s250 + $0x1] sm:$0x1]
        %v281 = vlaneseq
        %v282 = vshrl.u32 %v281, 7
        %v283 = vsub.s32 0, %v282
        %v284 = vrot.slane %v280, %v283
        %v285 = vmul.f32 %v284, %v253
        %v286 = vld [vmem:[%s259 + $0x1] sm:$0x1]
        %v287 = vlaneseq
        %v288 = vshrl.u32 %v287, 7
        %v289 = vsub.s32 0, %v288
        %v290 = vrot.slane %v286, %v289
        %v291 = vmul.f32 %v290, %v262
        %v292 = vadd.f32 %v285, %v291
        %v293 = vld [vmem:[%s269 + $0x1] sm:$0x1]
        %v294 = vlaneseq
        %v295 = vshrl.u32 %v294, 7
        %v296 = vsub.s32 0, %v295
        %v297 = vrot.slane %v293, %v296
        %v298 = vmul.f32 %v297, %v272
        %v299 = vadd.f32 %v292, %v298
        %v300 = vmul.f32 %v299, 0.57735026
        %v301 = vld [vmem:[%s250 + $0x2] sm:$0x1]
        %v302 = vlaneseq
        %v303 = vshrl.u32 %v302, 7
        %v304 = vsub.s32 0, %v303
        %v305 = vrot.slane %v301, %v304
        %v306 = vmul.f32 %v305, %v253
        %v307 = vld [vmem:[%s259 + $0x2] sm:$0x1]
        %v308 = vlaneseq
        %v309 = vshrl.u32 %v308, 7
        %v310 = vsub.s32 0, %v309
        %v311 = vrot.slane %v307, %v310
        %v312 = vmul.f32 %v311, %v262
        %v313 = vadd.f32 %v306, %v312
        %v314 = vld [vmem:[%s269 + $0x2] sm:$0x1]
        %v315 = vlaneseq
        %v316 = vshrl.u32 %v315, 7
        %v317 = vsub.s32 0, %v316
        %v318 = vrot.slane %v314, %v317
        %v319 = vmul.f32 %v318, %v272
        %v320 = vadd.f32 %v313, %v319
        %v321 = vmul.f32 %v320, 0.57735026
        %v322 = vld [vmem:[%s250 + $0x3] sm:$0x1]
        %v323 = vlaneseq
        %v324 = vshrl.u32 %v323, 7
        %v325 = vsub.s32 0, %v324
        %v326 = vrot.slane %v322, %v325
        %v327 = vmul.f32 %v326, %v253
        %v328 = vld [vmem:[%s259 + $0x3] sm:$0x1]
        %v329 = vlaneseq
        %v330 = vshrl.u32 %v329, 7
        %v331 = vsub.s32 0, %v330
        %v332 = vrot.slane %v328, %v331
        %v333 = vmul.f32 %v332, %v262
        %v334 = vadd.f32 %v327, %v333
        %v335 = vld [vmem:[%s269 + $0x3] sm:$0x1]
        %v336 = vlaneseq
        %v337 = vshrl.u32 %v336, 7
        %v338 = vsub.s32 0, %v337
        %v339 = vrot.slane %v335, %v338
        %v340 = vmul.f32 %v339, %v272
        %v341 = vadd.f32 %v334, %v340
        %v342 = vmul.f32 %v341, 0.57735026
        %v343 = vld [vmem:[%s250 + $0x4] sm:$0x1]
        %v344 = vlaneseq
        %v345 = vshrl.u32 %v344, 7
        %v346 = vsub.s32 0, %v345
        %v347 = vrot.slane %v343, %v346
        %v348 = vmul.f32 %v347, %v253
        %v349 = vld [vmem:[%s259 + $0x4] sm:$0x1]
        %v350 = vlaneseq
        %v351 = vshrl.u32 %v350, 7
        %v352 = vsub.s32 0, %v351
        %v353 = vrot.slane %v349, %v352
        %v354 = vmul.f32 %v353, %v262
        %v355 = vadd.f32 %v348, %v354
        %v356 = vld [vmem:[%s269 + $0x4] sm:$0x1]
        %v357 = vlaneseq
        %v358 = vshrl.u32 %v357, 7
        %v359 = vsub.s32 0, %v358
        %v360 = vrot.slane %v356, %v359
        %v361 = vmul.f32 %v360, %v272
        %v362 = vadd.f32 %v355, %v361
        %v363 = vmul.f32 %v362, 0.57735026
        %v364 = vld [vmem:[%s250 + $0x5] sm:$0x1]
        %v365 = vlaneseq
        %v366 = vshrl.u32 %v365, 7
        %v367 = vsub.s32 0, %v366
        %v368 = vrot.slane %v364, %v367
        %v369 = vmul.f32 %v368, %v253
        %v370 = vld [vmem:[%s259 + $0x5] sm:$0x1]
        %v371 = vlaneseq
        %v372 = vshrl.u32 %v371, 7
        %v373 = vsub.s32 0, %v372
        %v374 = vrot.slane %v370, %v373
        %v375 = vmul.f32 %v374, %v262
        %v376 = vadd.f32 %v369, %v375
        %v377 = vld [vmem:[%s269 + $0x5] sm:$0x1]
        %v378 = vlaneseq
        %v379 = vshrl.u32 %v378, 7
        %v380 = vsub.s32 0, %v379
        %v381 = vrot.slane %v377, %v380
        %v382 = vmul.f32 %v381, %v272
        %v383 = vadd.f32 %v376, %v382
        %v384 = vmul.f32 %v383, 0.57735026
        %v385 = vld [vmem:[%s250 + $0x6] sm:$0x1]
        %v386 = vlaneseq
        %v387 = vshrl.u32 %v386, 7
        %v388 = vsub.s32 0, %v387
        %v389 = vrot.slane %v385, %v388
        %v390 = vmul.f32 %v389, %v253
        %v391 = vld [vmem:[%s259 + $0x6] sm:$0x1]
        %v392 = vlaneseq
        %v393 = vshrl.u32 %v392, 7
        %v394 = vsub.s32 0, %v393
        %v395 = vrot.slane %v391, %v394
        %v396 = vmul.f32 %v395, %v262
        %v397 = vadd.f32 %v390, %v396
        %v398 = vld [vmem:[%s269 + $0x6] sm:$0x1]
        %v399 = vlaneseq
        %v400 = vshrl.u32 %v399, 7
        %v401 = vsub.s32 0, %v400
        %v402 = vrot.slane %v398, %v401
        %v403 = vmul.f32 %v402, %v272
        %v404 = vadd.f32 %v397, %v403
        %v405 = vmul.f32 %v404, 0.57735026
        %v406 = vld [vmem:[%s250 + $0x7] sm:$0x1]
        %v407 = vlaneseq
        %v408 = vshrl.u32 %v407, 7
        %v409 = vsub.s32 0, %v408
        %v410 = vrot.slane %v406, %v409
        %v411 = vmul.f32 %v410, %v253
        %v412 = vld [vmem:[%s259 + $0x7] sm:$0x1]
        %v413 = vlaneseq
        %v414 = vshrl.u32 %v413, 7
        %v415 = vsub.s32 0, %v414
        %v416 = vrot.slane %v412, %v415
        %v417 = vmul.f32 %v416, %v262
        %v418 = vadd.f32 %v411, %v417
        %v419 = vld [vmem:[%s269 + $0x7] sm:$0x1]
        %v420 = vlaneseq
        %v421 = vshrl.u32 %v420, 7
        %v422 = vsub.s32 0, %v421
        %v423 = vrot.slane %v419, %v422
        %v424 = vmul.f32 %v423, %v272
        %v425 = vadd.f32 %v418, %v424
        %v426 = vmul.f32 %v425, 0.57735026
        %427 = vxpose.xlu0.b32.start [1/16] %v207, 128
        %428 = vxpose.xlu0.b32.cont [2/16] %v213, 128
        %429 = vxpose.xlu0.b32.cont [3/16] %v219, 128
        %430 = vxpose.xlu0.b32.cont [4/16] %v225, 128
        %431 = vxpose.xlu0.b32.cont [5/16] %v231, 128
        %432 = vxpose.xlu0.b32.cont [6/16] %v237, 128
        %433 = vxpose.xlu0.b32.cont [7/16] %v243, 128
        %434 = vxpose.xlu0.b32.cont [8/16] %v249, 128
        %435 = vxpose.xlu0.b32.cont [9/16] %v279, 128
        %436 = vxpose.xlu0.b32.cont [10/16] %v300, 128
        %437 = vxpose.xlu0.b32.cont [11/16] %v321, 128
        %438 = vxpose.xlu0.b32.cont [12/16] %v342, 128
        %439 = vxpose.xlu0.b32.cont [13/16] %v363, 128
        %440 = vxpose.xlu0.b32.cont [14/16] %v384, 128
        %441 = vxpose.xlu0.b32.cont [15/16] %v405, 128
        %442 = vxpose.xlu0.b32.end [16/16] %v426, 128
        %v443 = vpop.trf.xlu0
        %v444 = vpop.trf.xlu0
        %v445 = vpop.trf.xlu0
        %v446 = vpop.trf.xlu0
        %v447 = vpop.trf.xlu0
        %v448 = vpop.trf.xlu0
        %v449 = vpop.trf.xlu0
        %v450 = vpop.trf.xlu0
        %v451 = vpop.trf.xlu0
        %v452 = vpop.trf.xlu0
        %v453 = vpop.trf.xlu0
        %v454 = vpop.trf.xlu0
        %v455 = vpop.trf.xlu0
        %v456 = vpop.trf.xlu0
        %v457 = vpop.trf.xlu0
        %v458 = vpop.trf.xlu0
        %459 = vst [vmem:[%s199] sm:$0xff] %v443
        %460 = vst [vmem:[%s199 + $0x10] sm:$0xff] %v444
        %461 = vst [vmem:[%s199 + $0x20] sm:$0xff] %v445
        %462 = vst [vmem:[%s199 + $0x30] sm:$0xff] %v446
        %463 = vst [vmem:[%s199 + $0x40] sm:$0xff] %v447
        %464 = vst [vmem:[%s199 + $0x50] sm:$0xff] %v448
        %465 = vst [vmem:[%s199 + $0x60] sm:$0xff] %v449
        %466 = vst [vmem:[%s199 + $0x70] sm:$0xff] %v450
        %467 = vst [vmem:[%s199 + $0x80] sm:$0xff] %v451
        %468 = vst [vmem:[%s199 + $0x90] sm:$0xff] %v452
        %469 = vst [vmem:[%s199 + $0xa0] sm:$0xff] %v453
        %470 = vst [vmem:[%s199 + $0xb0] sm:$0xff] %v454
        %471 = vst [vmem:[%s199 + $0xc0] sm:$0xff] %v455
        %472 = vst [vmem:[%s199 + $0xd0] sm:$0xff] %v456
        %473 = vst [vmem:[%s199 + $0xe0] sm:$0xff] %v457
        %474 = vst [vmem:[%s199 + $0xf0] sm:$0xff] %v458
        %s475 = scalar_lea.vmem %s165, 32 [#allocation2]
        %v476 = vld [vmem:[%s475] sm:$0x1]
        %s477 = scalar_lea.vmem %s174, 32 [#allocation5]
        %v478 = vld [vmem:[%s477] sm:$0xff]
        %v479 = vlaneseq
        %v480 = vshrl.u32 %v479, 7
        %v481 = vsub.s32 0, %v480
        %v482 = vrot.slane %v476, %v481
        %v483 = vmul.f32 %v482, %v478
        %s484 = scalar_lea.vmem %s165, 40 [#allocation2]
        %v485 = vld [vmem:[%s484] sm:$0x1]
        %s486 = scalar_lea.vmem %s174, 40 [#allocation5]
        %v487 = vld [vmem:[%s486] sm:$0xff]
        %v488 = vlaneseq
        %v489 = vshrl.u32 %v488, 7
        %v490 = vsub.s32 0, %v489
        %v491 = vrot.slane %v485, %v490
        %v492 = vmul.f32 %v491, %v487
        %v493 = vadd.f32 %v483, %v492
        %s494 = scalar_lea.vmem %s165, 48 [#allocation2]
        %v495 = vld [vmem:[%s494] sm:$0x1]
        %s496 = scalar_lea.vmem %s174, 48 [#allocation5]
        %v497 = vld [vmem:[%s496] sm:$0xff]
        %v498 = vlaneseq
        %v499 = vshrl.u32 %v498, 7
        %v500 = vsub.s32 0, %v499
        %v501 = vrot.slane %v495, %v500
        %v502 = vmul.f32 %v501, %v497
        %v503 = vadd.f32 %v493, %v502
        %s504 = scalar_lea.vmem %s165, 56 [#allocation2]
        %v505 = vld [vmem:[%s504] sm:$0x1]
        %s506 = scalar_lea.vmem %s174, 56 [#allocation5]
        %v507 = vld [vmem:[%s506] sm:$0xff]
        %v508 = vlaneseq
        %v509 = vshrl.u32 %v508, 7
        %v510 = vsub.s32 0, %v509
        %v511 = vrot.slane %v505, %v510
        %v512 = vmul.f32 %v511, %v507
        %v513 = vadd.f32 %v503, %v512
        %s514 = scalar_lea.vmem %s165, 64 [#allocation2]
        %v515 = vld [vmem:[%s514] sm:$0x1]
        %s516 = scalar_lea.vmem %s174, 64 [#allocation5]
        %v517 = vld [vmem:[%s516] sm:$0xff]
        %v518 = vlaneseq
        %v519 = vshrl.u32 %v518, 7
        %v520 = vsub.s32 0, %v519
        %v521 = vrot.slane %v515, %v520
        %v522 = vmul.f32 %v521, %v517
        %v523 = vadd.f32 %v513, %v522
        %v524 = vmul.f32 %v523, 0.4472136
        %v525 = vld [vmem:[%s475 + $0x1] sm:$0x1]
        %v526 = vlaneseq
        %v527 = vshrl.u32 %v526, 7
        %v528 = vsub.s32 0, %v527
        %v529 = vrot.slane %v525, %v528
        %v530 = vmul.f32 %v529, %v478
        %v531 = vld [vmem:[%s484 + $0x1] sm:$0x1]
        %v532 = vlaneseq
        %v533 = vshrl.u32 %v532, 7
        %v534 = vsub.s32 0, %v533
        %v535 = vrot.slane %v531, %v534
        %v536 = vmul.f32 %v535, %v487
        %v537 = vadd.f32 %v530, %v536
        %v538 = vld [vmem:[%s494 + $0x1] sm:$0x1]
        %v539 = vlaneseq
        %v540 = vshrl.u32 %v539, 7
        %v541 = vsub.s32 0, %v540
        %v542 = vrot.slane %v538, %v541
        %v543 = vmul.f32 %v542, %v497
        %v544 = vadd.f32 %v537, %v543
        %v545 = vld [vmem:[%s504 + $0x1] sm:$0x1]
        %v546 = vlaneseq
        %v547 = vshrl.u32 %v546, 7
        %v548 = vsub.s32 0, %v547
        %v549 = vrot.slane %v545, %v548
        %v550 = vmul.f32 %v549, %v507
        %v551 = vadd.f32 %v544, %v550
        %v552 = vld [vmem:[%s514 + $0x1] sm:$0x1]
        %v553 = vlaneseq
        %v554 = vshrl.u32 %v553, 7
        %v555 = vsub.s32 0, %v554
        %v556 = vrot.slane %v552, %v555
        %v557 = vmul.f32 %v556, %v517
        %v558 = vadd.f32 %v551, %v557
        %v559 = vmul.f32 %v558, 0.4472136
        %v560 = vld [vmem:[%s475 + $0x2] sm:$0x1]
        %v561 = vlaneseq
        %v562 = vshrl.u32 %v561, 7
        %v563 = vsub.s32 0, %v562
        %v564 = vrot.slane %v560, %v563
        %v565 = vmul.f32 %v564, %v478
        %v566 = vld [vmem:[%s484 + $0x2] sm:$0x1]
        %v567 = vlaneseq
        %v568 = vshrl.u32 %v567, 7
        %v569 = vsub.s32 0, %v568
        %v570 = vrot.slane %v566, %v569
        %v571 = vmul.f32 %v570, %v487
        %v572 = vadd.f32 %v565, %v571
        %v573 = vld [vmem:[%s494 + $0x2] sm:$0x1]
        %v574 = vlaneseq
        %v575 = vshrl.u32 %v574, 7
        %v576 = vsub.s32 0, %v575
        %v577 = vrot.slane %v573, %v576
        %v578 = vmul.f32 %v577, %v497
        %v579 = vadd.f32 %v572, %v578
        %v580 = vld [vmem:[%s504 + $0x2] sm:$0x1]
        %v581 = vlaneseq
        %v582 = vshrl.u32 %v581, 7
        %v583 = vsub.s32 0, %v582
        %v584 = vrot.slane %v580, %v583
        %v585 = vmul.f32 %v584, %v507
        %v586 = vadd.f32 %v579, %v585
        %v587 = vld [vmem:[%s514 + $0x2] sm:$0x1]
        %v588 = vlaneseq
        %v589 = vshrl.u32 %v588, 7
        %v590 = vsub.s32 0, %v589
        %v591 = vrot.slane %v587, %v590
        %v592 = vmul.f32 %v591, %v517
        %v593 = vadd.f32 %v586, %v592
        %v594 = vmul.f32 %v593, 0.4472136
        %v595 = vld [vmem:[%s475 + $0x3] sm:$0x1]
        %v596 = vlaneseq
        %v597 = vshrl.u32 %v596, 7
        %v598 = vsub.s32 0, %v597
        %v599 = vrot.slane %v595, %v598
        %v600 = vmul.f32 %v599, %v478
        %v601 = vld [vmem:[%s484 + $0x3] sm:$0x1]
        %v602 = vlaneseq
        %v603 = vshrl.u32 %v602, 7
        %v604 = vsub.s32 0, %v603
        %v605 = vrot.slane %v601, %v604
        %v606 = vmul.f32 %v605, %v487
        %v607 = vadd.f32 %v600, %v606
        %v608 = vld [vmem:[%s494 + $0x3] sm:$0x1]
        %v609 = vlaneseq
        %v610 = vshrl.u32 %v609, 7
        %v611 = vsub.s32 0, %v610
        %v612 = vrot.slane %v608, %v611
        %v613 = vmul.f32 %v612, %v497
        %v614 = vadd.f32 %v607, %v613
        %v615 = vld [vmem:[%s504 + $0x3] sm:$0x1]
        %v616 = vlaneseq
        %v617 = vshrl.u32 %v616, 7
        %v618 = vsub.s32 0, %v617
        %v619 = vrot.slane %v615, %v618
        %v620 = vmul.f32 %v619, %v507
        %v621 = vadd.f32 %v614, %v620
        %v622 = vld [vmem:[%s514 + $0x3] sm:$0x1]
        %v623 = vlaneseq
        %v624 = vshrl.u32 %v623, 7
        %v625 = vsub.s32 0, %v624
        %v626 = vrot.slane %v622, %v625
        %v627 = vmul.f32 %v626, %v517
        %v628 = vadd.f32 %v621, %v627
        %v629 = vmul.f32 %v628, 0.4472136
        %v630 = vld [vmem:[%s475 + $0x4] sm:$0x1]
        %v631 = vlaneseq
        %v632 = vshrl.u32 %v631, 7
        %v633 = vsub.s32 0, %v632
        %v634 = vrot.slane %v630, %v633
        %v635 = vmul.f32 %v634, %v478
        %v636 = vld [vmem:[%s484 + $0x4] sm:$0x1]
        %v637 = vlaneseq
        %v638 = vshrl.u32 %v637, 7
        %v639 = vsub.s32 0, %v638
        %v640 = vrot.slane %v636, %v639
        %v641 = vmul.f32 %v640, %v487
        %v642 = vadd.f32 %v635, %v641
        %v643 = vld [vmem:[%s494 + $0x4] sm:$0x1]
        %v644 = vlaneseq
        %v645 = vshrl.u32 %v644, 7
        %v646 = vsub.s32 0, %v645
        %v647 = vrot.slane %v643, %v646
        %v648 = vmul.f32 %v647, %v497
        %v649 = vadd.f32 %v642, %v648
        %v650 = vld [vmem:[%s504 + $0x4] sm:$0x1]
        %v651 = vlaneseq
        %v652 = vshrl.u32 %v651, 7
        %v653 = vsub.s32 0, %v652
        %v654 = vrot.slane %v650, %v653
        %v655 = vmul.f32 %v654, %v507
        %v656 = vadd.f32 %v649, %v655
        %v657 = vld [vmem:[%s514 + $0x4] sm:$0x1]
        %v658 = vlaneseq
        %v659 = vshrl.u32 %v658, 7
        %v660 = vsub.s32 0, %v659
        %v661 = vrot.slane %v657, %v660
        %v662 = vmul.f32 %v661, %v517
        %v663 = vadd.f32 %v656, %v662
        %v664 = vmul.f32 %v663, 0.4472136
        %v665 = vld [vmem:[%s475 + $0x5] sm:$0x1]
        %v666 = vlaneseq
        %v667 = vshrl.u32 %v666, 7
        %v668 = vsub.s32 0, %v667
        %v669 = vrot.slane %v665, %v668
        %v670 = vmul.f32 %v669, %v478
        %v671 = vld [vmem:[%s484 + $0x5] sm:$0x1]
        %v672 = vlaneseq
        %v673 = vshrl.u32 %v672, 7
        %v674 = vsub.s32 0, %v673
        %v675 = vrot.slane %v671, %v674
        %v676 = vmul.f32 %v675, %v487
        %v677 = vadd.f32 %v670, %v676
        %v678 = vld [vmem:[%s494 + $0x5] sm:$0x1]
        %v679 = vlaneseq
        %v680 = vshrl.u32 %v679, 7
        %v681 = vsub.s32 0, %v680
        %v682 = vrot.slane %v678, %v681
        %v683 = vmul.f32 %v682, %v497
        %v684 = vadd.f32 %v677, %v683
        %v685 = vld [vmem:[%s504 + $0x5] sm:$0x1]
        %v686 = vlaneseq
        %v687 = vshrl.u32 %v686, 7
        %v688 = vsub.s32 0, %v687
        %v689 = vrot.slane %v685, %v688
        %v690 = vmul.f32 %v689, %v507
        %v691 = vadd.f32 %v684, %v690
        %v692 = vld [vmem:[%s514 + $0x5] sm:$0x1]
        %v693 = vlaneseq
        %v694 = vshrl.u32 %v693, 7
        %v695 = vsub.s32 0, %v694
        %v696 = vrot.slane %v692, %v695
        %v697 = vmul.f32 %v696, %v517
        %v698 = vadd.f32 %v691, %v697
        %v699 = vmul.f32 %v698, 0.4472136
        %v700 = vld [vmem:[%s475 + $0x6] sm:$0x1]
        %v701 = vlaneseq
        %v702 = vshrl.u32 %v701, 7
        %v703 = vsub.s32 0, %v702
        %v704 = vrot.slane %v700, %v703
        %v705 = vmul.f32 %v704, %v478
        %v706 = vld [vmem:[%s484 + $0x6] sm:$0x1]
        %v707 = vlaneseq
        %v708 = vshrl.u32 %v707, 7
        %v709 = vsub.s32 0, %v708
        %v710 = vrot.slane %v706, %v709
        %v711 = vmul.f32 %v710, %v487
        %v712 = vadd.f32 %v705, %v711
        %v713 = vld [vmem:[%s494 + $0x6] sm:$0x1]
        %v714 = vlaneseq
        %v715 = vshrl.u32 %v714, 7
        %v716 = vsub.s32 0, %v715
        %v717 = vrot.slane %v713, %v716
        %v718 = vmul.f32 %v717, %v497
        %v719 = vadd.f32 %v712, %v718
        %v720 = vld [vmem:[%s504 + $0x6] sm:$0x1]
        %v721 = vlaneseq
        %v722 = vshrl.u32 %v721, 7
        %v723 = vsub.s32 0, %v722
        %v724 = vrot.slane %v720, %v723
        %v725 = vmul.f32 %v724, %v507
        %v726 = vadd.f32 %v719, %v725
        %v727 = vld [vmem:[%s514 + $0x6] sm:$0x1]
        %v728 = vlaneseq
        %v729 = vshrl.u32 %v728, 7
        %v730 = vsub.s32 0, %v729
        %v731 = vrot.slane %v727, %v730
        %v732 = vmul.f32 %v731, %v517
        %v733 = vadd.f32 %v726, %v732
        %v734 = vmul.f32 %v733, 0.4472136
        %v735 = vld [vmem:[%s475 + $0x7] sm:$0x1]
        %v736 = vlaneseq
        %v737 = vshrl.u32 %v736, 7
        %v738 = vsub.s32 0, %v737
        %v739 = vrot.slane %v735, %v738
        %v740 = vmul.f32 %v739, %v478
        %v741 = vld [vmem:[%s484 + $0x7] sm:$0x1]
        %v742 = vlaneseq
        %v743 = vshrl.u32 %v742, 7
        %v744 = vsub.s32 0, %v743
        %v745 = vrot.slane %v741, %v744
        %v746 = vmul.f32 %v745, %v487
        %v747 = vadd.f32 %v740, %v746
        %v748 = vld [vmem:[%s494 + $0x7] sm:$0x1]
        %v749 = vlaneseq
        %v750 = vshrl.u32 %v749, 7
        %v751 = vsub.s32 0, %v750
        %v752 = vrot.slane %v748, %v751
        %v753 = vmul.f32 %v752, %v497
        %v754 = vadd.f32 %v747, %v753
        %v755 = vld [vmem:[%s504 + $0x7] sm:$0x1]
        %v756 = vlaneseq
        %v757 = vshrl.u32 %v756, 7
        %v758 = vsub.s32 0, %v757
        %v759 = vrot.slane %v755, %v758
        %v760 = vmul.f32 %v759, %v507
        %v761 = vadd.f32 %v754, %v760
        %v762 = vld [vmem:[%s514 + $0x7] sm:$0x1]
        %v763 = vlaneseq
        %v764 = vshrl.u32 %v763, 7
        %v765 = vsub.s32 0, %v764
        %v766 = vrot.slane %v762, %v765
        %v767 = vmul.f32 %v766, %v517
        %v768 = vadd.f32 %v761, %v767
        %v769 = vmul.f32 %v768, 0.4472136
        %s770 = scalar_lea.vmem %s165, 72 [#allocation2]
        %v771 = vld [vmem:[%s770] sm:$0x1]
        %s772 = scalar_lea.vmem %s174, 72 [#allocation5]
        %v773 = vld [vmem:[%s772] sm:$0xff]
        %v774 = vlaneseq
        %v775 = vshrl.u32 %v774, 7
        %v776 = vsub.s32 0, %v775
        %v777 = vrot.slane %v771, %v776
        %v778 = vmul.f32 %v777, %v773
        %s779 = scalar_lea.vmem %s165, 80 [#allocation2]
        %v780 = vld [vmem:[%s779] sm:$0x1]
        %s781 = scalar_lea.vmem %s174, 80 [#allocation5]
        %v782 = vld [vmem:[%s781] sm:$0xff]
        %v783 = vlaneseq
        %v784 = vshrl.u32 %v783, 7
        %v785 = vsub.s32 0, %v784
        %v786 = vrot.slane %v780, %v785
        %v787 = vmul.f32 %v786, %v782
        %v788 = vadd.f32 %v778, %v787
        %s789 = scalar_lea.vmem %s165, 88 [#allocation2]
        %v790 = vld [vmem:[%s789] sm:$0x1]
        %s791 = scalar_lea.vmem %s174, 88 [#allocation5]
        %v792 = vld [vmem:[%s791] sm:$0xff]
        %v793 = vlaneseq
        %v794 = vshrl.u32 %v793, 7
        %v795 = vsub.s32 0, %v794
        %v796 = vrot.slane %v790, %v795
        %v797 = vmul.f32 %v796, %v792
        %v798 = vadd.f32 %v788, %v797
        %s799 = scalar_lea.vmem %s165, 96 [#allocation2]
        %v800 = vld [vmem:[%s799] sm:$0x1]
        %s801 = scalar_lea.vmem %s174, 96 [#allocation5]
        %v802 = vld [vmem:[%s801] sm:$0xff]
        %v803 = vlaneseq
        %v804 = vshrl.u32 %v803, 7
        %v805 = vsub.s32 0, %v804
        %v806 = vrot.slane %v800, %v805
        %v807 = vmul.f32 %v806, %v802
        %v808 = vadd.f32 %v798, %v807
        %s809 = scalar_lea.vmem %s165, 104 [#allocation2]
        %v810 = vld [vmem:[%s809] sm:$0x1]
        %s811 = scalar_lea.vmem %s174, 104 [#allocation5]
        %v812 = vld [vmem:[%s811] sm:$0xff]
        %v813 = vlaneseq
        %v814 = vshrl.u32 %v813, 7
        %v815 = vsub.s32 0, %v814
        %v816 = vrot.slane %v810, %v815
        %v817 = vmul.f32 %v816, %v812
        %v818 = vadd.f32 %v808, %v817
        %s819 = scalar_lea.vmem %s165, 112 [#allocation2]
        %v820 = vld [vmem:[%s819] sm:$0x1]
        %s821 = scalar_lea.vmem %s174, 112 [#allocation5]
        %v822 = vld [vmem:[%s821] sm:$0xff]
        %v823 = vlaneseq
        %v824 = vshrl.u32 %v823, 7
        %v825 = vsub.s32 0, %v824
        %v826 = vrot.slane %v820, %v825
        %v827 = vmul.f32 %v826, %v822
        %v828 = vadd.f32 %v818, %v827
        %s829 = scalar_lea.vmem %s165, 120 [#allocation2]
        %v830 = vld [vmem:[%s829] sm:$0x1]
        %s831 = scalar_lea.vmem %s174, 120 [#allocation5]
        %v832 = vld [vmem:[%s831] sm:$0xff]
        %v833 = vlaneseq
        %v834 = vshrl.u32 %v833, 7
        %v835 = vsub.s32 0, %v834
        %v836 = vrot.slane %v830, %v835
        %v837 = vmul.f32 %v836, %v832
        %v838 = vadd.f32 %v828, %v837
        %v839 = vmul.f32 %v838, 0.37796447
        %v840 = vld [vmem:[%s770 + $0x1] sm:$0x1]
        %v841 = vlaneseq
        %v842 = vshrl.u32 %v841, 7
        %v843 = vsub.s32 0, %v842
        %v844 = vrot.slane %v840, %v843
        %v845 = vmul.f32 %v844, %v773
        %v846 = vld [vmem:[%s779 + $0x1] sm:$0x1]
        %v847 = vlaneseq
        %v848 = vshrl.u32 %v847, 7
        %v849 = vsub.s32 0, %v848
        %v850 = vrot.slane %v846, %v849
        %v851 = vmul.f32 %v850, %v782
        %v852 = vadd.f32 %v845, %v851
        %v853 = vld [vmem:[%s789 + $0x1] sm:$0x1]
        %v854 = vlaneseq
        %v855 = vshrl.u32 %v854, 7
        %v856 = vsub.s32 0, %v855
        %v857 = vrot.slane %v853, %v856
        %v858 = vmul.f32 %v857, %v792
        %v859 = vadd.f32 %v852, %v858
        %v860 = vld [vmem:[%s799 + $0x1] sm:$0x1]
        %v861 = vlaneseq
        %v862 = vshrl.u32 %v861, 7
        %v863 = vsub.s32 0, %v862
        %v864 = vrot.slane %v860, %v863
        %v865 = vmul.f32 %v864, %v802
        %v866 = vadd.f32 %v859, %v865
        %v867 = vld [vmem:[%s809 + $0x1] sm:$0x1]
        %v868 = vlaneseq
        %v869 = vshrl.u32 %v868, 7
        %v870 = vsub.s32 0, %v869
        %v871 = vrot.slane %v867, %v870
        %v872 = vmul.f32 %v871, %v812
        %v873 = vadd.f32 %v866, %v872
        %v874 = vld [vmem:[%s819 + $0x1] sm:$0x1]
        %v875 = vlaneseq
        %v876 = vshrl.u32 %v875, 7
        %v877 = vsub.s32 0, %v876
        %v878 = vrot.slane %v874, %v877
        %v879 = vmul.f32 %v878, %v822
        %v880 = vadd.f32 %v873, %v879
        %v881 = vld [vmem:[%s829 + $0x1] sm:$0x1]
        %v882 = vlaneseq
        %v883 = vshrl.u32 %v882, 7
        %v884 = vsub.s32 0, %v883
        %v885 = vrot.slane %v881, %v884
        %v886 = vmul.f32 %v885, %v832
        %v887 = vadd.f32 %v880, %v886
        %v888 = vmul.f32 %v887, 0.37796447
        %v889 = vld [vmem:[%s770 + $0x2] sm:$0x1]
        %v890 = vlaneseq
        %v891 = vshrl.u32 %v890, 7
        %v892 = vsub.s32 0, %v891
        %v893 = vrot.slane %v889, %v892
        %v894 = vmul.f32 %v893, %v773
        %v895 = vld [vmem:[%s779 + $0x2] sm:$0x1]
        %v896 = vlaneseq
        %v897 = vshrl.u32 %v896, 7
        %v898 = vsub.s32 0, %v897
        %v899 = vrot.slane %v895, %v898
        %v900 = vmul.f32 %v899, %v782
        %v901 = vadd.f32 %v894, %v900
        %v902 = vld [vmem:[%s789 + $0x2] sm:$0x1]
        %v903 = vlaneseq
        %v904 = vshrl.u32 %v903, 7
        %v905 = vsub.s32 0, %v904
        %v906 = vrot.slane %v902, %v905
        %v907 = vmul.f32 %v906, %v792
        %v908 = vadd.f32 %v901, %v907
        %v909 = vld [vmem:[%s799 + $0x2] sm:$0x1]
        %v910 = vlaneseq
        %v911 = vshrl.u32 %v910, 7
        %v912 = vsub.s32 0, %v911
        %v913 = vrot.slane %v909, %v912
        %v914 = vmul.f32 %v913, %v802
        %v915 = vadd.f32 %v908, %v914
        %v916 = vld [vmem:[%s809 + $0x2] sm:$0x1]
        %v917 = vlaneseq
        %v918 = vshrl.u32 %v917, 7
        %v919 = vsub.s32 0, %v918
        %v920 = vrot.slane %v916, %v919
        %v921 = vmul.f32 %v920, %v812
        %v922 = vadd.f32 %v915, %v921
        %v923 = vld [vmem:[%s819 + $0x2] sm:$0x1]
        %v924 = vlaneseq
        %v925 = vshrl.u32 %v924, 7
        %v926 = vsub.s32 0, %v925
        %v927 = vrot.slane %v923, %v926
        %v928 = vmul.f32 %v927, %v822
        %v929 = vadd.f32 %v922, %v928
        %v930 = vld [vmem:[%s829 + $0x2] sm:$0x1]
        %v931 = vlaneseq
        %v932 = vshrl.u32 %v931, 7
        %v933 = vsub.s32 0, %v932
        %v934 = vrot.slane %v930, %v933
        %v935 = vmul.f32 %v934, %v832
        %v936 = vadd.f32 %v929, %v935
        %v937 = vmul.f32 %v936, 0.37796447
        %v938 = vld [vmem:[%s770 + $0x3] sm:$0x1]
        %v939 = vlaneseq
        %v940 = vshrl.u32 %v939, 7
        %v941 = vsub.s32 0, %v940
        %v942 = vrot.slane %v938, %v941
        %v943 = vmul.f32 %v942, %v773
        %v944 = vld [vmem:[%s779 + $0x3] sm:$0x1]
        %v945 = vlaneseq
        %v946 = vshrl.u32 %v945, 7
        %v947 = vsub.s32 0, %v946
        %v948 = vrot.slane %v944, %v947
        %v949 = vmul.f32 %v948, %v782
        %v950 = vadd.f32 %v943, %v949
        %v951 = vld [vmem:[%s789 + $0x3] sm:$0x1]
        %v952 = vlaneseq
        %v953 = vshrl.u32 %v952, 7
        %v954 = vsub.s32 0, %v953
        %v955 = vrot.slane %v951, %v954
        %v956 = vmul.f32 %v955, %v792
        %v957 = vadd.f32 %v950, %v956
        %v958 = vld [vmem:[%s799 + $0x3] sm:$0x1]
        %v959 = vlaneseq
        %v960 = vshrl.u32 %v959, 7
        %v961 = vsub.s32 0, %v960
        %v962 = vrot.slane %v958, %v961
        %v963 = vmul.f32 %v962, %v802
        %v964 = vadd.f32 %v957, %v963
        %v965 = vld [vmem:[%s809 + $0x3] sm:$0x1]
        %v966 = vlaneseq
        %v967 = vshrl.u32 %v966, 7
        %v968 = vsub.s32 0, %v967
        %v969 = vrot.slane %v965, %v968
        %v970 = vmul.f32 %v969, %v812
        %v971 = vadd.f32 %v964, %v970
        %v972 = vld [vmem:[%s819 + $0x3] sm:$0x1]
        %v973 = vlaneseq
        %v974 = vshrl.u32 %v973, 7
        %v975 = vsub.s32 0, %v974
        %v976 = vrot.slane %v972, %v975
        %v977 = vmul.f32 %v976, %v822
        %v978 = vadd.f32 %v971, %v977
        %v979 = vld [vmem:[%s829 + $0x3] sm:$0x1]
        %v980 = vlaneseq
        %v981 = vshrl.u32 %v980, 7
        %v982 = vsub.s32 0, %v981
        %v983 = vrot.slane %v979, %v982
        %v984 = vmul.f32 %v983, %v832
        %v985 = vadd.f32 %v978, %v984
        %v986 = vmul.f32 %v985, 0.37796447
        %v987 = vld [vmem:[%s770 + $0x4] sm:$0x1]
        %v988 = vlaneseq
        %v989 = vshrl.u32 %v988, 7
        %v990 = vsub.s32 0, %v989
        %v991 = vrot.slane %v987, %v990
        %v992 = vmul.f32 %v991, %v773
        %v993 = vld [vmem:[%s779 + $0x4] sm:$0x1]
        %v994 = vlaneseq
        %v995 = vshrl.u32 %v994, 7
        %v996 = vsub.s32 0, %v995
        %v997 = vrot.slane %v993, %v996
        %v998 = vmul.f32 %v997, %v782
        %v999 = vadd.f32 %v992, %v998
        %v1000 = vld [vmem:[%s789 + $0x4] sm:$0x1]
        %v1001 = vlaneseq
        %v1002 = vshrl.u32 %v1001, 7
        %v1003 = vsub.s32 0, %v1002
        %v1004 = vrot.slane %v1000, %v1003
        %v1005 = vmul.f32 %v1004, %v792
        %v1006 = vadd.f32 %v999, %v1005
        %v1007 = vld [vmem:[%s799 + $0x4] sm:$0x1]
        %v1008 = vlaneseq
        %v1009 = vshrl.u32 %v1008, 7
        %v1010 = vsub.s32 0, %v1009
        %v1011 = vrot.slane %v1007, %v1010
        %v1012 = vmul.f32 %v1011, %v802
        %v1013 = vadd.f32 %v1006, %v1012
        %v1014 = vld [vmem:[%s809 + $0x4] sm:$0x1]
        %v1015 = vlaneseq
        %v1016 = vshrl.u32 %v1015, 7
        %v1017 = vsub.s32 0, %v1016
        %v1018 = vrot.slane %v1014, %v1017
        %v1019 = vmul.f32 %v1018, %v812
        %v1020 = vadd.f32 %v1013, %v1019
        %v1021 = vld [vmem:[%s819 + $0x4] sm:$0x1]
        %v1022 = vlaneseq
        %v1023 = vshrl.u32 %v1022, 7
        %v1024 = vsub.s32 0, %v1023
        %v1025 = vrot.slane %v1021, %v1024
        %v1026 = vmul.f32 %v1025, %v822
        %v1027 = vadd.f32 %v1020, %v1026
        %v1028 = vld [vmem:[%s829 + $0x4] sm:$0x1]
        %v1029 = vlaneseq
        %v1030 = vshrl.u32 %v1029, 7
        %v1031 = vsub.s32 0, %v1030
        %v1032 = vrot.slane %v1028, %v1031
        %v1033 = vmul.f32 %v1032, %v832
        %v1034 = vadd.f32 %v1027, %v1033
        %v1035 = vmul.f32 %v1034, 0.37796447
        %v1036 = vld [vmem:[%s770 + $0x5] sm:$0x1]
        %v1037 = vlaneseq
        %v1038 = vshrl.u32 %v1037, 7
        %v1039 = vsub.s32 0, %v1038
        %v1040 = vrot.slane %v1036, %v1039
        %v1041 = vmul.f32 %v1040, %v773
        %v1042 = vld [vmem:[%s779 + $0x5] sm:$0x1]
        %v1043 = vlaneseq
        %v1044 = vshrl.u32 %v1043, 7
        %v1045 = vsub.s32 0, %v1044
        %v1046 = vrot.slane %v1042, %v1045
        %v1047 = vmul.f32 %v1046, %v782
        %v1048 = vadd.f32 %v1041, %v1047
        %v1049 = vld [vmem:[%s789 + $0x5] sm:$0x1]
        %v1050 = vlaneseq
        %v1051 = vshrl.u32 %v1050, 7
        %v1052 = vsub.s32 0, %v1051
        %v1053 = vrot.slane %v1049, %v1052
        %v1054 = vmul.f32 %v1053, %v792
        %v1055 = vadd.f32 %v1048, %v1054
        %v1056 = vld [vmem:[%s799 + $0x5] sm:$0x1]
        %v1057 = vlaneseq
        %v1058 = vshrl.u32 %v1057, 7
        %v1059 = vsub.s32 0, %v1058
        %v1060 = vrot.slane %v1056, %v1059
        %v1061 = vmul.f32 %v1060, %v802
        %v1062 = vadd.f32 %v1055, %v1061
        %v1063 = vld [vmem:[%s809 + $0x5] sm:$0x1]
        %v1064 = vlaneseq
        %v1065 = vshrl.u32 %v1064, 7
        %v1066 = vsub.s32 0, %v1065
        %v1067 = vrot.slane %v1063, %v1066
        %v1068 = vmul.f32 %v1067, %v812
        %v1069 = vadd.f32 %v1062, %v1068
        %v1070 = vld [vmem:[%s819 + $0x5] sm:$0x1]
        %v1071 = vlaneseq
        %v1072 = vshrl.u32 %v1071, 7
        %v1073 = vsub.s32 0, %v1072
        %v1074 = vrot.slane %v1070, %v1073
        %v1075 = vmul.f32 %v1074, %v822
        %v1076 = vadd.f32 %v1069, %v1075
        %v1077 = vld [vmem:[%s829 + $0x5] sm:$0x1]
        %v1078 = vlaneseq
        %v1079 = vshrl.u32 %v1078, 7
        %v1080 = vsub.s32 0, %v1079
        %v1081 = vrot.slane %v1077, %v1080
        %v1082 = vmul.f32 %v1081, %v832
        %v1083 = vadd.f32 %v1076, %v1082
        %v1084 = vmul.f32 %v1083, 0.37796447
        %v1085 = vld [vmem:[%s770 + $0x6] sm:$0x1]
        %v1086 = vlaneseq
        %v1087 = vshrl.u32 %v1086, 7
        %v1088 = vsub.s32 0, %v1087
        %v1089 = vrot.slane %v1085, %v1088
        %v1090 = vmul.f32 %v1089, %v773
        %v1091 = vld [vmem:[%s779 + $0x6] sm:$0x1]
        %v1092 = vlaneseq
        %v1093 = vshrl.u32 %v1092, 7
        %v1094 = vsub.s32 0, %v1093
        %v1095 = vrot.slane %v1091, %v1094
        %v1096 = vmul.f32 %v1095, %v782
        %v1097 = vadd.f32 %v1090, %v1096
        %v1098 = vld [vmem:[%s789 + $0x6] sm:$0x1]
        %v1099 = vlaneseq
        %v1100 = vshrl.u32 %v1099, 7
        %v1101 = vsub.s32 0, %v1100
        %v1102 = vrot.slane %v1098, %v1101
        %v1103 = vmul.f32 %v1102, %v792
        %v1104 = vadd.f32 %v1097, %v1103
        %v1105 = vld [vmem:[%s799 + $0x6] sm:$0x1]
        %v1106 = vlaneseq
        %v1107 = vshrl.u32 %v1106, 7
        %v1108 = vsub.s32 0, %v1107
        %v1109 = vrot.slane %v1105, %v1108
        %v1110 = vmul.f32 %v1109, %v802
        %v1111 = vadd.f32 %v1104, %v1110
        %v1112 = vld [vmem:[%s809 + $0x6] sm:$0x1]
        %v1113 = vlaneseq
        %v1114 = vshrl.u32 %v1113, 7
        %v1115 = vsub.s32 0, %v1114
        %v1116 = vrot.slane %v1112, %v1115
        %v1117 = vmul.f32 %v1116, %v812
        %v1118 = vadd.f32 %v1111, %v1117
        %v1119 = vld [vmem:[%s819 + $0x6] sm:$0x1]
        %v1120 = vlaneseq
        %v1121 = vshrl.u32 %v1120, 7
        %v1122 = vsub.s32 0, %v1121
        %v1123 = vrot.slane %v1119, %v1122
        %v1124 = vmul.f32 %v1123, %v822
        %v1125 = vadd.f32 %v1118, %v1124
        %v1126 = vld [vmem:[%s829 + $0x6] sm:$0x1]
        %v1127 = vlaneseq
        %v1128 = vshrl.u32 %v1127, 7
        %v1129 = vsub.s32 0, %v1128
        %v1130 = vrot.slane %v1126, %v1129
        %v1131 = vmul.f32 %v1130, %v832
        %v1132 = vadd.f32 %v1125, %v1131
        %v1133 = vmul.f32 %v1132, 0.37796447
        %v1134 = vld [vmem:[%s770 + $0x7] sm:$0x1]
        %v1135 = vlaneseq
        %v1136 = vshrl.u32 %v1135, 7
        %v1137 = vsub.s32 0, %v1136
        %v1138 = vrot.slane %v1134, %v1137
        %v1139 = vmul.f32 %v1138, %v773
        %v1140 = vld [vmem:[%s779 + $0x7] sm:$0x1]
        %v1141 = vlaneseq
        %v1142 = vshrl.u32 %v1141, 7
        %v1143 = vsub.s32 0, %v1142
        %v1144 = vrot.slane %v1140, %v1143
        %v1145 = vmul.f32 %v1144, %v782
        %v1146 = vadd.f32 %v1139, %v1145
        %v1147 = vld [vmem:[%s789 + $0x7] sm:$0x1]
        %v1148 = vlaneseq
        %v1149 = vshrl.u32 %v1148, 7
        %v1150 = vsub.s32 0, %v1149
        %v1151 = vrot.slane %v1147, %v1150
        %v1152 = vmul.f32 %v1151, %v792
        %v1153 = vadd.f32 %v1146, %v1152
        %v1154 = vld [vmem:[%s799 + $0x7] sm:$0x1]
        %v1155 = vlaneseq
        %v1156 = vshrl.u32 %v1155, 7
        %v1157 = vsub.s32 0, %v1156
        %v1158 = vrot.slane %v1154, %v1157
        %v1159 = vmul.f32 %v1158, %v802
        %v1160 = vadd.f32 %v1153, %v1159
        %v1161 = vld [vmem:[%s809 + $0x7] sm:$0x1]
        %v1162 = vlaneseq
        %v1163 = vshrl.u32 %v1162, 7
        %v1164 = vsub.s32 0, %v1163
        %v1165 = vrot.slane %v1161, %v1164
        %v1166 = vmul.f32 %v1165, %v812
        %v1167 = vadd.f32 %v1160, %v1166
        %v1168 = vld [vmem:[%s819 + $0x7] sm:$0x1]
        %v1169 = vlaneseq
        %v1170 = vshrl.u32 %v1169, 7
        %v1171 = vsub.s32 0, %v1170
        %v1172 = vrot.slane %v1168, %v1171
        %v1173 = vmul.f32 %v1172, %v822
        %v1174 = vadd.f32 %v1167, %v1173
        %v1175 = vld [vmem:[%s829 + $0x7] sm:$0x1]
        %v1176 = vlaneseq
        %v1177 = vshrl.u32 %v1176, 7
        %v1178 = vsub.s32 0, %v1177
        %v1179 = vrot.slane %v1175, %v1178
        %v1180 = vmul.f32 %v1179, %v832
        %v1181 = vadd.f32 %v1174, %v1180
        %v1182 = vmul.f32 %v1181, 0.37796447
        %1183 = vxpose.xlu0.b32.start [1/16] %v524, 128
        %1184 = vxpose.xlu0.b32.cont [2/16] %v559, 128
        %1185 = vxpose.xlu0.b32.cont [3/16] %v594, 128
        %1186 = vxpose.xlu0.b32.cont [4/16] %v629, 128
        %1187 = vxpose.xlu0.b32.cont [5/16] %v664, 128
        %1188 = vxpose.xlu0.b32.cont [6/16] %v699, 128
        %1189 = vxpose.xlu0.b32.cont [7/16] %v734, 128
        %1190 = vxpose.xlu0.b32.cont [8/16] %v769, 128
        %1191 = vxpose.xlu0.b32.cont [9/16] %v839, 128
        %1192 = vxpose.xlu0.b32.cont [10/16] %v888, 128
        %1193 = vxpose.xlu0.b32.cont [11/16] %v937, 128
        %1194 = vxpose.xlu0.b32.cont [12/16] %v986, 128
        %1195 = vxpose.xlu0.b32.cont [13/16] %v1035, 128
        %1196 = vxpose.xlu0.b32.cont [14/16] %v1084, 128
        %1197 = vxpose.xlu0.b32.cont [15/16] %v1133, 128
        %1198 = vxpose.xlu0.b32.end [16/16] %v1182, 128
        %v1199 = vpop.trf.xlu0
        %v1200 = vpop.trf.xlu0
        %v1201 = vpop.trf.xlu0
        %v1202 = vpop.trf.xlu0
        %v1203 = vpop.trf.xlu0
        %v1204 = vpop.trf.xlu0
        %v1205 = vpop.trf.xlu0
        %v1206 = vpop.trf.xlu0
        %v1207 = vpop.trf.xlu0
        %v1208 = vpop.trf.xlu0
        %v1209 = vpop.trf.xlu0
        %v1210 = vpop.trf.xlu0
        %v1211 = vpop.trf.xlu0
        %v1212 = vpop.trf.xlu0
        %v1213 = vpop.trf.xlu0
        %v1214 = vpop.trf.xlu0
        %1215 = vst [vmem:[%s199 + $0x8] sm:$0xff] %v1199
        %1216 = vst [vmem:[%s199 + $0x18] sm:$0xff] %v1200
        %1217 = vst [vmem:[%s199 + $0x28] sm:$0xff] %v1201
        %1218 = vst [vmem:[%s199 + $0x38] sm:$0xff] %v1202
        %1219 = vst [vmem:[%s199 + $0x48] sm:$0xff] %v1203
        %1220 = vst [vmem:[%s199 + $0x58] sm:$0xff] %v1204
        %1221 = vst [vmem:[%s199 + $0x68] sm:$0xff] %v1205
        %1222 = vst [vmem:[%s199 + $0x78] sm:$0xff] %v1206
        %1223 = vst [vmem:[%s199 + $0x88] sm:$0xff] %v1207
        %1224 = vst [vmem:[%s199 + $0x98] sm:$0xff] %v1208
        %1225 = vst [vmem:[%s199 + $0xa8] sm:$0xff] %v1209
        %1226 = vst [vmem:[%s199 + $0xb8] sm:$0xff] %v1210
        %1227 = vst [vmem:[%s199 + $0xc8] sm:$0xff] %v1211
        %1228 = vst [vmem:[%s199 + $0xd8] sm:$0xff] %v1212
        %1229 = vst [vmem:[%s199 + $0xe8] sm:$0xff] %v1213
        %1230 = vst [vmem:[%s199 + $0xf8] sm:$0xff] %v1214
        %s1231 = sand.u32 %s82, 1
        %s1232 = scalar_lea.sflag [#allocation4], %s1231
        %s1233 = sand.u32 %s82, 1
        %s1234 = smul.addr %s1233, 256
        %s1235 = scalar_lea.vmem [#allocation7], %s1234
        // Predicated region
        $region37: #{tpu_custom_call.1} parent=27 // pred_check
          %p1236 = pneg %p92
        $region38: #{tpu_custom_call.1} parent=27 // pred_check_branch
          %1238 = sbr.rel (%p1236) target = $region40
        $region39: #{tpu_custom_call.1} parent=27 // pred_region
          %s1239 = smul.u32 16, %s22
          %s1241 = ssub.s32 4096, 4096
          %1242 = vsyncadd %s1232, %s1241
          %s1243 = smul.addr %s1239, 2
          %s1244 = smul.addr %s1243, 128
          %s1245 = scalar_lea.hbm %s2, %s1244
          %s1246 = sshll.u32 %s1235, 4
          %s1247 = int_to_ptr.vmem [resolvable:$true] %s1246
          %1252 = dma.vmem_to_hbm [thread:$0]  %s1247, 4096, %s1245, %s1232, 256, 256, 16
        $region40: #{tpu_custom_call.1} parent=27 // pred_fallthru
          _
      $region28: #{tpu_custom_call.1} parent=5 // pred_fallthru
        _
      %p1253 = scmp.le.s32.totalorder 2, %s17
      // Predicated region
      $region41: #{tpu_custom_call.1} parent=5 // pred_check
        %p1254 = pneg %p1253
      $region42: #{tpu_custom_call.1} parent=5 // pred_check_branch
        %1256 = sbr.rel (%p1254) target = $region44
      $region43: #{tpu_custom_call.1} parent=5 // pred_region
        %s1257 = ssub.s32 %s17, 2
        // Predicated region
        $region45: #{tpu_custom_call.1} parent=43 // pred_check
          %p1258 = pneg %p98
        $region46: #{tpu_custom_call.1} parent=43 // pred_check_branch
          %1260 = sbr.rel (%p1258) target = $region48
        $region47: #{tpu_custom_call.1} parent=43 // pred_region
          %s1261 = sand.u32 %s83, 1
          %s1262 = scalar_lea.sflag [#allocation4], %s1261
          %s1263 = sand.u32 %s83, 1
          %s1264 = smul.addr %s1263, 256
          %s1265 = scalar_lea.vmem [#allocation7], %s1264
          %1266 = dma.done %s1262, 4096
        $region48: #{tpu_custom_call.1} parent=43 // pred_fallthru
          _
      $region44: #{tpu_custom_call.1} parent=5 // pred_fallthru
        _
    $region6: #{tpu_custom_call.1} parent=1 // loop_footer
      %s21 = sadd.s32 1, %s17
    $region7: #{tpu_custom_call.1} parent=1 // loop_footer_branch
      %16 = sbr.rel target = $region3
    $region8: #{tpu_custom_call.1} parent=1 // loop_exit
      _
    %1267 = vsyncpa [#allocation3], 1
    %s1268 = scalar_lea.sflag [#allocation3], 1
    %1269 = vsyncpa %s1268, 1
    %1270 = vsyncpa [#allocation6], 1
    %s1271 = scalar_lea.sflag [#allocation6], 1
    %1272 = vsyncpa %s1271, 1
    %1273 = vsyncpa [#allocation4], 1
    %s1274 = scalar_lea.sflag [#allocation4], 1
    %1275 = vsyncpa %s1274, 1

</llo_original>
